<compile_context>
chip_gen: v7x
topology: tpu7x:2x2x1
jax: 0.10.0
libtpu: 0.0.40
codegen_flags: <defaults>
</compile_context>

<pallas_src>
import jax
import jax.numpy as jnp
from jax.experimental import pallas as pl
from jax.experimental.pallas import tpu as pltpu

IN_DIM = 28 * 28        # 784
HIDDEN = 400
OUT_DIM = 10

HIDDEN_PAD = 512        # 400 -> 512  (4 * 128, lane dense)
OUT_PAD = 128           # 10  -> 128  (unmasked vector stores)


def _round_up(x, m):
    return (x + m - 1) // m * m


def _cdiv(a, b):
    return -(-a // b)


def _is_dual_tensorcore():
    """True for chip generations with 2 TensorCores per chip (v7x)."""
    try:
        kind = jax.devices()[0].device_kind.lower()
    except Exception:
        return False
    return "v7" in kind


def _choose_tile_b(B):
    """Pick a batch tile that (a) minimizes zero-row padding, (b) keeps
    per-step overhead amortized, and (c) on dual-TC chips yields >= 2 grid
    steps so both TensorCores run."""
    dual_tc = _is_dual_tensorcore()
    tile_max = 256 if dual_tc else 512
    n_tiles = max(1, _cdiv(B, tile_max))
    if dual_tc and B >= 128 and n_tiles < 2:
        n_tiles = 2                      # make sure both cores get a tile
    # 16-row granularity: bf16 activations pack 16 sublanes per vreg.
    tile_b = _round_up(max(1, _cdiv(B, n_tiles)), 16)
    return tile_b


def _mlp_kernel(x_ref,
                w1_ref, b1_ref,
                w2_ref, b2_ref,
                w3_ref, b3_ref,
                w4_ref, b4_ref,
                w5_ref, b5_ref,
                o_ref):
    """Whole 5-layer MLP forward for one batch tile, fully resident in VMEM.

    x_ref : (tile_b, 784)        f32  (cast to bf16 on the VPU, in-kernel)
    wK    : (in_k, out_k)        bf16 (zero-padded to lane-dense dims)
    bK    : (1, out_k)           f32
    o_ref : (tile_b, OUT_PAD)    f32
    """

    def layer(a_bf16, w_ref, b_ref, relu):
        # bf16 x bf16 matmul, f32 accumulation on the MXU.
        acc = jnp.dot(a_bf16, w_ref[...], preferred_element_type=jnp.float32)
        acc = acc + b_ref[...]              # bias + ReLU in f32 on the VPU
        if relu:
            return jnp.maximum(acc, 0.0).astype(jnp.bfloat16)
        return acc

    # In-kernel cast: VPU has slack (kernel is MXU/DMA-bound), and this avoids
    # a separate wrapper-side f32->bf16 HBM pass over x.
    a = x_ref[...].astype(jnp.bfloat16)
    a = layer(a, w1_ref, b1_ref, relu=True)     # 784 -> 512 (400 live)
    a = layer(a, w2_ref, b2_ref, relu=True)     # 512 -> 512
    a = layer(a, w3_ref, b3_ref, relu=True)
    a = layer(a, w4_ref, b4_ref, relu=True)
    o_ref[...] = layer(a, w5_ref, b5_ref, relu=False).astype(o_ref.dtype)


def _prep_params(params):
    """Zero-pad to lane-dense dims and cast weights to bf16 (biases stay f32)."""
    (w1, b1), (w2, b2), (w3, b3), (w4, b4), (w5, b5) = params

    def pad_w(w, din_pad, dout_pad):
        din, dout = w.shape
        wp = jnp.zeros((din_pad, dout_pad), jnp.float32).at[:din, :dout].set(w)
        return wp.astype(jnp.bfloat16)

    def pad_b(b, dout_pad):
        return jnp.zeros((1, dout_pad), jnp.float32).at[0, :b.shape[0]].set(b)

    return (
        pad_w(w1, IN_DIM, HIDDEN_PAD),      pad_b(b1, HIDDEN_PAD),
        pad_w(w2, HIDDEN_PAD, HIDDEN_PAD),  pad_b(b2, HIDDEN_PAD),
        pad_w(w3, HIDDEN_PAD, HIDDEN_PAD),  pad_b(b3, HIDDEN_PAD),
        pad_w(w4, HIDDEN_PAD, HIDDEN_PAD),  pad_b(b4, HIDDEN_PAD),
        pad_w(w5, HIDDEN_PAD, OUT_PAD),     pad_b(b5, OUT_PAD),
    )


@jax.jit
def mnist_mlp_forward(x_nchw, params):
    """x_nchw: (B, 1, 28, 28) float32 -> logits (B, 10) float32."""
    B = x_nchw.shape[0]
    x = x_nchw.reshape(B, IN_DIM)            # same as torch .view(-1, 784)

    tile_b = _choose_tile_b(B)
    b_pad = _round_up(B, tile_b)
    if b_pad != B:
        x = jnp.pad(x, ((0, b_pad - B), (0, 0)))
    # NOTE: x stays f32; bf16 cast happens inside the kernel.

    flat_params = _prep_params(params)

    def const_spec(shape):
        # Whole-array block, same block every grid step (weights stay resident,
        # Mosaic does not re-DMA them between grid steps).
        return pl.BlockSpec(shape, lambda i: (0, 0))

    out = pl.pallas_call(
        _mlp_kernel,
        out_shape=jax.ShapeDtypeStruct((b_pad, OUT_PAD), jnp.float32),
        grid_spec=pltpu.PrefetchScalarGridSpec(
            num_scalar_prefetch=0,
            grid=(b_pad // tile_b,),
            in_specs=[
                pl.BlockSpec((tile_b, IN_DIM), lambda i: (i, 0)),       # x tile (f32)
                const_spec((IN_DIM, HIDDEN_PAD)),     const_spec((1, HIDDEN_PAD)),
                const_spec((HIDDEN_PAD, HIDDEN_PAD)), const_spec((1, HIDDEN_PAD)),
                const_spec((HIDDEN_PAD, HIDDEN_PAD)), const_spec((1, HIDDEN_PAD)),
                const_spec((HIDDEN_PAD, HIDDEN_PAD)), const_spec((1, HIDDEN_PAD)),
                const_spec((HIDDEN_PAD, OUT_PAD)),    const_spec((1, OUT_PAD)),
            ],
            out_specs=pl.BlockSpec((tile_b, OUT_PAD), lambda i: (i, 0)),
        ),
        compiler_params=pltpu.CompilerParams(
            dimension_semantics=("parallel",),
            vmem_limit_bytes=32 << 20,
        ),
    )(x, *flat_params)

    return out[:B, :OUT_DIM]


def init_params(key):
    """Deterministic synthetic weights (torch Linear-style init), stored (in, out)."""
    dims = [(IN_DIM, HIDDEN), (HIDDEN, HIDDEN), (HIDDEN, HIDDEN),
            (HIDDEN, HIDDEN), (HIDDEN, OUT_DIM)]
    params = []
    for (din, dout) in dims:
        key, kw, kb = jax.random.split(key, 3)
        bound = 1.0 / jnp.sqrt(din)
        w = jax.random.uniform(kw, (din, dout), jnp.float32, -bound, bound)
        b = jax.random.uniform(kb, (dout,), jnp.float32, -bound, bound)
        params.append((w, b))
    return params


def reference_forward(x_nchw, params):
    """Pure-JAX reference with the same bf16-input / f32-accumulate numerics."""
    a = x_nchw.reshape(x_nchw.shape[0], IN_DIM).astype(jnp.bfloat16)
    for i, (w, b) in enumerate(params):
        acc = jnp.dot(a, w.astype(jnp.bfloat16),
                      preferred_element_type=jnp.float32) + b
        if i < len(params) - 1:
            a = jnp.maximum(acc, 0.0).astype(jnp.bfloat16)
        else:
            a = acc
    return a


if __name__ == "__main__":
    key = jax.random.PRNGKey(0)
    kx, kp = jax.random.split(key)

    params = init_params(kp)

    # Small batch (single padded tile).
    B = 8
    x = jax.random.normal(kx, (B, 1, 28, 28), jnp.float32)   # NCHW like PyTorch
    out = jax.block_until_ready(mnist_mlp_forward(x, params))
    ref = reference_forward(x, params)
    assert out.shape == (B, OUT_DIM)
    assert jnp.allclose(out, ref, atol=1e-2, rtol=1e-2), "mismatch vs reference (B=8)"

    # Non-multiple batch exercises the zero-pad + slice path.
    B2 = 5
    x2 = jax.random.normal(kx, (B2, 1, 28, 28), jnp.float32)
    out2 = jax.block_until_ready(mnist_mlp_forward(x2, params))
    ref2 = reference_forward(x2, params)
    assert out2.shape == (B2, OUT_DIM)
    assert jnp.allclose(out2, ref2, atol=1e-2, rtol=1e-2), "mismatch vs reference (B=5)"

    print("KERNEL_OK")
</pallas_src>

<mosaic_0001>
module attributes {stable_mosaic.version = 11 : i64} {
  func.func @_mlp_kernel(%arg0: i32, %arg1: memref<16x784xf32, #tpu.memory_space<vmem>>, %arg2: memref<784x512xbf16, #tpu.memory_space<vmem>>, %arg3: memref<1x512xf32, #tpu.memory_space<vmem>>, %arg4: memref<512x512xbf16, #tpu.memory_space<vmem>>, %arg5: memref<1x512xf32, #tpu.memory_space<vmem>>, %arg6: memref<512x512xbf16, #tpu.memory_space<vmem>>, %arg7: memref<1x512xf32, #tpu.memory_space<vmem>>, %arg8: memref<512x512xbf16, #tpu.memory_space<vmem>>, %arg9: memref<1x512xf32, #tpu.memory_space<vmem>>, %arg10: memref<512x128xbf16, #tpu.memory_space<vmem>>, %arg11: memref<1x128xf32, #tpu.memory_space<vmem>>, %arg12: memref<16x128xf32, #tpu.memory_space<vmem>>) attributes {dimension_semantics = [#tpu.dimension_semantics<parallel>], iteration_bounds = array<i64: 1>, scalar_prefetch = 0 : i64, scratch_operands = 0 : i64, tpu.core_type = #tpu.core_type<tc>, window_params = [{transform_indices = @transform_0, window_bounds = array<i64: 16, 784>}, {pipeline_mode = #tpu.pipeline_mode<synchronous>, transform_indices = @transform_1, window_bounds = array<i64: 784, 512>}, {pipeline_mode = #tpu.pipeline_mode<synchronous>, transform_indices = @transform_2, window_bounds = array<i64: 1, 512>}, {pipeline_mode = #tpu.pipeline_mode<synchronous>, transform_indices = @transform_3, window_bounds = array<i64: 512, 512>}, {pipeline_mode = #tpu.pipeline_mode<synchronous>, transform_indices = @transform_4, window_bounds = array<i64: 1, 512>}, {pipeline_mode = #tpu.pipeline_mode<synchronous>, transform_indices = @transform_5, window_bounds = array<i64: 512, 512>}, {pipeline_mode = #tpu.pipeline_mode<synchronous>, transform_indices = @transform_6, window_bounds = array<i64: 1, 512>}, {pipeline_mode = #tpu.pipeline_mode<synchronous>, transform_indices = @transform_7, window_bounds = array<i64: 512, 512>}, {pipeline_mode = #tpu.pipeline_mode<synchronous>, transform_indices = @transform_8, window_bounds = array<i64: 1, 512>}, {pipeline_mode = #tpu.pipeline_mode<synchronous>, transform_indices = @transform_9, window_bounds = array<i64: 512, 128>}, {pipeline_mode = #tpu.pipeline_mode<synchronous>, transform_indices = @transform_10, window_bounds = array<i64: 1, 128>}, {transform_indices = @transform_11, window_bounds = array<i64: 16, 128>}]} {
    %c0 = arith.constant 0 : index
    %c0_0 = arith.constant 0 : index
    %0 = vector.load %arg1[%c0, %c0_0] : memref<16x784xf32, #tpu.memory_space<vmem>>, vector<16x784xf32>
    %1 = arith.truncf %0 : vector<16x784xf32> to vector<16x784xbf16>
    %c0_1 = arith.constant 0 : index
    %c0_2 = arith.constant 0 : index
    %2 = vector.load %arg2[%c0_1, %c0_2] : memref<784x512xbf16, #tpu.memory_space<vmem>>, vector<784x512xbf16>
    %cst = arith.constant dense<0.000000e+00> : vector<16x512xf32>
    %3 = tpu.matmul %1, %2, %cst {dimension_numbers = #tpu.dot_dimension_numbers<[1], [0], [0], [1], [0, 0, 1, 1], [], []>} : vector<16x784xbf16>, vector<784x512xbf16>, vector<16x512xf32> -> vector<16x512xf32>
    %c0_3 = arith.constant 0 : index
    %c0_4 = arith.constant 0 : index
    %4 = vector.load %arg3[%c0_3, %c0_4] : memref<1x512xf32, #tpu.memory_space<vmem>>, vector<1x512xf32>
    %5 = vector.broadcast %4 : vector<1x512xf32> to vector<16x512xf32>
    %6 = arith.addf %3, %5 : vector<16x512xf32>
    %cst_5 = arith.constant 0.000000e+00 : f32
    %7 = vector.broadcast %cst_5 : f32 to vector<16x512xf32>
    %8 = arith.maximumf %6, %7 : vector<16x512xf32>
    %9 = arith.truncf %8 : vector<16x512xf32> to vector<16x512xbf16>
    %c0_6 = arith.constant 0 : index
    %c0_7 = arith.constant 0 : index
    %10 = vector.load %arg4[%c0_6, %c0_7] : memref<512x512xbf16, #tpu.memory_space<vmem>>, vector<512x512xbf16>
    %cst_8 = arith.constant dense<0.000000e+00> : vector<16x512xf32>
    %11 = tpu.matmul %9, %10, %cst_8 {dimension_numbers = #tpu.dot_dimension_numbers<[1], [0], [0], [1], [0, 0, 1, 1], [], []>} : vector<16x512xbf16>, vector<512x512xbf16>, vector<16x512xf32> -> vector<16x512xf32>
    %c0_9 = arith.constant 0 : index
    %c0_10 = arith.constant 0 : index
    %12 = vector.load %arg5[%c0_9, %c0_10] : memref<1x512xf32, #tpu.memory_space<vmem>>, vector<1x512xf32>
    %13 = vector.broadcast %12 : vector<1x512xf32> to vector<16x512xf32>
    %14 = arith.addf %11, %13 : vector<16x512xf32>
    %cst_11 = arith.constant 0.000000e+00 : f32
    %15 = vector.broadcast %cst_11 : f32 to vector<16x512xf32>
    %16 = arith.maximumf %14, %15 : vector<16x512xf32>
    %17 = arith.truncf %16 : vector<16x512xf32> to vector<16x512xbf16>
    %c0_12 = arith.constant 0 : index
    %c0_13 = arith.constant 0 : index
    %18 = vector.load %arg6[%c0_12, %c0_13] : memref<512x512xbf16, #tpu.memory_space<vmem>>, vector<512x512xbf16>
    %cst_14 = arith.constant dense<0.000000e+00> : vector<16x512xf32>
    %19 = tpu.matmul %17, %18, %cst_14 {dimension_numbers = #tpu.dot_dimension_numbers<[1], [0], [0], [1], [0, 0, 1, 1], [], []>} : vector<16x512xbf16>, vector<512x512xbf16>, vector<16x512xf32> -> vector<16x512xf32>
    %c0_15 = arith.constant 0 : index
    %c0_16 = arith.constant 0 : index
    %20 = vector.load %arg7[%c0_15, %c0_16] : memref<1x512xf32, #tpu.memory_space<vmem>>, vector<1x512xf32>
    %21 = vector.broadcast %20 : vector<1x512xf32> to vector<16x512xf32>
    %22 = arith.addf %19, %21 : vector<16x512xf32>
    %cst_17 = arith.constant 0.000000e+00 : f32
    %23 = vector.broadcast %cst_17 : f32 to vector<16x512xf32>
    %24 = arith.maximumf %22, %23 : vector<16x512xf32>
    %25 = arith.truncf %24 : vector<16x512xf32> to vector<16x512xbf16>
    %c0_18 = arith.constant 0 : index
    %c0_19 = arith.constant 0 : index
    %26 = vector.load %arg8[%c0_18, %c0_19] : memref<512x512xbf16, #tpu.memory_space<vmem>>, vector<512x512xbf16>
    %cst_20 = arith.constant dense<0.000000e+00> : vector<16x512xf32>
    %27 = tpu.matmul %25, %26, %cst_20 {dimension_numbers = #tpu.dot_dimension_numbers<[1], [0], [0], [1], [0, 0, 1, 1], [], []>} : vector<16x512xbf16>, vector<512x512xbf16>, vector<16x512xf32> -> vector<16x512xf32>
    %c0_21 = arith.constant 0 : index
    %c0_22 = arith.constant 0 : index
    %28 = vector.load %arg9[%c0_21, %c0_22] : memref<1x512xf32, #tpu.memory_space<vmem>>, vector<1x512xf32>
    %29 = vector.broadcast %28 : vector<1x512xf32> to vector<16x512xf32>
    %30 = arith.addf %27, %29 : vector<16x512xf32>
    %cst_23 = arith.constant 0.000000e+00 : f32
    %31 = vector.broadcast %cst_23 : f32 to vector<16x512xf32>
    %32 = arith.maximumf %30, %31 : vector<16x512xf32>
    %33 = arith.truncf %32 : vector<16x512xf32> to vector<16x512xbf16>
    %c0_24 = arith.constant 0 : index
    %c0_25 = arith.constant 0 : index
    %34 = vector.load %arg10[%c0_24, %c0_25] : memref<512x128xbf16, #tpu.memory_space<vmem>>, vector<512x128xbf16>
    %cst_26 = arith.constant dense<0.000000e+00> : vector<16x128xf32>
    %35 = tpu.matmul %33, %34, %cst_26 {dimension_numbers = #tpu.dot_dimension_numbers<[1], [0], [0], [1], [0, 0, 1, 1], [], []>} : vector<16x512xbf16>, vector<512x128xbf16>, vector<16x128xf32> -> vector<16x128xf32>
    %c0_27 = arith.constant 0 : index
    %c0_28 = arith.constant 0 : index
    %36 = vector.load %arg11[%c0_27, %c0_28] : memref<1x128xf32, #tpu.memory_space<vmem>>, vector<1x128xf32>
    %37 = vector.broadcast %36 : vector<1x128xf32> to vector<16x128xf32>
    %38 = arith.addf %35, %37 : vector<16x128xf32>
    %c0_29 = arith.constant 0 : index
    %c0_30 = arith.constant 0 : index
    %39 = vector.load %arg12[%c0_29, %c0_30] : memref<16x128xf32, #tpu.memory_space<vmem>>, vector<16x128xf32>
    tpu.vector_store %arg12[%c0_29, %c0_30], %38 {strides = array<i32>} : memref<16x128xf32, #tpu.memory_space<vmem>>, vector<16x128xf32>,
    return
  }
  func.func @transform_0(%arg0: i32) -> (i32, i32) {
    %c0_i32 = arith.constant 0 : i32
    %c0_i32_0 = arith.constant 0 : i32
    return %arg0, %c0_i32 : i32, i32
  }
  func.func @transform_1(%arg0: i32) -> (i32, i32) {
    %c0_i32 = arith.constant 0 : i32
    %c0_i32_0 = arith.constant 0 : i32
    %c0_i32_1 = arith.constant 0 : i32
    return %c0_i32, %c0_i32_0 : i32, i32
  }
  func.func @transform_2(%arg0: i32) -> (i32, i32) {
    %c0_i32 = arith.constant 0 : i32
    %c0_i32_0 = arith.constant 0 : i32
    %c0_i32_1 = arith.constant 0 : i32
    return %c0_i32, %c0_i32_0 : i32, i32
  }
  func.func @transform_3(%arg0: i32) -> (i32, i32) {
    %c0_i32 = arith.constant 0 : i32
    %c0_i32_0 = arith.constant 0 : i32
    %c0_i32_1 = arith.constant 0 : i32
    return %c0_i32, %c0_i32_0 : i32, i32
  }
  func.func @transform_4(%arg0: i32) -> (i32, i32) {
    %c0_i32 = arith.constant 0 : i32
    %c0_i32_0 = arith.constant 0 : i32
    %c0_i32_1 = arith.constant 0 : i32
    return %c0_i32, %c0_i32_0 : i32, i32
  }
  func.func @transform_5(%arg0: i32) -> (i32, i32) {
    %c0_i32 = arith.constant 0 : i32
    %c0_i32_0 = arith.constant 0 : i32
    %c0_i32_1 = arith.constant 0 : i32
    return %c0_i32, %c0_i32_0 : i32, i32
  }
  func.func @transform_6(%arg0: i32) -> (i32, i32) {
    %c0_i32 = arith.constant 0 : i32
    %c0_i32_0 = arith.constant 0 : i32
    %c0_i32_1 = arith.constant 0 : i32
    return %c0_i32, %c0_i32_0 : i32, i32
  }
  func.func @transform_7(%arg0: i32) -> (i32, i32) {
    %c0_i32 = arith.constant 0 : i32
    %c0_i32_0 = arith.constant 0 : i32
    %c0_i32_1 = arith.constant 0 : i32
    return %c0_i32, %c0_i32_0 : i32, i32
  }
  func.func @transform_8(%arg0: i32) -> (i32, i32) {
    %c0_i32 = arith.constant 0 : i32
    %c0_i32_0 = arith.constant 0 : i32
    %c0_i32_1 = arith.constant 0 : i32
    return %c0_i32, %c0_i32_0 : i32, i32
  }
  func.func @transform_9(%arg0: i32) -> (i32, i32) {
    %c0_i32 = arith.constant 0 : i32
    %c0_i32_0 = arith.constant 0 : i32
    %c0_i32_1 = arith.constant 0 : i32
    return %c0_i32, %c0_i32_0 : i32, i32
  }
  func.func @transform_10(%arg0: i32) -> (i32, i32) {
    %c0_i32 = arith.constant 0 : i32
    %c0_i32_0 = arith.constant 0 : i32
    %c0_i32_1 = arith.constant 0 : i32
    return %c0_i32, %c0_i32_0 : i32, i32
  }
  func.func @transform_11(%arg0: i32) -> (i32, i32) {
    %c0_i32 = arith.constant 0 : i32
    %c0_i32_0 = arith.constant 0 : i32
    return %arg0, %c0_i32 : i32, i32
  }
}

</mosaic_0001>

<llo_original>
// kernel: mnist_mlp_forward.1
$region0: #{mnist_mlp_forward.1}
  #allocation0 [shape = 'u32[]', space=smem, size = 0x4, offset = 0x4, fixed_abs, tag = 'smem constant byte address 0x4 - core index']
  #allocation1 [shape = 'u32[144,128]{1,0:T(1,128)}', space=vmem, size = 0x12000, scoped, tag = 'internal scratch']
  %s0 = inlined_call_operand.vmem [shape: f32[16,784], index: 0, kind: input, shape index: {}]
  %s1 = inlined_call_operand.vmem [shape: bf16[784,512], index: 1, kind: input, shape index: {}]
  %s2 = inlined_call_operand.vmem [shape: f32[1,512], index: 2, kind: input, shape index: {}]
  %s3 = inlined_call_operand.vmem [shape: bf16[512,512], index: 3, kind: input, shape index: {}]
  %s4 = inlined_call_operand.vmem [shape: f32[1,512], index: 4, kind: input, shape index: {}]
  %s5 = inlined_call_operand.vmem [shape: bf16[512,512], index: 5, kind: input, shape index: {}]
  %s6 = inlined_call_operand.vmem [shape: f32[1,512], index: 6, kind: input, shape index: {}]
  %s7 = inlined_call_operand.vmem [shape: bf16[512,512], index: 7, kind: input, shape index: {}]
  %s8 = inlined_call_operand.vmem [shape: f32[1,512], index: 8, kind: input, shape index: {}]
  %s9 = inlined_call_operand.vmem [shape: bf16[512,128], index: 9, kind: input, shape index: {}]
  %s10 = inlined_call_operand.vmem [shape: f32[1,128], index: 10, kind: input, shape index: {}]
  %s11 = inlined_call_operand.vmem [shape: f32[16,128], index: 11, kind: output, shape index: {}]
  %s12 = sld [smem:[#allocation0]]
  $region54: #{mnist_mlp_forward.1} parent=0
    _
  %s14 = ssub.s32 1, %s12
  %s15 = scalar_select 0, %s14, %s12
  // Predicated region
  $region2: #{mnist_mlp_forward.1} parent=0 // pred_check
    _
  $region3: #{mnist_mlp_forward.1} parent=0 // pred_check_branch
    %17 = sbr.rel (0) target = $region5
  $region4: #{mnist_mlp_forward.1} parent=0 // pred_region
    _
  $region5: #{mnist_mlp_forward.1} parent=0 // pred_fallthru
    _
  // Predicated region
  $region6: #{mnist_mlp_forward.1} parent=0 // pred_check
    _
  $region7: #{mnist_mlp_forward.1} parent=0 // pred_check_branch
    %19 = sbr.rel (0) target = $region9
  $region8: #{mnist_mlp_forward.1} parent=0 // pred_region
    _
  $region9: #{mnist_mlp_forward.1} parent=0 // pred_fallthru
    _
  // Predicated region
  $region10: #{mnist_mlp_forward.1} parent=0 // pred_check
    _
  $region11: #{mnist_mlp_forward.1} parent=0 // pred_check_branch
    %21 = sbr.rel (0) target = $region13
  $region12: #{mnist_mlp_forward.1} parent=0 // pred_region
    _
  $region13: #{mnist_mlp_forward.1} parent=0 // pred_fallthru
    _
  // Predicated region
  $region14: #{mnist_mlp_forward.1} parent=0 // pred_check
    _
  $region15: #{mnist_mlp_forward.1} parent=0 // pred_check_branch
    %23 = sbr.rel (0) target = $region17
  $region16: #{mnist_mlp_forward.1} parent=0 // pred_region
    _
  $region17: #{mnist_mlp_forward.1} parent=0 // pred_fallthru
    _
  // Predicated region
  $region18: #{mnist_mlp_forward.1} parent=0 // pred_check
    _
  $region19: #{mnist_mlp_forward.1} parent=0 // pred_check_branch
    %25 = sbr.rel (0) target = $region21
  $region20: #{mnist_mlp_forward.1} parent=0 // pred_region
    _
  $region21: #{mnist_mlp_forward.1} parent=0 // pred_fallthru
    _
  // Predicated region
  $region22: #{mnist_mlp_forward.1} parent=0 // pred_check
    _
  $region23: #{mnist_mlp_forward.1} parent=0 // pred_check_branch
    %27 = sbr.rel (0) target = $region25
  $region24: #{mnist_mlp_forward.1} parent=0 // pred_region
    _
  $region25: #{mnist_mlp_forward.1} parent=0 // pred_fallthru
    _
  // Predicated region
  $region26: #{mnist_mlp_forward.1} parent=0 // pred_check
    _
  $region27: #{mnist_mlp_forward.1} parent=0 // pred_check_branch
    %29 = sbr.rel (0) target = $region29
  $region28: #{mnist_mlp_forward.1} parent=0 // pred_region
    _
  $region29: #{mnist_mlp_forward.1} parent=0 // pred_fallthru
    _
  // Predicated region
  $region30: #{mnist_mlp_forward.1} parent=0 // pred_check
    _
  $region31: #{mnist_mlp_forward.1} parent=0 // pred_check_branch
    %31 = sbr.rel (0) target = $region33
  $region32: #{mnist_mlp_forward.1} parent=0 // pred_region
    _
  $region33: #{mnist_mlp_forward.1} parent=0 // pred_fallthru
    _
  // Predicated region
  $region34: #{mnist_mlp_forward.1} parent=0 // pred_check
    _
  $region35: #{mnist_mlp_forward.1} parent=0 // pred_check_branch
    %33 = sbr.rel (0) target = $region37
  $region36: #{mnist_mlp_forward.1} parent=0 // pred_region
    _
  $region37: #{mnist_mlp_forward.1} parent=0 // pred_fallthru
    _
  // Predicated region
  $region38: #{mnist_mlp_forward.1} parent=0 // pred_check
    _
  $region39: #{mnist_mlp_forward.1} parent=0 // pred_check_branch
    %35 = sbr.rel (0) target = $region41
  $region40: #{mnist_mlp_forward.1} parent=0 // pred_region
    _
  $region41: #{mnist_mlp_forward.1} parent=0 // pred_fallthru
    _
  // Predicated region
  $region42: #{mnist_mlp_forward.1} parent=0 // pred_check
    _
  $region43: #{mnist_mlp_forward.1} parent=0 // pred_check_branch
    %37 = sbr.rel (0) target = $region45
  $region44: #{mnist_mlp_forward.1} parent=0 // pred_region
    _
  $region45: #{mnist_mlp_forward.1} parent=0 // pred_fallthru
    _
  %v39 = vld [vmem:[%s0] sm:$0xff]
  %v40 = vld [vmem:[%s0 + $0x8] sm:$0xff]
  %v41 = vld [vmem:[%s0 + $0x10] sm:$0xff]
  %v42 = vld [vmem:[%s0 + $0x18] sm:$0xff]
  %v43 = vld [vmem:[%s0 + $0x20] sm:$0xff]
  %v44 = vld [vmem:[%s0 + $0x28] sm:$0xff]
  %v45 = vld [vmem:[%s0 + $0x30] sm:$0xff]
  %v46 = vld [vmem:[%s0 + $0x38] sm:$0xff]
  %v47 = vld [vmem:[%s0 + $0x40] sm:$0xff]
  %v48 = vld [vmem:[%s0 + $0x48] sm:$0xff]
  %v49 = vld [vmem:[%s0 + $0x50] sm:$0xff]
  %v50 = vld [vmem:[%s0 + $0x58] sm:$0xff]
  %v51 = vld [vmem:[%s0 + $0x60] sm:$0xff]
  %v52 = vld [vmem:[%s0 + $0x68] sm:$0xff]
  %v53 = vpack.c.bf16 %v46, %v39
  %v54 = vpack.c.bf16 %v47, %v40
  %v55 = vpack.c.bf16 %v48, %v41
  %v56 = vpack.c.bf16 %v49, %v42
  %v57 = vpack.c.bf16 %v50, %v43
  %v58 = vpack.c.bf16 %v51, %v44
  %v59 = vpack.c.bf16 %v52, %v45
  %v60 = vld [vmem:[%s1] sm:$0xff]
  %v61 = vld [vmem:[%s1 + $0x8] sm:$0xff]
  %v62 = vld [vmem:[%s1 + $0x10] sm:$0xff]
  %v63 = vld [vmem:[%s1 + $0x18] sm:$0xff]
  %v64 = vld [vmem:[%s1 + $0x20] sm:$0xff]
  %v65 = vld [vmem:[%s1 + $0x28] sm:$0xff]
  %v66 = vld [vmem:[%s1 + $0x30] sm:$0xff]
  %v67 = vld [vmem:[%s1 + $0x38] sm:$0xff]
  %v68 = vld [vmem:[%s1 + $0x40] sm:$0xff]
  %v69 = vld [vmem:[%s1 + $0x48] sm:$0xff]
  %v70 = vld [vmem:[%s1 + $0x50] sm:$0xff]
  %v71 = vld [vmem:[%s1 + $0x58] sm:$0xff]
  %v72 = vld [vmem:[%s1 + $0x60] sm:$0xff]
  %v73 = vld [vmem:[%s1 + $0x68] sm:$0xff]
  %v74 = vld [vmem:[%s1 + $0x70] sm:$0xff]
  %v75 = vld [vmem:[%s1 + $0x78] sm:$0xff]
  %v76 = vld [vmem:[%s1 + $0x80] sm:$0xff]
  %v77 = vld [vmem:[%s1 + $0x88] sm:$0xff]
  %v78 = vld [vmem:[%s1 + $0x90] sm:$0xff]
  %v79 = vld [vmem:[%s1 + $0x98] sm:$0xff]
  %v80 = vld [vmem:[%s1 + $0xa0] sm:$0xff]
  %v81 = vld [vmem:[%s1 + $0xa8] sm:$0xff]
  %v82 = vld [vmem:[%s1 + $0xb0] sm:$0xff]
  %v83 = vld [vmem:[%s1 + $0xb8] sm:$0xff]
  %v84 = vld [vmem:[%s1 + $0xc0] sm:$0xff]
  %v85 = vld [vmem:[%s1 + $0xc8] sm:$0xff]
  %v86 = vld [vmem:[%s1 + $0xd0] sm:$0xff]
  %v87 = vld [vmem:[%s1 + $0xd8] sm:$0xff]
  %v88 = vld [vmem:[%s1 + $0xe0] sm:$0xff]
  %v89 = vld [vmem:[%s1 + $0xe8] sm:$0xff]
  %v90 = vld [vmem:[%s1 + $0xf0] sm:$0xff]
  %v91 = vld [vmem:[%s1 + $0xf8] sm:$0xff]
  %v92 = vld [vmem:[%s1 + $0x100] sm:$0xff]
  %v93 = vld [vmem:[%s1 + $0x108] sm:$0xff]
  %v94 = vld [vmem:[%s1 + $0x110] sm:$0xff]
  %v95 = vld [vmem:[%s1 + $0x118] sm:$0xff]
  %v96 = vld [vmem:[%s1 + $0x120] sm:$0xff]
  %v97 = vld [vmem:[%s1 + $0x128] sm:$0xff]
  %v98 = vld [vmem:[%s1 + $0x130] sm:$0xff]
  %v99 = vld [vmem:[%s1 + $0x138] sm:$0xff]
  %v100 = vld [vmem:[%s1 + $0x140] sm:$0xff]
  %v101 = vld [vmem:[%s1 + $0x148] sm:$0xff]
  %v102 = vld [vmem:[%s1 + $0x150] sm:$0xff]
  %v103 = vld [vmem:[%s1 + $0x158] sm:$0xff]
  %v104 = vld [vmem:[%s1 + $0x160] sm:$0xff]
  %v105 = vld [vmem:[%s1 + $0x168] sm:$0xff]
  %v106 = vld [vmem:[%s1 + $0x170] sm:$0xff]
  %v107 = vld [vmem:[%s1 + $0x178] sm:$0xff]
  %v108 = vld [vmem:[%s1 + $0x180] sm:$0xff]
  %v109 = vld [vmem:[%s1 + $0x188] sm:$0xff]
  %v110 = vld [vmem:[%s1 + $0x190] sm:$0xff]
  %v111 = vld [vmem:[%s1 + $0x198] sm:$0xff]
  %v112 = vld [vmem:[%s1 + $0x1a0] sm:$0xff]
  %v113 = vld [vmem:[%s1 + $0x1a8] sm:$0xff]
  %v114 = vld [vmem:[%s1 + $0x1b0] sm:$0xff]
  %v115 = vld [vmem:[%s1 + $0x1b8] sm:$0xff]
  %v116 = vld [vmem:[%s1 + $0x1c0] sm:$0xff]
  %v117 = vld [vmem:[%s1 + $0x1c8] sm:$0xff]
  %v118 = vld [vmem:[%s1 + $0x1d0] sm:$0xff]
  %v119 = vld [vmem:[%s1 + $0x1d8] sm:$0xff]
  %v120 = vld [vmem:[%s1 + $0x1e0] sm:$0xff]
  %v121 = vld [vmem:[%s1 + $0x1e8] sm:$0xff]
  %v122 = vld [vmem:[%s1 + $0x1f0] sm:$0xff]
  %v123 = vld [vmem:[%s1 + $0x1f8] sm:$0xff]
  %v124 = vld [vmem:[%s1 + $0x200] sm:$0xff]
  %v125 = vld [vmem:[%s1 + $0x208] sm:$0xff]
  %v126 = vld [vmem:[%s1 + $0x210] sm:$0xff]
  %v127 = vld [vmem:[%s1 + $0x218] sm:$0xff]
  %v128 = vld [vmem:[%s1 + $0x220] sm:$0xff]
  %v129 = vld [vmem:[%s1 + $0x228] sm:$0xff]
  %v130 = vld [vmem:[%s1 + $0x230] sm:$0xff]
  %v131 = vld [vmem:[%s1 + $0x238] sm:$0xff]
  %v132 = vld [vmem:[%s1 + $0x240] sm:$0xff]
  %v133 = vld [vmem:[%s1 + $0x248] sm:$0xff]
  %v134 = vld [vmem:[%s1 + $0x250] sm:$0xff]
  %v135 = vld [vmem:[%s1 + $0x258] sm:$0xff]
  %v136 = vld [vmem:[%s1 + $0x260] sm:$0xff]
  %v137 = vld [vmem:[%s1 + $0x268] sm:$0xff]
  %v138 = vld [vmem:[%s1 + $0x270] sm:$0xff]
  %v139 = vld [vmem:[%s1 + $0x278] sm:$0xff]
  %v140 = vld [vmem:[%s1 + $0x280] sm:$0xff]
  %v141 = vld [vmem:[%s1 + $0x288] sm:$0xff]
  %v142 = vld [vmem:[%s1 + $0x290] sm:$0xff]
  %v143 = vld [vmem:[%s1 + $0x298] sm:$0xff]
  %v144 = vld [vmem:[%s1 + $0x2a0] sm:$0xff]
  %v145 = vld [vmem:[%s1 + $0x2a8] sm:$0xff]
  %v146 = vld [vmem:[%s1 + $0x2b0] sm:$0xff]
  %v147 = vld [vmem:[%s1 + $0x2b8] sm:$0xff]
  %v148 = vld [vmem:[%s1 + $0x2c0] sm:$0xff]
  %v149 = vld [vmem:[%s1 + $0x2c8] sm:$0xff]
  %v150 = vld [vmem:[%s1 + $0x2d0] sm:$0xff]
  %v151 = vld [vmem:[%s1 + $0x2d8] sm:$0xff]
  %v152 = vld [vmem:[%s1 + $0x2e0] sm:$0xff]
  %v153 = vld [vmem:[%s1 + $0x2e8] sm:$0xff]
  %v154 = vld [vmem:[%s1 + $0x2f0] sm:$0xff]
  %v155 = vld [vmem:[%s1 + $0x2f8] sm:$0xff]
  %v156 = vld [vmem:[%s1 + $0x300] sm:$0xff]
  %v157 = vld [vmem:[%s1 + $0x308] sm:$0xff]
  %v158 = vld [vmem:[%s1 + $0x310] sm:$0xff]
  %v159 = vld [vmem:[%s1 + $0x318] sm:$0xff]
  %v160 = vld [vmem:[%s1 + $0x320] sm:$0xff]
  %v161 = vld [vmem:[%s1 + $0x328] sm:$0xff]
  %v162 = vld [vmem:[%s1 + $0x330] sm:$0xff]
  %v163 = vld [vmem:[%s1 + $0x338] sm:$0xff]
  %v164 = vld [vmem:[%s1 + $0x340] sm:$0xff]
  %v165 = vld [vmem:[%s1 + $0x348] sm:$0xff]
  %v166 = vld [vmem:[%s1 + $0x350] sm:$0xff]
  %v167 = vld [vmem:[%s1 + $0x358] sm:$0xff]
  %v168 = vld [vmem:[%s1 + $0x360] sm:$0xff]
  %v169 = vld [vmem:[%s1 + $0x368] sm:$0xff]
  %v170 = vld [vmem:[%s1 + $0x370] sm:$0xff]
  %v171 = vld [vmem:[%s1 + $0x378] sm:$0xff]
  %v172 = vld [vmem:[%s1 + $0x380] sm:$0xff]
  %v173 = vld [vmem:[%s1 + $0x388] sm:$0xff]
  %v174 = vld [vmem:[%s1 + $0x390] sm:$0xff]
  %v175 = vld [vmem:[%s1 + $0x398] sm:$0xff]
  %v176 = vld [vmem:[%s1 + $0x3a0] sm:$0xff]
  %v177 = vld [vmem:[%s1 + $0x3a8] sm:$0xff]
  %v178 = vld [vmem:[%s1 + $0x3b0] sm:$0xff]
  %v179 = vld [vmem:[%s1 + $0x3b8] sm:$0xff]
  %v180 = vld [vmem:[%s1 + $0x3c0] sm:$0xff]
  %v181 = vld [vmem:[%s1 + $0x3c8] sm:$0xff]
  %v182 = vld [vmem:[%s1 + $0x3d0] sm:$0xff]
  %v183 = vld [vmem:[%s1 + $0x3d8] sm:$0xff]
  %v184 = vld [vmem:[%s1 + $0x3e0] sm:$0xff]
  %v185 = vld [vmem:[%s1 + $0x3e8] sm:$0xff]
  %v186 = vld [vmem:[%s1 + $0x3f0] sm:$0xff]
  %v187 = vld [vmem:[%s1 + $0x3f8] sm:$0xff]
  %v188 = vld [vmem:[%s1 + $0x400] sm:$0xff]
  %v189 = vld [vmem:[%s1 + $0x408] sm:$0xff]
  %v190 = vld [vmem:[%s1 + $0x410] sm:$0xff]
  %v191 = vld [vmem:[%s1 + $0x418] sm:$0xff]
  %v192 = vld [vmem:[%s1 + $0x420] sm:$0xff]
  %v193 = vld [vmem:[%s1 + $0x428] sm:$0xff]
  %v194 = vld [vmem:[%s1 + $0x430] sm:$0xff]
  %v195 = vld [vmem:[%s1 + $0x438] sm:$0xff]
  %v196 = vld [vmem:[%s1 + $0x440] sm:$0xff]
  %v197 = vld [vmem:[%s1 + $0x448] sm:$0xff]
  %v198 = vld [vmem:[%s1 + $0x450] sm:$0xff]
  %v199 = vld [vmem:[%s1 + $0x458] sm:$0xff]
  %v200 = vld [vmem:[%s1 + $0x460] sm:$0xff]
  %v201 = vld [vmem:[%s1 + $0x468] sm:$0xff]
  %v202 = vld [vmem:[%s1 + $0x470] sm:$0xff]
  %v203 = vld [vmem:[%s1 + $0x478] sm:$0xff]
  %v204 = vld [vmem:[%s1 + $0x480] sm:$0xff]
  %v205 = vld [vmem:[%s1 + $0x488] sm:$0xff]
  %v206 = vld [vmem:[%s1 + $0x490] sm:$0xff]
  %v207 = vld [vmem:[%s1 + $0x498] sm:$0xff]
  %v208 = vld [vmem:[%s1 + $0x4a0] sm:$0xff]
  %v209 = vld [vmem:[%s1 + $0x4a8] sm:$0xff]
  %v210 = vld [vmem:[%s1 + $0x4b0] sm:$0xff]
  %v211 = vld [vmem:[%s1 + $0x4b8] sm:$0xff]
  %v212 = vld [vmem:[%s1 + $0x4c0] sm:$0xff]
  %v213 = vld [vmem:[%s1 + $0x4c8] sm:$0xff]
  %v214 = vld [vmem:[%s1 + $0x4d0] sm:$0xff]
  %v215 = vld [vmem:[%s1 + $0x4d8] sm:$0xff]
  %v216 = vld [vmem:[%s1 + $0x4e0] sm:$0xff]
  %v217 = vld [vmem:[%s1 + $0x4e8] sm:$0xff]
  %v218 = vld [vmem:[%s1 + $0x4f0] sm:$0xff]
  %v219 = vld [vmem:[%s1 + $0x4f8] sm:$0xff]
  %v220 = vld [vmem:[%s1 + $0x500] sm:$0xff]
  %v221 = vld [vmem:[%s1 + $0x508] sm:$0xff]
  %v222 = vld [vmem:[%s1 + $0x510] sm:$0xff]
  %v223 = vld [vmem:[%s1 + $0x518] sm:$0xff]
  %v224 = vld [vmem:[%s1 + $0x520] sm:$0xff]
  %v225 = vld [vmem:[%s1 + $0x528] sm:$0xff]
  %v226 = vld [vmem:[%s1 + $0x530] sm:$0xff]
  %v227 = vld [vmem:[%s1 + $0x538] sm:$0xff]
  %v228 = vld [vmem:[%s1 + $0x540] sm:$0xff]
  %v229 = vld [vmem:[%s1 + $0x548] sm:$0xff]
  %v230 = vld [vmem:[%s1 + $0x550] sm:$0xff]
  %v231 = vld [vmem:[%s1 + $0x558] sm:$0xff]
  %v232 = vld [vmem:[%s1 + $0x560] sm:$0xff]
  %v233 = vld [vmem:[%s1 + $0x568] sm:$0xff]
  %v234 = vld [vmem:[%s1 + $0x570] sm:$0xff]
  %v235 = vld [vmem:[%s1 + $0x578] sm:$0xff]
  %v236 = vld [vmem:[%s1 + $0x580] sm:$0xff]
  %v237 = vld [vmem:[%s1 + $0x588] sm:$0xff]
  %v238 = vld [vmem:[%s1 + $0x590] sm:$0xff]
  %v239 = vld [vmem:[%s1 + $0x598] sm:$0xff]
  %v240 = vld [vmem:[%s1 + $0x5a0] sm:$0xff]
  %v241 = vld [vmem:[%s1 + $0x5a8] sm:$0xff]
  %v242 = vld [vmem:[%s1 + $0x5b0] sm:$0xff]
  %v243 = vld [vmem:[%s1 + $0x5b8] sm:$0xff]
  %v244 = vld [vmem:[%s1 + $0x5c0] sm:$0xff]
  %v245 = vld [vmem:[%s1 + $0x5c8] sm:$0xff]
  %v246 = vld [vmem:[%s1 + $0x5d0] sm:$0xff]
  %v247 = vld [vmem:[%s1 + $0x5d8] sm:$0xff]
  %v248 = vld [vmem:[%s1 + $0x5e0] sm:$0xff]
  %v249 = vld [vmem:[%s1 + $0x5e8] sm:$0xff]
  %v250 = vld [vmem:[%s1 + $0x5f0] sm:$0xff]
  %v251 = vld [vmem:[%s1 + $0x5f8] sm:$0xff]
  %v252 = vld [vmem:[%s1 + $0x600] sm:$0xff]
  %v253 = vld [vmem:[%s1 + $0x608] sm:$0xff]
  %v254 = vld [vmem:[%s1 + $0x610] sm:$0xff]
  %v255 = vld [vmem:[%s1 + $0x618] sm:$0xff]
  %v256 = vld [vmem:[%s2] sm:$0xf]
  %v258 = vlaneseq
  %v259 = vshrl.u32 %v258, 7
  %v260 = vsub.s32 0, %v259
  %v261 = vrot.slane %v256, %v260
  %v262 = vlaneseq
  %v263 = vshrl.u32 %v262, 7
  %v264 = vsub.s32 1, %v263
  %v265 = vrot.slane %v256, %v264
  %v266 = vlaneseq
  %v267 = vshrl.u32 %v266, 7
  %v268 = vsub.s32 2, %v267
  %v269 = vrot.slane %v256, %v268
  %v270 = vlaneseq
  %v271 = vshrl.u32 %v270, 7
  %v272 = vsub.s32 3, %v271
  %v273 = vrot.slane %v256, %v272
  %v474 = vunpack.c.l.b16 %v60
  %v475 = vunpack.c.h.b16 %v60
  %v476 = vunpack.c.l.b16 %v61
  %v477 = vunpack.c.h.b16 %v61
  %v478 = vunpack.c.l.b16 %v62
  %v479 = vunpack.c.h.b16 %v62
  %v480 = vunpack.c.l.b16 %v63
  %v481 = vunpack.c.h.b16 %v63
  %v482 = vunpack.c.l.b16 %v64
  %v483 = vunpack.c.h.b16 %v64
  %v484 = vunpack.c.l.b16 %v65
  %v485 = vunpack.c.h.b16 %v65
  %v486 = vunpack.c.l.b16 %v66
  %v487 = vunpack.c.h.b16 %v66
  %v488 = vunpack.c.l.b16 %v67
  %v489 = vunpack.c.h.b16 %v67
  %v490 = vunpack.c.l.b16 %v68
  %v491 = vunpack.c.h.b16 %v68
  %v492 = vunpack.c.l.b16 %v69
  %v493 = vunpack.c.h.b16 %v69
  %v494 = vunpack.c.l.b16 %v70
  %v495 = vunpack.c.h.b16 %v70
  %v496 = vunpack.c.l.b16 %v71
  %v497 = vunpack.c.h.b16 %v71
  %v498 = vunpack.c.l.b16 %v72
  %v499 = vunpack.c.h.b16 %v72
  %v500 = vunpack.c.l.b16 %v73
  %v501 = vunpack.c.h.b16 %v73
  %v502 = vunpack.c.l.b16 %v74
  %v503 = vunpack.c.h.b16 %v74
  %v504 = vunpack.c.l.b16 %v75
  %v505 = vunpack.c.h.b16 %v75
  %v506 = vunpack.c.l.b16 %v76
  %v507 = vunpack.c.h.b16 %v76
  %v508 = vunpack.c.l.b16 %v77
  %v509 = vunpack.c.h.b16 %v77
  %v510 = vunpack.c.l.b16 %v78
  %v511 = vunpack.c.h.b16 %v78
  %v512 = vunpack.c.l.b16 %v79
  %v513 = vunpack.c.h.b16 %v79
  %v514 = vunpack.c.l.b16 %v80
  %v515 = vunpack.c.h.b16 %v80
  %v516 = vunpack.c.l.b16 %v81
  %v517 = vunpack.c.h.b16 %v81
  %v518 = vunpack.c.l.b16 %v82
  %v519 = vunpack.c.h.b16 %v82
  %v520 = vunpack.c.l.b16 %v83
  %v521 = vunpack.c.h.b16 %v83
  %v522 = vunpack.c.l.b16 %v84
  %v523 = vunpack.c.h.b16 %v84
  %v524 = vunpack.c.l.b16 %v85
  %v525 = vunpack.c.h.b16 %v85
  %v526 = vunpack.c.l.b16 %v86
  %v527 = vunpack.c.h.b16 %v86
  %v528 = vunpack.c.l.b16 %v87
  %v529 = vunpack.c.h.b16 %v87
  %v530 = vunpack.c.l.b16 %v88
  %v531 = vunpack.c.h.b16 %v88
  %v532 = vunpack.c.l.b16 %v89
  %v533 = vunpack.c.h.b16 %v89
  %v534 = vunpack.c.l.b16 %v90
  %v535 = vunpack.c.h.b16 %v90
  %v536 = vunpack.c.l.b16 %v91
  %v537 = vunpack.c.h.b16 %v91
  %v538 = vunpack.c.l.b16 %v92
  %v539 = vunpack.c.h.b16 %v92
  %v540 = vunpack.c.l.b16 %v93
  %v541 = vunpack.c.h.b16 %v93
  %v542 = vunpack.c.l.b16 %v94
  %v543 = vunpack.c.h.b16 %v94
  %v544 = vunpack.c.l.b16 %v95
  %v545 = vunpack.c.h.b16 %v95
  %v546 = vunpack.c.l.b16 %v96
  %v547 = vunpack.c.h.b16 %v96
  %v548 = vunpack.c.l.b16 %v97
  %v549 = vunpack.c.h.b16 %v97
  %v550 = vunpack.c.l.b16 %v98
  %v551 = vunpack.c.h.b16 %v98
  %v552 = vunpack.c.l.b16 %v99
  %v553 = vunpack.c.h.b16 %v99
  %v554 = vunpack.c.l.b16 %v100
  %v555 = vunpack.c.h.b16 %v100
  %v556 = vunpack.c.l.b16 %v101
  %v557 = vunpack.c.h.b16 %v101
  %v558 = vunpack.c.l.b16 %v102
  %v559 = vunpack.c.h.b16 %v102
  %v560 = vunpack.c.l.b16 %v103
  %v561 = vunpack.c.h.b16 %v103
  %v562 = vunpack.c.l.b16 %v104
  %v563 = vunpack.c.h.b16 %v104
  %v564 = vunpack.c.l.b16 %v105
  %v565 = vunpack.c.h.b16 %v105
  %v566 = vunpack.c.l.b16 %v106
  %v567 = vunpack.c.h.b16 %v106
  %v568 = vunpack.c.l.b16 %v107
  %v569 = vunpack.c.h.b16 %v107
  %v570 = vunpack.c.l.b16 %v108
  %v571 = vunpack.c.h.b16 %v108
  %v572 = vunpack.c.l.b16 %v109
  %v573 = vunpack.c.h.b16 %v109
  %v574 = vunpack.c.l.b16 %v110
  %v575 = vunpack.c.h.b16 %v110
  %v576 = vunpack.c.l.b16 %v111
  %v577 = vunpack.c.h.b16 %v111
  %v578 = vunpack.c.l.b16 %v112
  %v579 = vunpack.c.h.b16 %v112
  %v580 = vunpack.c.l.b16 %v113
  %v581 = vunpack.c.h.b16 %v113
  %v582 = vunpack.c.l.b16 %v114
  %v583 = vunpack.c.h.b16 %v114
  %v584 = vunpack.c.l.b16 %v115
  %v585 = vunpack.c.h.b16 %v115
  %v586 = vunpack.c.l.b16 %v116
  %v587 = vunpack.c.h.b16 %v116
  %v588 = vunpack.c.l.b16 %v117
  %v589 = vunpack.c.h.b16 %v117
  %v590 = vunpack.c.l.b16 %v118
  %v591 = vunpack.c.h.b16 %v118
  %v592 = vunpack.c.l.b16 %v119
  %v593 = vunpack.c.h.b16 %v119
  %v594 = vunpack.c.l.b16 %v120
  %v595 = vunpack.c.h.b16 %v120
  %v596 = vunpack.c.l.b16 %v121
  %v597 = vunpack.c.h.b16 %v121
  %v598 = vunpack.c.l.b16 %v122
  %v599 = vunpack.c.h.b16 %v122
  %v600 = vunpack.c.l.b16 %v123
  %v601 = vunpack.c.h.b16 %v123
  %v602 = vunpack.c.l.b16 %v124
  %v603 = vunpack.c.h.b16 %v124
  %v604 = vunpack.c.l.b16 %v125
  %v605 = vunpack.c.h.b16 %v125
  %v606 = vunpack.c.l.b16 %v126
  %v607 = vunpack.c.h.b16 %v126
  %v608 = vunpack.c.l.b16 %v127
  %v609 = vunpack.c.h.b16 %v127
  %v610 = vunpack.c.l.b16 %v128
  %v611 = vunpack.c.h.b16 %v128
  %v612 = vunpack.c.l.b16 %v129
  %v613 = vunpack.c.h.b16 %v129
  %v614 = vunpack.c.l.b16 %v130
  %v615 = vunpack.c.h.b16 %v130
  %v616 = vunpack.c.l.b16 %v131
  %v617 = vunpack.c.h.b16 %v131
  %v618 = vunpack.c.l.b16 %v132
  %v619 = vunpack.c.h.b16 %v132
  %v620 = vunpack.c.l.b16 %v133
  %v621 = vunpack.c.h.b16 %v133
  %v622 = vunpack.c.l.b16 %v134
  %v623 = vunpack.c.h.b16 %v134
  %v624 = vunpack.c.l.b16 %v135
  %v625 = vunpack.c.h.b16 %v135
  %v626 = vunpack.c.l.b16 %v136
  %v627 = vunpack.c.h.b16 %v136
  %v628 = vunpack.c.l.b16 %v137
  %v629 = vunpack.c.h.b16 %v137
  %v630 = vunpack.c.l.b16 %v138
  %v631 = vunpack.c.h.b16 %v138
  %v632 = vunpack.c.l.b16 %v139
  %v633 = vunpack.c.h.b16 %v139
  %v634 = vunpack.c.l.b16 %v140
  %v635 = vunpack.c.h.b16 %v140
  %v636 = vunpack.c.l.b16 %v141
  %v637 = vunpack.c.h.b16 %v141
  %v638 = vunpack.c.l.b16 %v142
  %v639 = vunpack.c.h.b16 %v142
  %v640 = vunpack.c.l.b16 %v143
  %v641 = vunpack.c.h.b16 %v143
  %v642 = vunpack.c.l.b16 %v144
  %v643 = vunpack.c.h.b16 %v144
  %v644 = vunpack.c.l.b16 %v145
  %v645 = vunpack.c.h.b16 %v145
  %v646 = vunpack.c.l.b16 %v146
  %v647 = vunpack.c.h.b16 %v146
  %v648 = vunpack.c.l.b16 %v147
  %v649 = vunpack.c.h.b16 %v147
  %v650 = vunpack.c.l.b16 %v148
  %v651 = vunpack.c.h.b16 %v148
  %v652 = vunpack.c.l.b16 %v149
  %v653 = vunpack.c.h.b16 %v149
  %v654 = vunpack.c.l.b16 %v150
  %v655 = vunpack.c.h.b16 %v150
  %v656 = vunpack.c.l.b16 %v151
  %v657 = vunpack.c.h.b16 %v151
  %v658 = vunpack.c.l.b16 %v152
  %v659 = vunpack.c.h.b16 %v152
  %v660 = vunpack.c.l.b16 %v153
  %v661 = vunpack.c.h.b16 %v153
  %v662 = vunpack.c.l.b16 %v154
  %v663 = vunpack.c.h.b16 %v154
  %v664 = vunpack.c.l.b16 %v155
  %v665 = vunpack.c.h.b16 %v155
  %v666 = vunpack.c.l.b16 %v156
  %v667 = vunpack.c.h.b16 %v156
  %v668 = vunpack.c.l.b16 %v157
  %v669 = vunpack.c.h.b16 %v157
  %v670 = vunpack.c.l.b16 %v158
  %v671 = vunpack.c.h.b16 %v158
  %v672 = vunpack.c.l.b16 %v159
  %v673 = vunpack.c.h.b16 %v159
  %v674 = vunpack.c.l.b16 %v160
  %v675 = vunpack.c.h.b16 %v160
  %v676 = vunpack.c.l.b16 %v161
  %v677 = vunpack.c.h.b16 %v161
  %v678 = vunpack.c.l.b16 %v162
  %v679 = vunpack.c.h.b16 %v162
  %v680 = vunpack.c.l.b16 %v163
  %v681 = vunpack.c.h.b16 %v163
  %v682 = vunpack.c.l.b16 %v164
  %v683 = vunpack.c.h.b16 %v164
  %v684 = vunpack.c.l.b16 %v165
  %v685 = vunpack.c.h.b16 %v165
  %v686 = vunpack.c.l.b16 %v166
  %v687 = vunpack.c.h.b16 %v166
  %v688 = vunpack.c.l.b16 %v167
  %v689 = vunpack.c.h.b16 %v167
  %v690 = vunpack.c.l.b16 %v168
  %v691 = vunpack.c.h.b16 %v168
  %v692 = vunpack.c.l.b16 %v169
  %v693 = vunpack.c.h.b16 %v169
  %v694 = vunpack.c.l.b16 %v170
  %v695 = vunpack.c.h.b16 %v170
  %v696 = vunpack.c.l.b16 %v171
  %v697 = vunpack.c.h.b16 %v171
  %v698 = vunpack.c.l.b16 %v172
  %v699 = vunpack.c.h.b16 %v172
  %v700 = vunpack.c.l.b16 %v173
  %v701 = vunpack.c.h.b16 %v173
  %v702 = vunpack.c.l.b16 %v174
  %v703 = vunpack.c.h.b16 %v174
  %v704 = vunpack.c.l.b16 %v175
  %v705 = vunpack.c.h.b16 %v175
  %v706 = vunpack.c.l.b16 %v176
  %v707 = vunpack.c.h.b16 %v176
  %v708 = vunpack.c.l.b16 %v177
  %v709 = vunpack.c.h.b16 %v177
  %v710 = vunpack.c.l.b16 %v178
  %v711 = vunpack.c.h.b16 %v178
  %v712 = vunpack.c.l.b16 %v179
  %v713 = vunpack.c.h.b16 %v179
  %v714 = vunpack.c.l.b16 %v180
  %v715 = vunpack.c.h.b16 %v180
  %v716 = vunpack.c.l.b16 %v181
  %v717 = vunpack.c.h.b16 %v181
  %v718 = vunpack.c.l.b16 %v182
  %v719 = vunpack.c.h.b16 %v182
  %v720 = vunpack.c.l.b16 %v183
  %v721 = vunpack.c.h.b16 %v183
  %v722 = vunpack.c.l.b16 %v184
  %v723 = vunpack.c.h.b16 %v184
  %v724 = vunpack.c.l.b16 %v185
  %v725 = vunpack.c.h.b16 %v185
  %v726 = vunpack.c.l.b16 %v186
  %v727 = vunpack.c.h.b16 %v186
  %v728 = vunpack.c.l.b16 %v187
  %v729 = vunpack.c.h.b16 %v187
  %v730 = vunpack.c.l.b16 %v188
  %v731 = vunpack.c.h.b16 %v188
  %v732 = vunpack.c.l.b16 %v189
  %v733 = vunpack.c.h.b16 %v189
  %v734 = vunpack.c.l.b16 %v190
  %v735 = vunpack.c.h.b16 %v190
  %v736 = vunpack.c.l.b16 %v191
  %v737 = vunpack.c.h.b16 %v191
  %v738 = vunpack.c.l.b16 %v192
  %v739 = vunpack.c.h.b16 %v192
  %v740 = vunpack.c.l.b16 %v193
  %v741 = vunpack.c.h.b16 %v193
  %v742 = vunpack.c.l.b16 %v194
  %v743 = vunpack.c.h.b16 %v194
  %v744 = vunpack.c.l.b16 %v195
  %v745 = vunpack.c.h.b16 %v195
  %v746 = vunpack.c.l.b16 %v196
  %v747 = vunpack.c.h.b16 %v196
  %v748 = vunpack.c.l.b16 %v197
  %v749 = vunpack.c.h.b16 %v197
  %v750 = vunpack.c.l.b16 %v198
  %v751 = vunpack.c.h.b16 %v198
  %v752 = vunpack.c.l.b16 %v199
  %v753 = vunpack.c.h.b16 %v199
  %v754 = vunpack.c.l.b16 %v200
  %v755 = vunpack.c.h.b16 %v200
  %v756 = vunpack.c.l.b16 %v201
  %v757 = vunpack.c.h.b16 %v201
  %v758 = vunpack.c.l.b16 %v202
  %v759 = vunpack.c.h.b16 %v202
  %v760 = vunpack.c.l.b16 %v203
  %v761 = vunpack.c.h.b16 %v203
  %v762 = vunpack.c.l.b16 %v204
  %v763 = vunpack.c.h.b16 %v204
  %v764 = vunpack.c.l.b16 %v205
  %v765 = vunpack.c.h.b16 %v205
  %v766 = vunpack.c.l.b16 %v206
  %v767 = vunpack.c.h.b16 %v206
  %v768 = vunpack.c.l.b16 %v207
  %v769 = vunpack.c.h.b16 %v207
  %v770 = vunpack.c.l.b16 %v208
  %v771 = vunpack.c.h.b16 %v208
  %v772 = vunpack.c.l.b16 %v209
  %v773 = vunpack.c.h.b16 %v209
  %v774 = vunpack.c.l.b16 %v210
  %v775 = vunpack.c.h.b16 %v210
  %v776 = vunpack.c.l.b16 %v211
  %v777 = vunpack.c.h.b16 %v211
  %v778 = vunpack.c.l.b16 %v212
  %v779 = vunpack.c.h.b16 %v212
  %v780 = vunpack.c.l.b16 %v213
  %v781 = vunpack.c.h.b16 %v213
  %v782 = vunpack.c.l.b16 %v214
  %v783 = vunpack.c.h.b16 %v214
  %v784 = vunpack.c.l.b16 %v215
  %v785 = vunpack.c.h.b16 %v215
  %v786 = vunpack.c.l.b16 %v216
  %v787 = vunpack.c.h.b16 %v216
  %v788 = vunpack.c.l.b16 %v217
  %v789 = vunpack.c.h.b16 %v217
  %v790 = vunpack.c.l.b16 %v218
  %v791 = vunpack.c.h.b16 %v218
  %v792 = vunpack.c.l.b16 %v219
  %v793 = vunpack.c.h.b16 %v219
  %v794 = vunpack.c.l.b16 %v220
  %v795 = vunpack.c.h.b16 %v220
  %v796 = vunpack.c.l.b16 %v221
  %v797 = vunpack.c.h.b16 %v221
  %v798 = vunpack.c.l.b16 %v222
  %v799 = vunpack.c.h.b16 %v222
  %v800 = vunpack.c.l.b16 %v223
  %v801 = vunpack.c.h.b16 %v223
  %v802 = vunpack.c.l.b16 %v224
  %v803 = vunpack.c.h.b16 %v224
  %v804 = vunpack.c.l.b16 %v225
  %v805 = vunpack.c.h.b16 %v225
  %v806 = vunpack.c.l.b16 %v226
  %v807 = vunpack.c.h.b16 %v226
  %v808 = vunpack.c.l.b16 %v227
  %v809 = vunpack.c.h.b16 %v227
  %v810 = vunpack.c.l.b16 %v228
  %v811 = vunpack.c.h.b16 %v228
  %v812 = vunpack.c.l.b16 %v229
  %v813 = vunpack.c.h.b16 %v229
  %v814 = vunpack.c.l.b16 %v230
  %v815 = vunpack.c.h.b16 %v230
  %v816 = vunpack.c.l.b16 %v231
  %v817 = vunpack.c.h.b16 %v231
  %v818 = vunpack.c.l.b16 %v232
  %v819 = vunpack.c.h.b16 %v232
  %v820 = vunpack.c.l.b16 %v233
  %v821 = vunpack.c.h.b16 %v233
  %v822 = vunpack.c.l.b16 %v234
  %v823 = vunpack.c.h.b16 %v234
  %v824 = vunpack.c.l.b16 %v235
  %v825 = vunpack.c.h.b16 %v235
  %v826 = vunpack.c.l.b16 %v236
  %v827 = vunpack.c.h.b16 %v236
  %v828 = vunpack.c.l.b16 %v237
  %v829 = vunpack.c.h.b16 %v237
  %v830 = vunpack.c.l.b16 %v238
  %v831 = vunpack.c.h.b16 %v238
  %v832 = vunpack.c.l.b16 %v239
  %v833 = vunpack.c.h.b16 %v239
  %v834 = vunpack.c.l.b16 %v240
  %v835 = vunpack.c.h.b16 %v240
  %v836 = vunpack.c.l.b16 %v241
  %v837 = vunpack.c.h.b16 %v241
  %v838 = vunpack.c.l.b16 %v242
  %v839 = vunpack.c.h.b16 %v242
  %v840 = vunpack.c.l.b16 %v243
  %v841 = vunpack.c.h.b16 %v243
  %v842 = vunpack.c.l.b16 %v244
  %v843 = vunpack.c.h.b16 %v244
  %v844 = vunpack.c.l.b16 %v245
  %v845 = vunpack.c.h.b16 %v245
  %v846 = vunpack.c.l.b16 %v246
  %v847 = vunpack.c.h.b16 %v246
  %v848 = vunpack.c.l.b16 %v247
  %v849 = vunpack.c.h.b16 %v247
  %v850 = vunpack.c.l.b16 %v248
  %v851 = vunpack.c.h.b16 %v248
  %v852 = vunpack.c.l.b16 %v249
  %v853 = vunpack.c.h.b16 %v249
  %v854 = vunpack.c.l.b16 %v250
  %v855 = vunpack.c.h.b16 %v250
  %v856 = vunpack.c.l.b16 %v251
  %v857 = vunpack.c.h.b16 %v251
  %v858 = vunpack.c.l.b16 %v252
  %v859 = vunpack.c.h.b16 %v252
  %v860 = vunpack.c.l.b16 %v253
  %v861 = vunpack.c.h.b16 %v253
  %v862 = vunpack.c.l.b16 %v254
  %v863 = vunpack.c.h.b16 %v254
  %v864 = vunpack.c.l.b16 %v255
  %v865 = vunpack.c.h.b16 %v255
  %v866 = vpack.c.b16 %v478, %v474
  %v867 = vpack.c.b16 %v479, %v475
  %v868 = vpack.c.b16 %v480, %v476
  %v869 = vpack.c.b16 %v481, %v477
  %v870 = vpack.c.b16 %v486, %v482
  %v871 = vpack.c.b16 %v487, %v483
  %v872 = vpack.c.b16 %v488, %v484
  %v873 = vpack.c.b16 %v489, %v485
  %v874 = vpack.c.b16 %v494, %v490
  %v875 = vpack.c.b16 %v495, %v491
  %v876 = vpack.c.b16 %v496, %v492
  %v877 = vpack.c.b16 %v497, %v493
  %v878 = vpack.c.b16 %v502, %v498
  %v879 = vpack.c.b16 %v503, %v499
  %v880 = vpack.c.b16 %v504, %v500
  %v881 = vpack.c.b16 %v505, %v501
  %v882 = vpack.c.b16 %v510, %v506
  %v883 = vpack.c.b16 %v511, %v507
  %v884 = vpack.c.b16 %v512, %v508
  %v885 = vpack.c.b16 %v513, %v509
  %v886 = vpack.c.b16 %v518, %v514
  %v887 = vpack.c.b16 %v519, %v515
  %v888 = vpack.c.b16 %v520, %v516
  %v889 = vpack.c.b16 %v521, %v517
  %v890 = vpack.c.b16 %v526, %v522
  %v891 = vpack.c.b16 %v527, %v523
  %v892 = vpack.c.b16 %v528, %v524
  %v893 = vpack.c.b16 %v529, %v525
  %v894 = vpack.c.b16 %v534, %v530
  %v895 = vpack.c.b16 %v535, %v531
  %v896 = vpack.c.b16 %v536, %v532
  %v897 = vpack.c.b16 %v537, %v533
  %v898 = vpack.c.b16 %v542, %v538
  %v899 = vpack.c.b16 %v543, %v539
  %v900 = vpack.c.b16 %v544, %v540
  %v901 = vpack.c.b16 %v545, %v541
  %v902 = vpack.c.b16 %v550, %v546
  %v903 = vpack.c.b16 %v551, %v547
  %v904 = vpack.c.b16 %v552, %v548
  %v905 = vpack.c.b16 %v553, %v549
  %v906 = vpack.c.b16 %v558, %v554
  %v907 = vpack.c.b16 %v559, %v555
  %v908 = vpack.c.b16 %v560, %v556
  %v909 = vpack.c.b16 %v561, %v557
  %v910 = vpack.c.b16 %v566, %v562
  %v911 = vpack.c.b16 %v567, %v563
  %v912 = vpack.c.b16 %v568, %v564
  %v913 = vpack.c.b16 %v569, %v565
  %v914 = vpack.c.b16 %v574, %v570
  %v915 = vpack.c.b16 %v575, %v571
  %v916 = vpack.c.b16 %v576, %v572
  %v917 = vpack.c.b16 %v577, %v573
  %v918 = vpack.c.b16 %v582, %v578
  %v919 = vpack.c.b16 %v583, %v579
  %v920 = vpack.c.b16 %v584, %v580
  %v921 = vpack.c.b16 %v585, %v581
  %v922 = vpack.c.b16 %v590, %v586
  %v923 = vpack.c.b16 %v591, %v587
  %v924 = vpack.c.b16 %v592, %v588
  %v925 = vpack.c.b16 %v593, %v589
  %v926 = vpack.c.b16 %v598, %v594
  %v927 = vpack.c.b16 %v599, %v595
  %v928 = vpack.c.b16 %v600, %v596
  %v929 = vpack.c.b16 %v601, %v597
  %v930 = vpack.c.b16 %v606, %v602
  %v931 = vpack.c.b16 %v607, %v603
  %v932 = vpack.c.b16 %v608, %v604
  %v933 = vpack.c.b16 %v609, %v605
  %v934 = vpack.c.b16 %v614, %v610
  %v935 = vpack.c.b16 %v615, %v611
  %v936 = vpack.c.b16 %v616, %v612
  %v937 = vpack.c.b16 %v617, %v613
  %v938 = vpack.c.b16 %v622, %v618
  %v939 = vpack.c.b16 %v623, %v619
  %v940 = vpack.c.b16 %v624, %v620
  %v941 = vpack.c.b16 %v625, %v621
  %v942 = vpack.c.b16 %v630, %v626
  %v943 = vpack.c.b16 %v631, %v627
  %v944 = vpack.c.b16 %v632, %v628
  %v945 = vpack.c.b16 %v633, %v629
  %v946 = vpack.c.b16 %v638, %v634
  %v947 = vpack.c.b16 %v639, %v635
  %v948 = vpack.c.b16 %v640, %v636
  %v949 = vpack.c.b16 %v641, %v637
  %v950 = vpack.c.b16 %v646, %v642
  %v951 = vpack.c.b16 %v647, %v643
  %v952 = vpack.c.b16 %v648, %v644
  %v953 = vpack.c.b16 %v649, %v645
  %v954 = vpack.c.b16 %v654, %v650
  %v955 = vpack.c.b16 %v655, %v651
  %v956 = vpack.c.b16 %v656, %v652
  %v957 = vpack.c.b16 %v657, %v653
  %v958 = vpack.c.b16 %v662, %v658
  %v959 = vpack.c.b16 %v663, %v659
  %v960 = vpack.c.b16 %v664, %v660
  %v961 = vpack.c.b16 %v665, %v661
  %v962 = vpack.c.b16 %v670, %v666
  %v963 = vpack.c.b16 %v671, %v667
  %v964 = vpack.c.b16 %v672, %v668
  %v965 = vpack.c.b16 %v673, %v669
  %v966 = vpack.c.b16 %v678, %v674
  %v967 = vpack.c.b16 %v679, %v675
  %v968 = vpack.c.b16 %v680, %v676
  %v969 = vpack.c.b16 %v681, %v677
  %v970 = vpack.c.b16 %v686, %v682
  %v971 = vpack.c.b16 %v687, %v683
  %v972 = vpack.c.b16 %v688, %v684
  %v973 = vpack.c.b16 %v689, %v685
  %v974 = vpack.c.b16 %v694, %v690
  %v975 = vpack.c.b16 %v695, %v691
  %v976 = vpack.c.b16 %v696, %v692
  %v977 = vpack.c.b16 %v697, %v693
  %v978 = vpack.c.b16 %v702, %v698
  %v979 = vpack.c.b16 %v703, %v699
  %v980 = vpack.c.b16 %v704, %v700
  %v981 = vpack.c.b16 %v705, %v701
  %v982 = vpack.c.b16 %v710, %v706
  %v983 = vpack.c.b16 %v711, %v707
  %v984 = vpack.c.b16 %v712, %v708
  %v985 = vpack.c.b16 %v713, %v709
  %v986 = vpack.c.b16 %v718, %v714
  %v987 = vpack.c.b16 %v719, %v715
  %v988 = vpack.c.b16 %v720, %v716
  %v989 = vpack.c.b16 %v721, %v717
  %v990 = vpack.c.b16 %v726, %v722
  %v991 = vpack.c.b16 %v727, %v723
  %v992 = vpack.c.b16 %v728, %v724
  %v993 = vpack.c.b16 %v729, %v725
  %v994 = vpack.c.b16 %v734, %v730
  %v995 = vpack.c.b16 %v735, %v731
  %v996 = vpack.c.b16 %v736, %v732
  %v997 = vpack.c.b16 %v737, %v733
  %v998 = vpack.c.b16 %v742, %v738
  %v999 = vpack.c.b16 %v743, %v739
  %v1000 = vpack.c.b16 %v744, %v740
  %v1001 = vpack.c.b16 %v745, %v741
  %v1002 = vpack.c.b16 %v750, %v746
  %v1003 = vpack.c.b16 %v751, %v747
  %v1004 = vpack.c.b16 %v752, %v748
  %v1005 = vpack.c.b16 %v753, %v749
  %v1006 = vpack.c.b16 %v758, %v754
  %v1007 = vpack.c.b16 %v759, %v755
  %v1008 = vpack.c.b16 %v760, %v756
  %v1009 = vpack.c.b16 %v761, %v757
  %v1010 = vpack.c.b16 %v766, %v762
  %v1011 = vpack.c.b16 %v767, %v763
  %v1012 = vpack.c.b16 %v768, %v764
  %v1013 = vpack.c.b16 %v769, %v765
  %v1014 = vpack.c.b16 %v774, %v770
  %v1015 = vpack.c.b16 %v775, %v771
  %v1016 = vpack.c.b16 %v776, %v772
  %v1017 = vpack.c.b16 %v777, %v773
  %v1018 = vpack.c.b16 %v782, %v778
  %v1019 = vpack.c.b16 %v783, %v779
  %v1020 = vpack.c.b16 %v784, %v780
  %v1021 = vpack.c.b16 %v785, %v781
  %v1022 = vpack.c.b16 %v790, %v786
  %v1023 = vpack.c.b16 %v791, %v787
  %v1024 = vpack.c.b16 %v792, %v788
  %v1025 = vpack.c.b16 %v793, %v789
  %v1026 = vpack.c.b16 %v798, %v794
  %v1027 = vpack.c.b16 %v799, %v795
  %v1028 = vpack.c.b16 %v800, %v796
  %v1029 = vpack.c.b16 %v801, %v797
  %v1030 = vpack.c.b16 %v806, %v802
  %v1031 = vpack.c.b16 %v807, %v803
  %v1032 = vpack.c.b16 %v808, %v804
  %v1033 = vpack.c.b16 %v809, %v805
  %v1034 = vpack.c.b16 %v814, %v810
  %v1035 = vpack.c.b16 %v815, %v811
  %v1036 = vpack.c.b16 %v816, %v812
  %v1037 = vpack.c.b16 %v817, %v813
  %v1038 = vpack.c.b16 %v822, %v818
  %v1039 = vpack.c.b16 %v823, %v819
  %v1040 = vpack.c.b16 %v824, %v820
  %v1041 = vpack.c.b16 %v825, %v821
  %v1042 = vpack.c.b16 %v830, %v826
  %v1043 = vpack.c.b16 %v831, %v827
  %v1044 = vpack.c.b16 %v832, %v828
  %v1045 = vpack.c.b16 %v833, %v829
  %v1046 = vpack.c.b16 %v838, %v834
  %v1047 = vpack.c.b16 %v839, %v835
  %v1048 = vpack.c.b16 %v840, %v836
  %v1049 = vpack.c.b16 %v841, %v837
  %v1050 = vpack.c.b16 %v846, %v842
  %v1051 = vpack.c.b16 %v847, %v843
  %v1052 = vpack.c.b16 %v848, %v844
  %v1053 = vpack.c.b16 %v849, %v845
  %v1054 = vpack.c.b16 %v854, %v850
  %v1055 = vpack.c.b16 %v855, %v851
  %v1056 = vpack.c.b16 %v856, %v852
  %v1057 = vpack.c.b16 %v857, %v853
  %v1058 = vpack.c.b16 %v862, %v858
  %v1059 = vpack.c.b16 %v863, %v859
  %v1060 = vpack.c.b16 %v864, %v860
  %v1061 = vpack.c.b16 %v865, %v861
  %vm1258 = vcmask 130048
  %v1260 = vsel %vm1258, %v59, 0
  %1262 = vmatprep.subr.bf16.mxu0 %v867
  %1263 = vmatpush1.bf16.msra.mxu0 %v866
  %1264 = vmatprep.subr.bf16.mxu0 %v871
  %1265 = vmatpush1.bf16.msra.mxu0 %v870
  %1266 = vmatprep.subr.bf16.mxu0 %v875
  %1267 = vmatpush1.bf16.msra.mxu0 %v874
  %1268 = vmatprep.subr.bf16.mxu0 %v879
  %1269 = vmatpush1.bf16.msra.mxu0 %v878
  %1270 = vmatprep.subr.bf16.mxu0 %v883
  %1271 = vmatpush1.bf16.msra.mxu0 %v882
  %1272 = vmatprep.subr.bf16.mxu0 %v887
  %1273 = vmatpush1.bf16.msra.mxu0 %v886
  %1274 = vmatprep.subr.bf16.mxu0 %v891
  %1275 = vmatpush1.bf16.msra.mxu0 %v890
  %1276 = vmatprep.subr.bf16.mxu0 %v895
  %1277 = vmatpush1.bf16.msra.mxu0 %v894
  %1278 = vmatprep.subr.bf16.mxu0 %v899
  %1279 = vmatpush1.bf16.msra.mxu0 %v898
  %1280 = vmatprep.subr.bf16.mxu0 %v903
  %1281 = vmatpush1.bf16.msra.mxu0 %v902
  %1282 = vmatprep.subr.bf16.mxu0 %v907
  %1283 = vmatpush1.bf16.msra.mxu0 %v906
  %1284 = vmatprep.subr.bf16.mxu0 %v911
  %1285 = vmatpush1.bf16.msra.mxu0 %v910
  %1286 = vmatprep.subr.bf16.mxu0 %v915
  %1287 = vmatpush1.bf16.msra.mxu0 %v914
  %1288 = vmatprep.subr.bf16.mxu0 %v919
  %1289 = vmatpush1.bf16.msra.mxu0 %v918
  %1290 = vmatprep.subr.bf16.mxu0 %v923
  %1291 = vmatpush1.bf16.msra.mxu0 %v922
  %1292 = vmatprep.subr.bf16.mxu0 %v927
  %1293 = vmatpush1.bf16.msra.mxu0 %v926
  %1294 = vmatprep.mubr.bf16.mxu0 %v54
  %1295 = vmatmul.mubr.bf16.gmra.mrb[0].mxu0 %v53
  %v1296 = vpop.f32.mrb[0].mxu0
  %v1297 = vadd.f32 %v261, %v1296
  %v1298 = vpop.f32.mrb[0].mxu0
  %v1299 = vadd.f32 %v265, %v1298
  %v1300 = vpop.f32.mrb[0].mxu0
  %v1301 = vadd.f32 %v261, %v1300
  %v1302 = vpop.f32.mrb[0].mxu0
  %v1303 = vadd.f32 %v265, %v1302
  %1304 = vdwg.mxu0
  %1305 = vmatprep.subr.bf16.mxu0 %v931
  %1306 = vmatpush1.bf16.msra.mxu0 %v930
  %1307 = vmatprep.subr.bf16.mxu0 %v935
  %1308 = vmatpush1.bf16.msra.mxu0 %v934
  %1309 = vmatprep.subr.bf16.mxu0 %v939
  %1310 = vmatpush1.bf16.msra.mxu0 %v938
  %1311 = vmatprep.subr.bf16.mxu0 %v943
  %1312 = vmatpush1.bf16.msra.mxu0 %v942
  %1313 = vmatprep.subr.bf16.mxu0 %v947
  %1314 = vmatpush1.bf16.msra.mxu0 %v946
  %1315 = vmatprep.subr.bf16.mxu0 %v951
  %1316 = vmatpush1.bf16.msra.mxu0 %v950
  %1317 = vmatprep.subr.bf16.mxu0 %v955
  %1318 = vmatpush1.bf16.msra.mxu0 %v954
  %1319 = vmatprep.subr.bf16.mxu0 %v959
  %1320 = vmatpush1.bf16.msra.mxu0 %v958
  %1321 = vmatprep.subr.bf16.mxu0 %v963
  %1322 = vmatpush1.bf16.msra.mxu0 %v962
  %1323 = vmatprep.subr.bf16.mxu0 %v967
  %1324 = vmatpush1.bf16.msra.mxu0 %v966
  %1325 = vmatprep.subr.bf16.mxu0 %v971
  %1326 = vmatpush1.bf16.msra.mxu0 %v970
  %1327 = vmatprep.subr.bf16.mxu0 %v975
  %1328 = vmatpush1.bf16.msra.mxu0 %v974
  %1329 = vmatprep.subr.bf16.mxu0 %v979
  %1330 = vmatpush1.bf16.msra.mxu0 %v978
  %1331 = vmatprep.subr.bf16.mxu0 %v983
  %1332 = vmatpush1.bf16.msra.mxu0 %v982
  %1333 = vmatprep.subr.bf16.mxu0 %v987
  %1334 = vmatpush1.bf16.msra.mxu0 %v986
  %1335 = vmatprep.subr.bf16.mxu0 %v991
  %1336 = vmatpush1.bf16.msra.mxu0 %v990
  %1337 = vmatprep.mubr.bf16.mxu0 %v56
  %1338 = vmatmul.mubr.bf16.gmra.mrb[0].mxu0 %v55
  %v1339 = vpop.f32.mrb[0].mxu0
  %v1340 = vadd.f32 %v1297, %v1339
  %v1341 = vpop.f32.mrb[0].mxu0
  %v1342 = vadd.f32 %v1299, %v1341
  %v1343 = vpop.f32.mrb[0].mxu0
  %v1344 = vadd.f32 %v1301, %v1343
  %v1345 = vpop.f32.mrb[0].mxu0
  %v1346 = vadd.f32 %v1303, %v1345
  %1347 = vdwg.mxu0
  %1348 = vmatprep.subr.bf16.mxu0 %v995
  %1349 = vmatpush1.bf16.msra.mxu0 %v994
  %1350 = vmatprep.subr.bf16.mxu0 %v999
  %1351 = vmatpush1.bf16.msra.mxu0 %v998
  %1352 = vmatprep.subr.bf16.mxu0 %v1003
  %1353 = vmatpush1.bf16.msra.mxu0 %v1002
  %1354 = vmatprep.subr.bf16.mxu0 %v1007
  %1355 = vmatpush1.bf16.msra.mxu0 %v1006
  %1356 = vmatprep.subr.bf16.mxu0 %v1011
  %1357 = vmatpush1.bf16.msra.mxu0 %v1010
  %1358 = vmatprep.subr.bf16.mxu0 %v1015
  %1359 = vmatpush1.bf16.msra.mxu0 %v1014
  %1360 = vmatprep.subr.bf16.mxu0 %v1019
  %1361 = vmatpush1.bf16.msra.mxu0 %v1018
  %1362 = vmatprep.subr.bf16.mxu0 %v1023
  %1363 = vmatpush1.bf16.msra.mxu0 %v1022
  %1364 = vmatprep.subr.bf16.mxu0 %v1027
  %1365 = vmatpush1.bf16.msra.mxu0 %v1026
  %1366 = vmatprep.subr.bf16.mxu0 %v1031
  %1367 = vmatpush1.bf16.msra.mxu0 %v1030
  %1368 = vmatprep.subr.bf16.mxu0 %v1035
  %1369 = vmatpush1.bf16.msra.mxu0 %v1034
  %1370 = vmatprep.subr.bf16.mxu0 %v1039
  %1371 = vmatpush1.bf16.msra.mxu0 %v1038
  %1372 = vmatprep.subr.bf16.mxu0 %v1043
  %1373 = vmatpush1.bf16.msra.mxu0 %v1042
  %1374 = vmatprep.subr.bf16.mxu0 %v1047
  %1375 = vmatpush1.bf16.msra.mxu0 %v1046
  %1376 = vmatprep.subr.bf16.mxu0 %v1051
  %1377 = vmatpush1.bf16.msra.mxu0 %v1050
  %1378 = vmatprep.subr.bf16.mxu0 %v1055
  %1379 = vmatpush1.bf16.msra.mxu0 %v1054
  %1380 = vmatprep.mubr.bf16.mxu0 %v58
  %1381 = vmatmul.mubr.bf16.gmra.mrb[0].mxu0 %v57
  %v1382 = vpop.f32.mrb[0].mxu0
  %v1383 = vadd.f32 %v1340, %v1382
  %v1384 = vpop.f32.mrb[0].mxu0
  %v1385 = vadd.f32 %v1342, %v1384
  %v1386 = vpop.f32.mrb[0].mxu0
  %v1387 = vadd.f32 %v1344, %v1386
  %v1388 = vpop.f32.mrb[0].mxu0
  %v1389 = vadd.f32 %v1346, %v1388
  %1390 = vdwg.mxu0
  %1391 = vmatprep.subr.bf16.mxu0 %v1059
  %1392 = vmatpush1.bf16.msra.mxu0 %v1058
  %1393 = vmatprep.subr.bf16.mxu0 0
  %1394 = vmatpush1.bf16.msra.mxu0 0
  %1395 = vmatprep.subr.bf16.mxu0 0
  %1396 = vmatpush1.bf16.msra.mxu0 0
  %1397 = vmatprep.subr.bf16.mxu0 0
  %1398 = vmatpush1.bf16.msra.mxu0 0
  %1399 = vmatprep.subr.bf16.mxu0 0
  %1400 = vmatpush1.bf16.msra.mxu0 0
  %1401 = vmatprep.subr.bf16.mxu0 0
  %1402 = vmatpush1.bf16.msra.mxu0 0
  %1403 = vmatprep.subr.bf16.mxu0 0
  %1404 = vmatpush1.bf16.msra.mxu0 0
  %1405 = vmatprep.subr.bf16.mxu0 0
  %1406 = vmatpush1.bf16.msra.mxu0 0
  %1407 = vmatprep.subr.bf16.mxu0 0
  %1408 = vmatpush1.bf16.msra.mxu0 0
  %1409 = vmatprep.subr.bf16.mxu0 0
  %1410 = vmatpush1.bf16.msra.mxu0 0
  %1411 = vmatprep.subr.bf16.mxu0 0
  %1412 = vmatpush1.bf16.msra.mxu0 0
  %1413 = vmatprep.subr.bf16.mxu0 0
  %1414 = vmatpush1.bf16.msra.mxu0 0
  %1415 = vmatprep.subr.bf16.mxu0 0
  %1416 = vmatpush1.bf16.msra.mxu0 0
  %1417 = vmatprep.subr.bf16.mxu0 0
  %1418 = vmatpush1.bf16.msra.mxu0 0
  %1419 = vmatprep.subr.bf16.mxu0 0
  %1420 = vmatpush1.bf16.msra.mxu0 0
  %1421 = vmatprep.subr.bf16.mxu0 0
  %1422 = vmatpush1.bf16.msra.mxu0 0
  %1423 = vmatprep.mubr.bf16.mxu0 0
  %1424 = vmatmul.mubr.bf16.gmra.mrb[0].mxu0 %v1260
  %v1425 = vpop.f32.mrb[0].mxu0
  %v1426 = vadd.f32 %v1383, %v1425
  %v1427 = vpop.f32.mrb[0].mxu0
  %v1428 = vadd.f32 %v1385, %v1427
  %v1429 = vpop.f32.mrb[0].mxu0
  %v1430 = vadd.f32 %v1387, %v1429
  %v1431 = vpop.f32.mrb[0].mxu0
  %v1432 = vadd.f32 %v1389, %v1431
  %1433 = vdwg.mxu0
  %1434 = vmatprep.subr.bf16.mxu0 %v869
  %1435 = vmatpush1.bf16.msra.mxu0 %v868
  %1436 = vmatprep.subr.bf16.mxu0 %v873
  %1437 = vmatpush1.bf16.msra.mxu0 %v872
  %1438 = vmatprep.subr.bf16.mxu0 %v877
  %1439 = vmatpush1.bf16.msra.mxu0 %v876
  %1440 = vmatprep.subr.bf16.mxu0 %v881
  %1441 = vmatpush1.bf16.msra.mxu0 %v880
  %1442 = vmatprep.subr.bf16.mxu0 %v885
  %1443 = vmatpush1.bf16.msra.mxu0 %v884
  %1444 = vmatprep.subr.bf16.mxu0 %v889
  %1445 = vmatpush1.bf16.msra.mxu0 %v888
  %1446 = vmatprep.subr.bf16.mxu0 %v893
  %1447 = vmatpush1.bf16.msra.mxu0 %v892
  %1448 = vmatprep.subr.bf16.mxu0 %v897
  %1449 = vmatpush1.bf16.msra.mxu0 %v896
  %1450 = vmatprep.subr.bf16.mxu0 %v901
  %1451 = vmatpush1.bf16.msra.mxu0 %v900
  %1452 = vmatprep.subr.bf16.mxu0 %v905
  %1453 = vmatpush1.bf16.msra.mxu0 %v904
  %1454 = vmatprep.subr.bf16.mxu0 %v909
  %1455 = vmatpush1.bf16.msra.mxu0 %v908
  %1456 = vmatprep.subr.bf16.mxu0 %v913
  %1457 = vmatpush1.bf16.msra.mxu0 %v912
  %1458 = vmatprep.subr.bf16.mxu0 %v917
  %1459 = vmatpush1.bf16.msra.mxu0 %v916
  %1460 = vmatprep.subr.bf16.mxu0 %v921
  %1461 = vmatpush1.bf16.msra.mxu0 %v920
  %1462 = vmatprep.subr.bf16.mxu0 %v925
  %1463 = vmatpush1.bf16.msra.mxu0 %v924
  %1464 = vmatprep.subr.bf16.mxu0 %v929
  %1465 = vmatpush1.bf16.msra.mxu0 %v928
  %1466 = vmatprep.mubr.bf16.mxu0 %v54
  %1467 = vmatmul.mubr.bf16.gmra.mrb[0].mxu0 %v53
  %v1468 = vpop.f32.mrb[0].mxu0
  %v1469 = vadd.f32 %v269, %v1468
  %v1470 = vpop.f32.mrb[0].mxu0
  %v1471 = vadd.f32 %v273, %v1470
  %v1472 = vpop.f32.mrb[0].mxu0
  %v1473 = vadd.f32 %v269, %v1472
  %v1474 = vpop.f32.mrb[0].mxu0
  %v1475 = vadd.f32 %v273, %v1474
  %1476 = vdwg.mxu0
  %1477 = vmatprep.subr.bf16.mxu0 %v933
  %1478 = vmatpush1.bf16.msra.mxu0 %v932
  %1479 = vmatprep.subr.bf16.mxu0 %v937
  %1480 = vmatpush1.bf16.msra.mxu0 %v936
  %1481 = vmatprep.subr.bf16.mxu0 %v941
  %1482 = vmatpush1.bf16.msra.mxu0 %v940
  %1483 = vmatprep.subr.bf16.mxu0 %v945
  %1484 = vmatpush1.bf16.msra.mxu0 %v944
  %1485 = vmatprep.subr.bf16.mxu0 %v949
  %1486 = vmatpush1.bf16.msra.mxu0 %v948
  %1487 = vmatprep.subr.bf16.mxu0 %v953
  %1488 = vmatpush1.bf16.msra.mxu0 %v952
  %1489 = vmatprep.subr.bf16.mxu0 %v957
  %1490 = vmatpush1.bf16.msra.mxu0 %v956
  %1491 = vmatprep.subr.bf16.mxu0 %v961
  %1492 = vmatpush1.bf16.msra.mxu0 %v960
  %1493 = vmatprep.subr.bf16.mxu0 %v965
  %1494 = vmatpush1.bf16.msra.mxu0 %v964
  %1495 = vmatprep.subr.bf16.mxu0 %v969
  %1496 = vmatpush1.bf16.msra.mxu0 %v968
  %1497 = vmatprep.subr.bf16.mxu0 %v973
  %1498 = vmatpush1.bf16.msra.mxu0 %v972
  %1499 = vmatprep.subr.bf16.mxu0 %v977
  %1500 = vmatpush1.bf16.msra.mxu0 %v976
  %1501 = vmatprep.subr.bf16.mxu0 %v981
  %1502 = vmatpush1.bf16.msra.mxu0 %v980
  %1503 = vmatprep.subr.bf16.mxu0 %v985
  %1504 = vmatpush1.bf16.msra.mxu0 %v984
  %1505 = vmatprep.subr.bf16.mxu0 %v989
  %1506 = vmatpush1.bf16.msra.mxu0 %v988
  %1507 = vmatprep.subr.bf16.mxu0 %v993
  %1508 = vmatpush1.bf16.msra.mxu0 %v992
  %1509 = vmatprep.mubr.bf16.mxu0 %v56
  %1510 = vmatmul.mubr.bf16.gmra.mrb[0].mxu0 %v55
  %v1511 = vpop.f32.mrb[0].mxu0
  %v1512 = vadd.f32 %v1469, %v1511
  %v1513 = vpop.f32.mrb[0].mxu0
  %v1514 = vadd.f32 %v1471, %v1513
  %v1515 = vpop.f32.mrb[0].mxu0
  %v1516 = vadd.f32 %v1473, %v1515
  %v1517 = vpop.f32.mrb[0].mxu0
  %v1518 = vadd.f32 %v1475, %v1517
  %1519 = vdwg.mxu0
  %1520 = vmatprep.subr.bf16.mxu0 %v997
  %1521 = vmatpush1.bf16.msra.mxu0 %v996
  %1522 = vmatprep.subr.bf16.mxu0 %v1001
  %1523 = vmatpush1.bf16.msra.mxu0 %v1000
  %1524 = vmatprep.subr.bf16.mxu0 %v1005
  %1525 = vmatpush1.bf16.msra.mxu0 %v1004
  %1526 = vmatprep.subr.bf16.mxu0 %v1009
  %1527 = vmatpush1.bf16.msra.mxu0 %v1008
  %1528 = vmatprep.subr.bf16.mxu0 %v1013
  %1529 = vmatpush1.bf16.msra.mxu0 %v1012
  %1530 = vmatprep.subr.bf16.mxu0 %v1017
  %1531 = vmatpush1.bf16.msra.mxu0 %v1016
  %1532 = vmatprep.subr.bf16.mxu0 %v1021
  %1533 = vmatpush1.bf16.msra.mxu0 %v1020
  %1534 = vmatprep.subr.bf16.mxu0 %v1025
  %1535 = vmatpush1.bf16.msra.mxu0 %v1024
  %1536 = vmatprep.subr.bf16.mxu0 %v1029
  %1537 = vmatpush1.bf16.msra.mxu0 %v1028
  %1538 = vmatprep.subr.bf16.mxu0 %v1033
  %1539 = vmatpush1.bf16.msra.mxu0 %v1032
  %1540 = vmatprep.subr.bf16.mxu0 %v1037
  %1541 = vmatpush1.bf16.msra.mxu0 %v1036
  %1542 = vmatprep.subr.bf16.mxu0 %v1041
  %1543 = vmatpush1.bf16.msra.mxu0 %v1040
  %1544 = vmatprep.subr.bf16.mxu0 %v1045
  %1545 = vmatpush1.bf16.msra.mxu0 %v1044
  %1546 = vmatprep.subr.bf16.mxu0 %v1049
  %1547 = vmatpush1.bf16.msra.mxu0 %v1048
  %1548 = vmatprep.subr.bf16.mxu0 %v1053
  %1549 = vmatpush1.bf16.msra.mxu0 %v1052
  %1550 = vmatprep.subr.bf16.mxu0 %v1057
  %1551 = vmatpush1.bf16.msra.mxu0 %v1056
  %1552 = vmatprep.mubr.bf16.mxu0 %v58
  %1553 = vmatmul.mubr.bf16.gmra.mrb[0].mxu0 %v57
  %v1554 = vpop.f32.mrb[0].mxu0
  %v1555 = vadd.f32 %v1512, %v1554
  %v1556 = vpop.f32.mrb[0].mxu0
  %v1557 = vadd.f32 %v1514, %v1556
  %v1558 = vpop.f32.mrb[0].mxu0
  %v1559 = vadd.f32 %v1516, %v1558
  %v1560 = vpop.f32.mrb[0].mxu0
  %v1561 = vadd.f32 %v1518, %v1560
  %1562 = vdwg.mxu0
  %1563 = vmatprep.subr.bf16.mxu0 %v1061
  %1564 = vmatpush1.bf16.msra.mxu0 %v1060
  %1565 = vmatprep.subr.bf16.mxu0 0
  %1566 = vmatpush1.bf16.msra.mxu0 0
  %1567 = vmatprep.subr.bf16.mxu0 0
  %1568 = vmatpush1.bf16.msra.mxu0 0
  %1569 = vmatprep.subr.bf16.mxu0 0
  %1570 = vmatpush1.bf16.msra.mxu0 0
  %1571 = vmatprep.subr.bf16.mxu0 0
  %1572 = vmatpush1.bf16.msra.mxu0 0
  %1573 = vmatprep.subr.bf16.mxu0 0
  %1574 = vmatpush1.bf16.msra.mxu0 0
  %1575 = vmatprep.subr.bf16.mxu0 0
  %1576 = vmatpush1.bf16.msra.mxu0 0
  %1577 = vmatprep.subr.bf16.mxu0 0
  %1578 = vmatpush1.bf16.msra.mxu0 0
  %1579 = vmatprep.subr.bf16.mxu0 0
  %1580 = vmatpush1.bf16.msra.mxu0 0
  %1581 = vmatprep.subr.bf16.mxu0 0
  %1582 = vmatpush1.bf16.msra.mxu0 0
  %1583 = vmatprep.subr.bf16.mxu0 0
  %1584 = vmatpush1.bf16.msra.mxu0 0
  %1585 = vmatprep.subr.bf16.mxu0 0
  %1586 = vmatpush1.bf16.msra.mxu0 0
  %1587 = vmatprep.subr.bf16.mxu0 0
  %1588 = vmatpush1.bf16.msra.mxu0 0
  %1589 = vmatprep.subr.bf16.mxu0 0
  %1590 = vmatpush1.bf16.msra.mxu0 0
  %1591 = vmatprep.subr.bf16.mxu0 0
  %1592 = vmatpush1.bf16.msra.mxu0 0
  %1593 = vmatprep.subr.bf16.mxu0 0
  %1594 = vmatpush1.bf16.msra.mxu0 0
  %1595 = vmatprep.mubr.bf16.mxu0 0
  %1596 = vmatmul.mubr.bf16.gmra.mrb[0].mxu0 %v1260
  %v1597 = vpop.f32.mrb[0].mxu0
  %v1598 = vadd.f32 %v1555, %v1597
  %v1599 = vpop.f32.mrb[0].mxu0
  %v1600 = vadd.f32 %v1557, %v1599
  %v1601 = vpop.f32.mrb[0].mxu0
  %v1602 = vadd.f32 %v1559, %v1601
  %v1603 = vpop.f32.mrb[0].mxu0
  %v1604 = vadd.f32 %v1561, %v1603
  %1605 = vdwg.mxu0
  %v1606 = vmax.f32 %v1426, 0.0
  %v1607 = vmax.f32 %v1428, 0.0
  %v1608 = vmax.f32 %v1598, 0.0
  %v1609 = vmax.f32 %v1600, 0.0
  %v1610 = vmax.f32 %v1430, 0.0
  %v1611 = vmax.f32 %v1432, 0.0
  %v1612 = vmax.f32 %v1602, 0.0
  %v1613 = vmax.f32 %v1604, 0.0
  %v1614 = vpack.c.bf16 %v1610, %v1606
  %v1615 = vpack.c.bf16 %v1611, %v1607
  %v1616 = vpack.c.bf16 %v1612, %v1608
  %v1617 = vpack.c.bf16 %v1613, %v1609
  %v1618 = vld [vmem:[%s3] sm:$0xff]
  %v1619 = vld [vmem:[%s3 + $0x8] sm:$0xff]
  %v1620 = vld [vmem:[%s3 + $0x10] sm:$0xff]
  %v1621 = vld [vmem:[%s3 + $0x18] sm:$0xff]
  %v1622 = vld [vmem:[%s3 + $0x20] sm:$0xff]
  %v1623 = vld [vmem:[%s3 + $0x28] sm:$0xff]
  %v1624 = vld [vmem:[%s3 + $0x30] sm:$0xff]
  %v1625 = vld [vmem:[%s3 + $0x38] sm:$0xff]
  %v1626 = vld [vmem:[%s3 + $0x40] sm:$0xff]
  %v1627 = vld [vmem:[%s3 + $0x48] sm:$0xff]
  %v1628 = vld [vmem:[%s3 + $0x50] sm:$0xff]
  %v1629 = vld [vmem:[%s3 + $0x58] sm:$0xff]
  %v1630 = vld [vmem:[%s3 + $0x60] sm:$0xff]
  %v1631 = vld [vmem:[%s3 + $0x68] sm:$0xff]
  %v1632 = vld [vmem:[%s3 + $0x70] sm:$0xff]
  %v1633 = vld [vmem:[%s3 + $0x78] sm:$0xff]
  %v1634 = vld [vmem:[%s3 + $0x80] sm:$0xff]
  %v1635 = vld [vmem:[%s3 + $0x88] sm:$0xff]
  %v1636 = vld [vmem:[%s3 + $0x90] sm:$0xff]
  %v1637 = vld [vmem:[%s3 + $0x98] sm:$0xff]
  %v1638 = vld [vmem:[%s3 + $0xa0] sm:$0xff]
  %v1639 = vld [vmem:[%s3 + $0xa8] sm:$0xff]
  %v1640 = vld [vmem:[%s3 + $0xb0] sm:$0xff]
  %v1641 = vld [vmem:[%s3 + $0xb8] sm:$0xff]
  %v1642 = vld [vmem:[%s3 + $0xc0] sm:$0xff]
  %v1643 = vld [vmem:[%s3 + $0xc8] sm:$0xff]
  %v1644 = vld [vmem:[%s3 + $0xd0] sm:$0xff]
  %v1645 = vld [vmem:[%s3 + $0xd8] sm:$0xff]
  %v1646 = vld [vmem:[%s3 + $0xe0] sm:$0xff]
  %v1647 = vld [vmem:[%s3 + $0xe8] sm:$0xff]
  %v1648 = vld [vmem:[%s3 + $0xf0] sm:$0xff]
  %v1649 = vld [vmem:[%s3 + $0xf8] sm:$0xff]
  %v1650 = vld [vmem:[%s3 + $0x100] sm:$0xff]
  %v1651 = vld [vmem:[%s3 + $0x108] sm:$0xff]
  %v1652 = vld [vmem:[%s3 + $0x110] sm:$0xff]
  %v1653 = vld [vmem:[%s3 + $0x118] sm:$0xff]
  %v1654 = vld [vmem:[%s3 + $0x120] sm:$0xff]
  %v1655 = vld [vmem:[%s3 + $0x128] sm:$0xff]
  %v1656 = vld [vmem:[%s3 + $0x130] sm:$0xff]
  %v1657 = vld [vmem:[%s3 + $0x138] sm:$0xff]
  %v1658 = vld [vmem:[%s3 + $0x140] sm:$0xff]
  %v1659 = vld [vmem:[%s3 + $0x148] sm:$0xff]
  %v1660 = vld [vmem:[%s3 + $0x150] sm:$0xff]
  %v1661 = vld [vmem:[%s3 + $0x158] sm:$0xff]
  %v1662 = vld [vmem:[%s3 + $0x160] sm:$0xff]
  %v1663 = vld [vmem:[%s3 + $0x168] sm:$0xff]
  %v1664 = vld [vmem:[%s3 + $0x170] sm:$0xff]
  %v1665 = vld [vmem:[%s3 + $0x178] sm:$0xff]
  %v1666 = vld [vmem:[%s3 + $0x180] sm:$0xff]
  %v1667 = vld [vmem:[%s3 + $0x188] sm:$0xff]
  %v1668 = vld [vmem:[%s3 + $0x190] sm:$0xff]
  %v1669 = vld [vmem:[%s3 + $0x198] sm:$0xff]
  %v1670 = vld [vmem:[%s3 + $0x1a0] sm:$0xff]
  %v1671 = vld [vmem:[%s3 + $0x1a8] sm:$0xff]
  %v1672 = vld [vmem:[%s3 + $0x1b0] sm:$0xff]
  %v1673 = vld [vmem:[%s3 + $0x1b8] sm:$0xff]
  %v1674 = vld [vmem:[%s3 + $0x1c0] sm:$0xff]
  %v1675 = vld [vmem:[%s3 + $0x1c8] sm:$0xff]
  %v1676 = vld [vmem:[%s3 + $0x1d0] sm:$0xff]
  %v1677 = vld [vmem:[%s3 + $0x1d8] sm:$0xff]
  %v1678 = vld [vmem:[%s3 + $0x1e0] sm:$0xff]
  %v1679 = vld [vmem:[%s3 + $0x1e8] sm:$0xff]
  %v1680 = vld [vmem:[%s3 + $0x1f0] sm:$0xff]
  %v1681 = vld [vmem:[%s3 + $0x1f8] sm:$0xff]
  %v1682 = vld [vmem:[%s3 + $0x200] sm:$0xff]
  %v1683 = vld [vmem:[%s3 + $0x208] sm:$0xff]
  %v1684 = vld [vmem:[%s3 + $0x210] sm:$0xff]
  %v1685 = vld [vmem:[%s3 + $0x218] sm:$0xff]
  %v1686 = vld [vmem:[%s3 + $0x220] sm:$0xff]
  %v1687 = vld [vmem:[%s3 + $0x228] sm:$0xff]
  %v1688 = vld [vmem:[%s3 + $0x230] sm:$0xff]
  %v1689 = vld [vmem:[%s3 + $0x238] sm:$0xff]
  %v1690 = vld [vmem:[%s3 + $0x240] sm:$0xff]
  %v1691 = vld [vmem:[%s3 + $0x248] sm:$0xff]
  %v1692 = vld [vmem:[%s3 + $0x250] sm:$0xff]
  %v1693 = vld [vmem:[%s3 + $0x258] sm:$0xff]
  %v1694 = vld [vmem:[%s3 + $0x260] sm:$0xff]
  %v1695 = vld [vmem:[%s3 + $0x268] sm:$0xff]
  %v1696 = vld [vmem:[%s3 + $0x270] sm:$0xff]
  %v1697 = vld [vmem:[%s3 + $0x278] sm:$0xff]
  %v1698 = vld [vmem:[%s3 + $0x280] sm:$0xff]
  %v1699 = vld [vmem:[%s3 + $0x288] sm:$0xff]
  %v1700 = vld [vmem:[%s3 + $0x290] sm:$0xff]
  %v1701 = vld [vmem:[%s3 + $0x298] sm:$0xff]
  %v1702 = vld [vmem:[%s3 + $0x2a0] sm:$0xff]
  %v1703 = vld [vmem:[%s3 + $0x2a8] sm:$0xff]
  %v1704 = vld [vmem:[%s3 + $0x2b0] sm:$0xff]
  %v1705 = vld [vmem:[%s3 + $0x2b8] sm:$0xff]
  %v1706 = vld [vmem:[%s3 + $0x2c0] sm:$0xff]
  %v1707 = vld [vmem:[%s3 + $0x2c8] sm:$0xff]
  %v1708 = vld [vmem:[%s3 + $0x2d0] sm:$0xff]
  %v1709 = vld [vmem:[%s3 + $0x2d8] sm:$0xff]
  %v1710 = vld [vmem:[%s3 + $0x2e0] sm:$0xff]
  %v1711 = vld [vmem:[%s3 + $0x2e8] sm:$0xff]
  %v1712 = vld [vmem:[%s3 + $0x2f0] sm:$0xff]
  %v1713 = vld [vmem:[%s3 + $0x2f8] sm:$0xff]
  %v1714 = vld [vmem:[%s3 + $0x300] sm:$0xff]
  %v1715 = vld [vmem:[%s3 + $0x308] sm:$0xff]
  %v1716 = vld [vmem:[%s3 + $0x310] sm:$0xff]
  %v1717 = vld [vmem:[%s3 + $0x318] sm:$0xff]
  %v1718 = vld [vmem:[%s3 + $0x320] sm:$0xff]
  %v1719 = vld [vmem:[%s3 + $0x328] sm:$0xff]
  %v1720 = vld [vmem:[%s3 + $0x330] sm:$0xff]
  %v1721 = vld [vmem:[%s3 + $0x338] sm:$0xff]
  %v1722 = vld [vmem:[%s3 + $0x340] sm:$0xff]
  %v1723 = vld [vmem:[%s3 + $0x348] sm:$0xff]
  %v1724 = vld [vmem:[%s3 + $0x350] sm:$0xff]
  %v1725 = vld [vmem:[%s3 + $0x358] sm:$0xff]
  %v1726 = vld [vmem:[%s3 + $0x360] sm:$0xff]
  %v1727 = vld [vmem:[%s3 + $0x368] sm:$0xff]
  %v1728 = vld [vmem:[%s3 + $0x370] sm:$0xff]
  %v1729 = vld [vmem:[%s3 + $0x378] sm:$0xff]
  %v1730 = vld [vmem:[%s3 + $0x380] sm:$0xff]
  %v1731 = vld [vmem:[%s3 + $0x388] sm:$0xff]
  %v1732 = vld [vmem:[%s3 + $0x390] sm:$0xff]
  %v1733 = vld [vmem:[%s3 + $0x398] sm:$0xff]
  %v1734 = vld [vmem:[%s3 + $0x3a0] sm:$0xff]
  %v1735 = vld [vmem:[%s3 + $0x3a8] sm:$0xff]
  %v1736 = vld [vmem:[%s3 + $0x3b0] sm:$0xff]
  %v1737 = vld [vmem:[%s3 + $0x3b8] sm:$0xff]
  %v1738 = vld [vmem:[%s3 + $0x3c0] sm:$0xff]
  %v1739 = vld [vmem:[%s3 + $0x3c8] sm:$0xff]
  %v1740 = vld [vmem:[%s3 + $0x3d0] sm:$0xff]
  %v1741 = vld [vmem:[%s3 + $0x3d8] sm:$0xff]
  %v1742 = vld [vmem:[%s3 + $0x3e0] sm:$0xff]
  %v1743 = vld [vmem:[%s3 + $0x3e8] sm:$0xff]
  %v1744 = vld [vmem:[%s3 + $0x3f0] sm:$0xff]
  %v1745 = vld [vmem:[%s3 + $0x3f8] sm:$0xff]
  %v1746 = vld [vmem:[%s4] sm:$0xf]
  %v1748 = vlaneseq
  %v1749 = vshrl.u32 %v1748, 7
  %v1750 = vsub.s32 0, %v1749
  %v1751 = vrot.slane %v1746, %v1750
  %v1752 = vlaneseq
  %v1753 = vshrl.u32 %v1752, 7
  %v1754 = vsub.s32 1, %v1753
  %v1755 = vrot.slane %v1746, %v1754
  %v1756 = vlaneseq
  %v1757 = vshrl.u32 %v1756, 7
  %v1758 = vsub.s32 2, %v1757
  %v1759 = vrot.slane %v1746, %v1758
  %v1760 = vlaneseq
  %v1761 = vshrl.u32 %v1760, 7
  %v1762 = vsub.s32 3, %v1761
  %v1763 = vrot.slane %v1746, %v1762
  %v1896 = vunpack.c.l.b16 %v1618
  %v1897 = vunpack.c.h.b16 %v1618
  %v1898 = vunpack.c.l.b16 %v1619
  %v1899 = vunpack.c.h.b16 %v1619
  %v1900 = vunpack.c.l.b16 %v1620
  %v1901 = vunpack.c.h.b16 %v1620
  %v1902 = vunpack.c.l.b16 %v1621
  %v1903 = vunpack.c.h.b16 %v1621
  %v1904 = vunpack.c.l.b16 %v1622
  %v1905 = vunpack.c.h.b16 %v1622
  %v1906 = vunpack.c.l.b16 %v1623
  %v1907 = vunpack.c.h.b16 %v1623
  %v1908 = vunpack.c.l.b16 %v1624
  %v1909 = vunpack.c.h.b16 %v1624
  %v1910 = vunpack.c.l.b16 %v1625
  %v1911 = vunpack.c.h.b16 %v1625
  %v1912 = vunpack.c.l.b16 %v1626
  %v1913 = vunpack.c.h.b16 %v1626
  %v1914 = vunpack.c.l.b16 %v1627
  %v1915 = vunpack.c.h.b16 %v1627
  %v1916 = vunpack.c.l.b16 %v1628
  %v1917 = vunpack.c.h.b16 %v1628
  %v1918 = vunpack.c.l.b16 %v1629
  %v1919 = vunpack.c.h.b16 %v1629
  %v1920 = vunpack.c.l.b16 %v1630
  %v1921 = vunpack.c.h.b16 %v1630
  %v1922 = vunpack.c.l.b16 %v1631
  %v1923 = vunpack.c.h.b16 %v1631
  %v1924 = vunpack.c.l.b16 %v1632
  %v1925 = vunpack.c.h.b16 %v1632
  %v1926 = vunpack.c.l.b16 %v1633
  %v1927 = vunpack.c.h.b16 %v1633
  %v1928 = vunpack.c.l.b16 %v1634
  %v1929 = vunpack.c.h.b16 %v1634
  %v1930 = vunpack.c.l.b16 %v1635
  %v1931 = vunpack.c.h.b16 %v1635
  %v1932 = vunpack.c.l.b16 %v1636
  %v1933 = vunpack.c.h.b16 %v1636
  %v1934 = vunpack.c.l.b16 %v1637
  %v1935 = vunpack.c.h.b16 %v1637
  %v1936 = vunpack.c.l.b16 %v1638
  %v1937 = vunpack.c.h.b16 %v1638
  %v1938 = vunpack.c.l.b16 %v1639
  %v1939 = vunpack.c.h.b16 %v1639
  %v1940 = vunpack.c.l.b16 %v1640
  %v1941 = vunpack.c.h.b16 %v1640
  %v1942 = vunpack.c.l.b16 %v1641
  %v1943 = vunpack.c.h.b16 %v1641
  %v1944 = vunpack.c.l.b16 %v1642
  %v1945 = vunpack.c.h.b16 %v1642
  %v1946 = vunpack.c.l.b16 %v1643
  %v1947 = vunpack.c.h.b16 %v1643
  %v1948 = vunpack.c.l.b16 %v1644
  %v1949 = vunpack.c.h.b16 %v1644
  %v1950 = vunpack.c.l.b16 %v1645
  %v1951 = vunpack.c.h.b16 %v1645
  %v1952 = vunpack.c.l.b16 %v1646
  %v1953 = vunpack.c.h.b16 %v1646
  %v1954 = vunpack.c.l.b16 %v1647
  %v1955 = vunpack.c.h.b16 %v1647
  %v1956 = vunpack.c.l.b16 %v1648
  %v1957 = vunpack.c.h.b16 %v1648
  %v1958 = vunpack.c.l.b16 %v1649
  %v1959 = vunpack.c.h.b16 %v1649
  %v1960 = vunpack.c.l.b16 %v1650
  %v1961 = vunpack.c.h.b16 %v1650
  %v1962 = vunpack.c.l.b16 %v1651
  %v1963 = vunpack.c.h.b16 %v1651
  %v1964 = vunpack.c.l.b16 %v1652
  %v1965 = vunpack.c.h.b16 %v1652
  %v1966 = vunpack.c.l.b16 %v1653
  %v1967 = vunpack.c.h.b16 %v1653
  %v1968 = vunpack.c.l.b16 %v1654
  %v1969 = vunpack.c.h.b16 %v1654
  %v1970 = vunpack.c.l.b16 %v1655
  %v1971 = vunpack.c.h.b16 %v1655
  %v1972 = vunpack.c.l.b16 %v1656
  %v1973 = vunpack.c.h.b16 %v1656
  %v1974 = vunpack.c.l.b16 %v1657
  %v1975 = vunpack.c.h.b16 %v1657
  %v1976 = vunpack.c.l.b16 %v1658
  %v1977 = vunpack.c.h.b16 %v1658
  %v1978 = vunpack.c.l.b16 %v1659
  %v1979 = vunpack.c.h.b16 %v1659
  %v1980 = vunpack.c.l.b16 %v1660
  %v1981 = vunpack.c.h.b16 %v1660
  %v1982 = vunpack.c.l.b16 %v1661
  %v1983 = vunpack.c.h.b16 %v1661
  %v1984 = vunpack.c.l.b16 %v1662
  %v1985 = vunpack.c.h.b16 %v1662
  %v1986 = vunpack.c.l.b16 %v1663
  %v1987 = vunpack.c.h.b16 %v1663
  %v1988 = vunpack.c.l.b16 %v1664
  %v1989 = vunpack.c.h.b16 %v1664
  %v1990 = vunpack.c.l.b16 %v1665
  %v1991 = vunpack.c.h.b16 %v1665
  %v1992 = vunpack.c.l.b16 %v1666
  %v1993 = vunpack.c.h.b16 %v1666
  %v1994 = vunpack.c.l.b16 %v1667
  %v1995 = vunpack.c.h.b16 %v1667
  %v1996 = vunpack.c.l.b16 %v1668
  %v1997 = vunpack.c.h.b16 %v1668
  %v1998 = vunpack.c.l.b16 %v1669
  %v1999 = vunpack.c.h.b16 %v1669
  %v2000 = vunpack.c.l.b16 %v1670
  %v2001 = vunpack.c.h.b16 %v1670
  %v2002 = vunpack.c.l.b16 %v1671
  %v2003 = vunpack.c.h.b16 %v1671
  %v2004 = vunpack.c.l.b16 %v1672
  %v2005 = vunpack.c.h.b16 %v1672
  %v2006 = vunpack.c.l.b16 %v1673
  %v2007 = vunpack.c.h.b16 %v1673
  %v2008 = vunpack.c.l.b16 %v1674
  %v2009 = vunpack.c.h.b16 %v1674
  %v2010 = vunpack.c.l.b16 %v1675
  %v2011 = vunpack.c.h.b16 %v1675
  %v2012 = vunpack.c.l.b16 %v1676
  %v2013 = vunpack.c.h.b16 %v1676
  %v2014 = vunpack.c.l.b16 %v1677
  %v2015 = vunpack.c.h.b16 %v1677
  %v2016 = vunpack.c.l.b16 %v1678
  %v2017 = vunpack.c.h.b16 %v1678
  %v2018 = vunpack.c.l.b16 %v1679
  %v2019 = vunpack.c.h.b16 %v1679
  %v2020 = vunpack.c.l.b16 %v1680
  %v2021 = vunpack.c.h.b16 %v1680
  %v2022 = vunpack.c.l.b16 %v1681
  %v2023 = vunpack.c.h.b16 %v1681
  %v2024 = vunpack.c.l.b16 %v1682
  %v2025 = vunpack.c.h.b16 %v1682
  %v2026 = vunpack.c.l.b16 %v1683
  %v2027 = vunpack.c.h.b16 %v1683
  %v2028 = vunpack.c.l.b16 %v1684
  %v2029 = vunpack.c.h.b16 %v1684
  %v2030 = vunpack.c.l.b16 %v1685
  %v2031 = vunpack.c.h.b16 %v1685
  %v2032 = vunpack.c.l.b16 %v1686
  %v2033 = vunpack.c.h.b16 %v1686
  %v2034 = vunpack.c.l.b16 %v1687
  %v2035 = vunpack.c.h.b16 %v1687
  %v2036 = vunpack.c.l.b16 %v1688
  %v2037 = vunpack.c.h.b16 %v1688
  %v2038 = vunpack.c.l.b16 %v1689
  %v2039 = vunpack.c.h.b16 %v1689
  %v2040 = vunpack.c.l.b16 %v1690
  %v2041 = vunpack.c.h.b16 %v1690
  %v2042 = vunpack.c.l.b16 %v1691
  %v2043 = vunpack.c.h.b16 %v1691
  %v2044 = vunpack.c.l.b16 %v1692
  %v2045 = vunpack.c.h.b16 %v1692
  %v2046 = vunpack.c.l.b16 %v1693
  %v2047 = vunpack.c.h.b16 %v1693
  %v2048 = vunpack.c.l.b16 %v1694
  %v2049 = vunpack.c.h.b16 %v1694
  %v2050 = vunpack.c.l.b16 %v1695
  %v2051 = vunpack.c.h.b16 %v1695
  %v2052 = vunpack.c.l.b16 %v1696
  %v2053 = vunpack.c.h.b16 %v1696
  %v2054 = vunpack.c.l.b16 %v1697
  %v2055 = vunpack.c.h.b16 %v1697
  %v2056 = vunpack.c.l.b16 %v1698
  %v2057 = vunpack.c.h.b16 %v1698
  %v2058 = vunpack.c.l.b16 %v1699
  %v2059 = vunpack.c.h.b16 %v1699
  %v2060 = vunpack.c.l.b16 %v1700
  %v2061 = vunpack.c.h.b16 %v1700
  %v2062 = vunpack.c.l.b16 %v1701
  %v2063 = vunpack.c.h.b16 %v1701
  %v2064 = vunpack.c.l.b16 %v1702
  %v2065 = vunpack.c.h.b16 %v1702
  %v2066 = vunpack.c.l.b16 %v1703
  %v2067 = vunpack.c.h.b16 %v1703
  %v2068 = vunpack.c.l.b16 %v1704
  %v2069 = vunpack.c.h.b16 %v1704
  %v2070 = vunpack.c.l.b16 %v1705
  %v2071 = vunpack.c.h.b16 %v1705
  %v2072 = vunpack.c.l.b16 %v1706
  %v2073 = vunpack.c.h.b16 %v1706
  %v2074 = vunpack.c.l.b16 %v1707
  %v2075 = vunpack.c.h.b16 %v1707
  %v2076 = vunpack.c.l.b16 %v1708
  %v2077 = vunpack.c.h.b16 %v1708
  %v2078 = vunpack.c.l.b16 %v1709
  %v2079 = vunpack.c.h.b16 %v1709
  %v2080 = vunpack.c.l.b16 %v1710
  %v2081 = vunpack.c.h.b16 %v1710
  %v2082 = vunpack.c.l.b16 %v1711
  %v2083 = vunpack.c.h.b16 %v1711
  %v2084 = vunpack.c.l.b16 %v1712
  %v2085 = vunpack.c.h.b16 %v1712
  %v2086 = vunpack.c.l.b16 %v1713
  %v2087 = vunpack.c.h.b16 %v1713
  %v2088 = vunpack.c.l.b16 %v1714
  %v2089 = vunpack.c.h.b16 %v1714
  %v2090 = vunpack.c.l.b16 %v1715
  %v2091 = vunpack.c.h.b16 %v1715
  %v2092 = vunpack.c.l.b16 %v1716
  %v2093 = vunpack.c.h.b16 %v1716
  %v2094 = vunpack.c.l.b16 %v1717
  %v2095 = vunpack.c.h.b16 %v1717
  %v2096 = vunpack.c.l.b16 %v1718
  %v2097 = vunpack.c.h.b16 %v1718
  %v2098 = vunpack.c.l.b16 %v1719
  %v2099 = vunpack.c.h.b16 %v1719
  %v2100 = vunpack.c.l.b16 %v1720
  %v2101 = vunpack.c.h.b16 %v1720
  %v2102 = vunpack.c.l.b16 %v1721
  %v2103 = vunpack.c.h.b16 %v1721
  %v2104 = vunpack.c.l.b16 %v1722
  %v2105 = vunpack.c.h.b16 %v1722
  %v2106 = vunpack.c.l.b16 %v1723
  %v2107 = vunpack.c.h.b16 %v1723
  %v2108 = vunpack.c.l.b16 %v1724
  %v2109 = vunpack.c.h.b16 %v1724
  %v2110 = vunpack.c.l.b16 %v1725
  %v2111 = vunpack.c.h.b16 %v1725
  %v2112 = vunpack.c.l.b16 %v1726
  %v2113 = vunpack.c.h.b16 %v1726
  %v2114 = vunpack.c.l.b16 %v1727
  %v2115 = vunpack.c.h.b16 %v1727
  %v2116 = vunpack.c.l.b16 %v1728
  %v2117 = vunpack.c.h.b16 %v1728
  %v2118 = vunpack.c.l.b16 %v1729
  %v2119 = vunpack.c.h.b16 %v1729
  %v2120 = vunpack.c.l.b16 %v1730
  %v2121 = vunpack.c.h.b16 %v1730
  %v2122 = vunpack.c.l.b16 %v1731
  %v2123 = vunpack.c.h.b16 %v1731
  %v2124 = vunpack.c.l.b16 %v1732
  %v2125 = vunpack.c.h.b16 %v1732
  %v2126 = vunpack.c.l.b16 %v1733
  %v2127 = vunpack.c.h.b16 %v1733
  %v2128 = vunpack.c.l.b16 %v1734
  %v2129 = vunpack.c.h.b16 %v1734
  %v2130 = vunpack.c.l.b16 %v1735
  %v2131 = vunpack.c.h.b16 %v1735
  %v2132 = vunpack.c.l.b16 %v1736
  %v2133 = vunpack.c.h.b16 %v1736
  %v2134 = vunpack.c.l.b16 %v1737
  %v2135 = vunpack.c.h.b16 %v1737
  %v2136 = vunpack.c.l.b16 %v1738
  %v2137 = vunpack.c.h.b16 %v1738
  %v2138 = vunpack.c.l.b16 %v1739
  %v2139 = vunpack.c.h.b16 %v1739
  %v2140 = vunpack.c.l.b16 %v1740
  %v2141 = vunpack.c.h.b16 %v1740
  %v2142 = vunpack.c.l.b16 %v1741
  %v2143 = vunpack.c.h.b16 %v1741
  %v2144 = vunpack.c.l.b16 %v1742
  %v2145 = vunpack.c.h.b16 %v1742
  %v2146 = vunpack.c.l.b16 %v1743
  %v2147 = vunpack.c.h.b16 %v1743
  %v2148 = vunpack.c.l.b16 %v1744
  %v2149 = vunpack.c.h.b16 %v1744
  %v2150 = vunpack.c.l.b16 %v1745
  %v2151 = vunpack.c.h.b16 %v1745
  %v2152 = vpack.c.b16 %v1900, %v1896
  %v2153 = vpack.c.b16 %v1901, %v1897
  %v2154 = vpack.c.b16 %v1902, %v1898
  %v2155 = vpack.c.b16 %v1903, %v1899
  %v2156 = vpack.c.b16 %v1908, %v1904
  %v2157 = vpack.c.b16 %v1909, %v1905
  %v2158 = vpack.c.b16 %v1910, %v1906
  %v2159 = vpack.c.b16 %v1911, %v1907
  %v2160 = vpack.c.b16 %v1916, %v1912
  %v2161 = vpack.c.b16 %v1917, %v1913
  %v2162 = vpack.c.b16 %v1918, %v1914
  %v2163 = vpack.c.b16 %v1919, %v1915
  %v2164 = vpack.c.b16 %v1924, %v1920
  %v2165 = vpack.c.b16 %v1925, %v1921
  %v2166 = vpack.c.b16 %v1926, %v1922
  %v2167 = vpack.c.b16 %v1927, %v1923
  %v2168 = vpack.c.b16 %v1932, %v1928
  %v2169 = vpack.c.b16 %v1933, %v1929
  %v2170 = vpack.c.b16 %v1934, %v1930
  %v2171 = vpack.c.b16 %v1935, %v1931
  %v2172 = vpack.c.b16 %v1940, %v1936
  %v2173 = vpack.c.b16 %v1941, %v1937
  %v2174 = vpack.c.b16 %v1942, %v1938
  %v2175 = vpack.c.b16 %v1943, %v1939
  %v2176 = vpack.c.b16 %v1948, %v1944
  %v2177 = vpack.c.b16 %v1949, %v1945
  %v2178 = vpack.c.b16 %v1950, %v1946
  %v2179 = vpack.c.b16 %v1951, %v1947
  %v2180 = vpack.c.b16 %v1956, %v1952
  %v2181 = vpack.c.b16 %v1957, %v1953
  %v2182 = vpack.c.b16 %v1958, %v1954
  %v2183 = vpack.c.b16 %v1959, %v1955
  %v2184 = vpack.c.b16 %v1964, %v1960
  %v2185 = vpack.c.b16 %v1965, %v1961
  %v2186 = vpack.c.b16 %v1966, %v1962
  %v2187 = vpack.c.b16 %v1967, %v1963
  %v2188 = vpack.c.b16 %v1972, %v1968
  %v2189 = vpack.c.b16 %v1973, %v1969
  %v2190 = vpack.c.b16 %v1974, %v1970
  %v2191 = vpack.c.b16 %v1975, %v1971
  %v2192 = vpack.c.b16 %v1980, %v1976
  %v2193 = vpack.c.b16 %v1981, %v1977
  %v2194 = vpack.c.b16 %v1982, %v1978
  %v2195 = vpack.c.b16 %v1983, %v1979
  %v2196 = vpack.c.b16 %v1988, %v1984
  %v2197 = vpack.c.b16 %v1989, %v1985
  %v2198 = vpack.c.b16 %v1990, %v1986
  %v2199 = vpack.c.b16 %v1991, %v1987
  %v2200 = vpack.c.b16 %v1996, %v1992
  %v2201 = vpack.c.b16 %v1997, %v1993
  %v2202 = vpack.c.b16 %v1998, %v1994
  %v2203 = vpack.c.b16 %v1999, %v1995
  %v2204 = vpack.c.b16 %v2004, %v2000
  %v2205 = vpack.c.b16 %v2005, %v2001
  %v2206 = vpack.c.b16 %v2006, %v2002
  %v2207 = vpack.c.b16 %v2007, %v2003
  %v2208 = vpack.c.b16 %v2012, %v2008
  %v2209 = vpack.c.b16 %v2013, %v2009
  %v2210 = vpack.c.b16 %v2014, %v2010
  %v2211 = vpack.c.b16 %v2015, %v2011
  %v2212 = vpack.c.b16 %v2020, %v2016
  %v2213 = vpack.c.b16 %v2021, %v2017
  %v2214 = vpack.c.b16 %v2022, %v2018
  %v2215 = vpack.c.b16 %v2023, %v2019
  %v2216 = vpack.c.b16 %v2028, %v2024
  %v2217 = vpack.c.b16 %v2029, %v2025
  %v2218 = vpack.c.b16 %v2030, %v2026
  %v2219 = vpack.c.b16 %v2031, %v2027
  %v2220 = vpack.c.b16 %v2036, %v2032
  %v2221 = vpack.c.b16 %v2037, %v2033
  %v2222 = vpack.c.b16 %v2038, %v2034
  %v2223 = vpack.c.b16 %v2039, %v2035
  %v2224 = vpack.c.b16 %v2044, %v2040
  %v2225 = vpack.c.b16 %v2045, %v2041
  %v2226 = vpack.c.b16 %v2046, %v2042
  %v2227 = vpack.c.b16 %v2047, %v2043
  %v2228 = vpack.c.b16 %v2052, %v2048
  %v2229 = vpack.c.b16 %v2053, %v2049
  %v2230 = vpack.c.b16 %v2054, %v2050
  %v2231 = vpack.c.b16 %v2055, %v2051
  %v2232 = vpack.c.b16 %v2060, %v2056
  %v2233 = vpack.c.b16 %v2061, %v2057
  %v2234 = vpack.c.b16 %v2062, %v2058
  %v2235 = vpack.c.b16 %v2063, %v2059
  %v2236 = vpack.c.b16 %v2068, %v2064
  %v2237 = vpack.c.b16 %v2069, %v2065
  %v2238 = vpack.c.b16 %v2070, %v2066
  %v2239 = vpack.c.b16 %v2071, %v2067
  %v2240 = vpack.c.b16 %v2076, %v2072
  %v2241 = vpack.c.b16 %v2077, %v2073
  %v2242 = vpack.c.b16 %v2078, %v2074
  %v2243 = vpack.c.b16 %v2079, %v2075
  %v2244 = vpack.c.b16 %v2084, %v2080
  %v2245 = vpack.c.b16 %v2085, %v2081
  %v2246 = vpack.c.b16 %v2086, %v2082
  %v2247 = vpack.c.b16 %v2087, %v2083
  %v2248 = vpack.c.b16 %v2092, %v2088
  %v2249 = vpack.c.b16 %v2093, %v2089
  %v2250 = vpack.c.b16 %v2094, %v2090
  %v2251 = vpack.c.b16 %v2095, %v2091
  %v2252 = vpack.c.b16 %v2100, %v2096
  %v2253 = vpack.c.b16 %v2101, %v2097
  %v2254 = vpack.c.b16 %v2102, %v2098
  %v2255 = vpack.c.b16 %v2103, %v2099
  %v2256 = vpack.c.b16 %v2108, %v2104
  %v2257 = vpack.c.b16 %v2109, %v2105
  %v2258 = vpack.c.b16 %v2110, %v2106
  %v2259 = vpack.c.b16 %v2111, %v2107
  %v2260 = vpack.c.b16 %v2116, %v2112
  %v2261 = vpack.c.b16 %v2117, %v2113
  %v2262 = vpack.c.b16 %v2118, %v2114
  %v2263 = vpack.c.b16 %v2119, %v2115
  %v2264 = vpack.c.b16 %v2124, %v2120
  %v2265 = vpack.c.b16 %v2125, %v2121
  %v2266 = vpack.c.b16 %v2126, %v2122
  %v2267 = vpack.c.b16 %v2127, %v2123
  %v2268 = vpack.c.b16 %v2132, %v2128
  %v2269 = vpack.c.b16 %v2133, %v2129
  %v2270 = vpack.c.b16 %v2134, %v2130
  %v2271 = vpack.c.b16 %v2135, %v2131
  %v2272 = vpack.c.b16 %v2140, %v2136
  %v2273 = vpack.c.b16 %v2141, %v2137
  %v2274 = vpack.c.b16 %v2142, %v2138
  %v2275 = vpack.c.b16 %v2143, %v2139
  %v2276 = vpack.c.b16 %v2148, %v2144
  %v2277 = vpack.c.b16 %v2149, %v2145
  %v2278 = vpack.c.b16 %v2150, %v2146
  %v2279 = vpack.c.b16 %v2151, %v2147
  %2408 = vmatprep.subr.bf16.mxu0 %v2153
  %2409 = vmatpush1.bf16.msra.mxu0 %v2152
  %2410 = vmatprep.subr.bf16.mxu0 %v2157
  %2411 = vmatpush1.bf16.msra.mxu0 %v2156
  %2412 = vmatprep.subr.bf16.mxu0 %v2161
  %2413 = vmatpush1.bf16.msra.mxu0 %v2160
  %2414 = vmatprep.subr.bf16.mxu0 %v2165
  %2415 = vmatpush1.bf16.msra.mxu0 %v2164
  %2416 = vmatprep.subr.bf16.mxu0 %v2169
  %2417 = vmatpush1.bf16.msra.mxu0 %v2168
  %2418 = vmatprep.subr.bf16.mxu0 %v2173
  %2419 = vmatpush1.bf16.msra.mxu0 %v2172
  %2420 = vmatprep.subr.bf16.mxu0 %v2177
  %2421 = vmatpush1.bf16.msra.mxu0 %v2176
  %2422 = vmatprep.subr.bf16.mxu0 %v2181
  %2423 = vmatpush1.bf16.msra.mxu0 %v2180
  %2424 = vmatprep.subr.bf16.mxu0 %v2185
  %2425 = vmatpush1.bf16.msra.mxu0 %v2184
  %2426 = vmatprep.subr.bf16.mxu0 %v2189
  %2427 = vmatpush1.bf16.msra.mxu0 %v2188
  %2428 = vmatprep.subr.bf16.mxu0 %v2193
  %2429 = vmatpush1.bf16.msra.mxu0 %v2192
  %2430 = vmatprep.subr.bf16.mxu0 %v2197
  %2431 = vmatpush1.bf16.msra.mxu0 %v2196
  %2432 = vmatprep.subr.bf16.mxu0 %v2201
  %2433 = vmatpush1.bf16.msra.mxu0 %v2200
  %2434 = vmatprep.subr.bf16.mxu0 %v2205
  %2435 = vmatpush1.bf16.msra.mxu0 %v2204
  %2436 = vmatprep.subr.bf16.mxu0 %v2209
  %2437 = vmatpush1.bf16.msra.mxu0 %v2208
  %2438 = vmatprep.subr.bf16.mxu0 %v2213
  %2439 = vmatpush1.bf16.msra.mxu0 %v2212
  %2440 = vmatprep.mubr.bf16.mxu0 %v1615
  %2441 = vmatmul.mubr.bf16.gmra.mrb[0].mxu0 %v1614
  %v2442 = vpop.f32.mrb[0].mxu0
  %v2443 = vadd.f32 %v1751, %v2442
  %v2444 = vpop.f32.mrb[0].mxu0
  %v2445 = vadd.f32 %v1755, %v2444
  %v2446 = vpop.f32.mrb[0].mxu0
  %v2447 = vadd.f32 %v1751, %v2446
  %v2448 = vpop.f32.mrb[0].mxu0
  %v2449 = vadd.f32 %v1755, %v2448
  %2450 = vdwg.mxu0
  %2451 = vmatprep.subr.bf16.mxu0 %v2217
  %2452 = vmatpush1.bf16.msra.mxu0 %v2216
  %2453 = vmatprep.subr.bf16.mxu0 %v2221
  %2454 = vmatpush1.bf16.msra.mxu0 %v2220
  %2455 = vmatprep.subr.bf16.mxu0 %v2225
  %2456 = vmatpush1.bf16.msra.mxu0 %v2224
  %2457 = vmatprep.subr.bf16.mxu0 %v2229
  %2458 = vmatpush1.bf16.msra.mxu0 %v2228
  %2459 = vmatprep.subr.bf16.mxu0 %v2233
  %2460 = vmatpush1.bf16.msra.mxu0 %v2232
  %2461 = vmatprep.subr.bf16.mxu0 %v2237
  %2462 = vmatpush1.bf16.msra.mxu0 %v2236
  %2463 = vmatprep.subr.bf16.mxu0 %v2241
  %2464 = vmatpush1.bf16.msra.mxu0 %v2240
  %2465 = vmatprep.subr.bf16.mxu0 %v2245
  %2466 = vmatpush1.bf16.msra.mxu0 %v2244
  %2467 = vmatprep.subr.bf16.mxu0 %v2249
  %2468 = vmatpush1.bf16.msra.mxu0 %v2248
  %2469 = vmatprep.subr.bf16.mxu0 %v2253
  %2470 = vmatpush1.bf16.msra.mxu0 %v2252
  %2471 = vmatprep.subr.bf16.mxu0 %v2257
  %2472 = vmatpush1.bf16.msra.mxu0 %v2256
  %2473 = vmatprep.subr.bf16.mxu0 %v2261
  %2474 = vmatpush1.bf16.msra.mxu0 %v2260
  %2475 = vmatprep.subr.bf16.mxu0 %v2265
  %2476 = vmatpush1.bf16.msra.mxu0 %v2264
  %2477 = vmatprep.subr.bf16.mxu0 %v2269
  %2478 = vmatpush1.bf16.msra.mxu0 %v2268
  %2479 = vmatprep.subr.bf16.mxu0 %v2273
  %2480 = vmatpush1.bf16.msra.mxu0 %v2272
  %2481 = vmatprep.subr.bf16.mxu0 %v2277
  %2482 = vmatpush1.bf16.msra.mxu0 %v2276
  %2483 = vmatprep.mubr.bf16.mxu0 %v1617
  %2484 = vmatmul.mubr.bf16.gmra.mrb[0].mxu0 %v1616
  %v2485 = vpop.f32.mrb[0].mxu0
  %v2486 = vadd.f32 %v2443, %v2485
  %v2487 = vpop.f32.mrb[0].mxu0
  %v2488 = vadd.f32 %v2445, %v2487
  %v2489 = vpop.f32.mrb[0].mxu0
  %v2490 = vadd.f32 %v2447, %v2489
  %v2491 = vpop.f32.mrb[0].mxu0
  %v2492 = vadd.f32 %v2449, %v2491
  %2493 = vdwg.mxu0
  %2494 = vmatprep.subr.bf16.mxu0 %v2155
  %2495 = vmatpush1.bf16.msra.mxu0 %v2154
  %2496 = vmatprep.subr.bf16.mxu0 %v2159
  %2497 = vmatpush1.bf16.msra.mxu0 %v2158
  %2498 = vmatprep.subr.bf16.mxu0 %v2163
  %2499 = vmatpush1.bf16.msra.mxu0 %v2162
  %2500 = vmatprep.subr.bf16.mxu0 %v2167
  %2501 = vmatpush1.bf16.msra.mxu0 %v2166
  %2502 = vmatprep.subr.bf16.mxu0 %v2171
  %2503 = vmatpush1.bf16.msra.mxu0 %v2170
  %2504 = vmatprep.subr.bf16.mxu0 %v2175
  %2505 = vmatpush1.bf16.msra.mxu0 %v2174
  %2506 = vmatprep.subr.bf16.mxu0 %v2179
  %2507 = vmatpush1.bf16.msra.mxu0 %v2178
  %2508 = vmatprep.subr.bf16.mxu0 %v2183
  %2509 = vmatpush1.bf16.msra.mxu0 %v2182
  %2510 = vmatprep.subr.bf16.mxu0 %v2187
  %2511 = vmatpush1.bf16.msra.mxu0 %v2186
  %2512 = vmatprep.subr.bf16.mxu0 %v2191
  %2513 = vmatpush1.bf16.msra.mxu0 %v2190
  %2514 = vmatprep.subr.bf16.mxu0 %v2195
  %2515 = vmatpush1.bf16.msra.mxu0 %v2194
  %2516 = vmatprep.subr.bf16.mxu0 %v2199
  %2517 = vmatpush1.bf16.msra.mxu0 %v2198
  %2518 = vmatprep.subr.bf16.mxu0 %v2203
  %2519 = vmatpush1.bf16.msra.mxu0 %v2202
  %2520 = vmatprep.subr.bf16.mxu0 %v2207
  %2521 = vmatpush1.bf16.msra.mxu0 %v2206
  %2522 = vmatprep.subr.bf16.mxu0 %v2211
  %2523 = vmatpush1.bf16.msra.mxu0 %v2210
  %2524 = vmatprep.subr.bf16.mxu0 %v2215
  %2525 = vmatpush1.bf16.msra.mxu0 %v2214
  %2526 = vmatprep.mubr.bf16.mxu0 %v1615
  %2527 = vmatmul.mubr.bf16.gmra.mrb[0].mxu0 %v1614
  %v2528 = vpop.f32.mrb[0].mxu0
  %v2529 = vadd.f32 %v1759, %v2528
  %v2530 = vpop.f32.mrb[0].mxu0
  %v2531 = vadd.f32 %v1763, %v2530
  %v2532 = vpop.f32.mrb[0].mxu0
  %v2533 = vadd.f32 %v1759, %v2532
  %v2534 = vpop.f32.mrb[0].mxu0
  %v2535 = vadd.f32 %v1763, %v2534
  %2536 = vdwg.mxu0
  %2537 = vmatprep.subr.bf16.mxu0 %v2219
  %2538 = vmatpush1.bf16.msra.mxu0 %v2218
  %2539 = vmatprep.subr.bf16.mxu0 %v2223
  %2540 = vmatpush1.bf16.msra.mxu0 %v2222
  %2541 = vmatprep.subr.bf16.mxu0 %v2227
  %2542 = vmatpush1.bf16.msra.mxu0 %v2226
  %2543 = vmatprep.subr.bf16.mxu0 %v2231
  %2544 = vmatpush1.bf16.msra.mxu0 %v2230
  %2545 = vmatprep.subr.bf16.mxu0 %v2235
  %2546 = vmatpush1.bf16.msra.mxu0 %v2234
  %2547 = vmatprep.subr.bf16.mxu0 %v2239
  %2548 = vmatpush1.bf16.msra.mxu0 %v2238
  %2549 = vmatprep.subr.bf16.mxu0 %v2243
  %2550 = vmatpush1.bf16.msra.mxu0 %v2242
  %2551 = vmatprep.subr.bf16.mxu0 %v2247
  %2552 = vmatpush1.bf16.msra.mxu0 %v2246
  %2553 = vmatprep.subr.bf16.mxu0 %v2251
  %2554 = vmatpush1.bf16.msra.mxu0 %v2250
  %2555 = vmatprep.subr.bf16.mxu0 %v2255
  %2556 = vmatpush1.bf16.msra.mxu0 %v2254
  %2557 = vmatprep.subr.bf16.mxu0 %v2259
  %2558 = vmatpush1.bf16.msra.mxu0 %v2258
  %2559 = vmatprep.subr.bf16.mxu0 %v2263
  %2560 = vmatpush1.bf16.msra.mxu0 %v2262
  %2561 = vmatprep.subr.bf16.mxu0 %v2267
  %2562 = vmatpush1.bf16.msra.mxu0 %v2266
  %2563 = vmatprep.subr.bf16.mxu0 %v2271
  %2564 = vmatpush1.bf16.msra.mxu0 %v2270
  %2565 = vmatprep.subr.bf16.mxu0 %v2275
  %2566 = vmatpush1.bf16.msra.mxu0 %v2274
  %2567 = vmatprep.subr.bf16.mxu0 %v2279
  %2568 = vmatpush1.bf16.msra.mxu0 %v2278
  %2569 = vmatprep.mubr.bf16.mxu0 %v1617
  %2570 = vmatmul.mubr.bf16.gmra.mrb[0].mxu0 %v1616
  %v2571 = vpop.f32.mrb[0].mxu0
  %v2572 = vadd.f32 %v2529, %v2571
  %v2573 = vpop.f32.mrb[0].mxu0
  %v2574 = vadd.f32 %v2531, %v2573
  %v2575 = vpop.f32.mrb[0].mxu0
  %v2576 = vadd.f32 %v2533, %v2575
  %v2577 = vpop.f32.mrb[0].mxu0
  %v2578 = vadd.f32 %v2535, %v2577
  %2579 = vdwg.mxu0
  %v2580 = vmax.f32 %v2486, 0.0
  %v2581 = vmax.f32 %v2488, 0.0
  %v2582 = vmax.f32 %v2572, 0.0
  %v2583 = vmax.f32 %v2574, 0.0
  %v2584 = vmax.f32 %v2490, 0.0
  %v2585 = vmax.f32 %v2492, 0.0
  %v2586 = vmax.f32 %v2576, 0.0
  %v2587 = vmax.f32 %v2578, 0.0
  %v2588 = vpack.c.bf16 %v2584, %v2580
  %v2589 = vpack.c.bf16 %v2585, %v2581
  %v2590 = vpack.c.bf16 %v2586, %v2582
  %v2591 = vpack.c.bf16 %v2587, %v2583
  %v2592 = vld [vmem:[%s5] sm:$0xff]
  %v2593 = vld [vmem:[%s5 + $0x8] sm:$0xff]
  %v2594 = vld [vmem:[%s5 + $0x10] sm:$0xff]
  %v2595 = vld [vmem:[%s5 + $0x18] sm:$0xff]
  %v2596 = vld [vmem:[%s5 + $0x20] sm:$0xff]
  %v2597 = vld [vmem:[%s5 + $0x28] sm:$0xff]
  %v2598 = vld [vmem:[%s5 + $0x30] sm:$0xff]
  %v2599 = vld [vmem:[%s5 + $0x38] sm:$0xff]
  %v2600 = vld [vmem:[%s5 + $0x40] sm:$0xff]
  %v2601 = vld [vmem:[%s5 + $0x48] sm:$0xff]
  %v2602 = vld [vmem:[%s5 + $0x50] sm:$0xff]
  %v2603 = vld [vmem:[%s5 + $0x58] sm:$0xff]
  %v2604 = vld [vmem:[%s5 + $0x60] sm:$0xff]
  %v2605 = vld [vmem:[%s5 + $0x68] sm:$0xff]
  %v2606 = vld [vmem:[%s5 + $0x70] sm:$0xff]
  %v2607 = vld [vmem:[%s5 + $0x78] sm:$0xff]
  %v2608 = vld [vmem:[%s5 + $0x80] sm:$0xff]
  %v2609 = vld [vmem:[%s5 + $0x88] sm:$0xff]
  %v2610 = vld [vmem:[%s5 + $0x90] sm:$0xff]
  %v2611 = vld [vmem:[%s5 + $0x98] sm:$0xff]
  %v2612 = vld [vmem:[%s5 + $0xa0] sm:$0xff]
  %v2613 = vld [vmem:[%s5 + $0xa8] sm:$0xff]
  %v2614 = vld [vmem:[%s5 + $0xb0] sm:$0xff]
  %v2615 = vld [vmem:[%s5 + $0xb8] sm:$0xff]
  %v2616 = vld [vmem:[%s5 + $0xc0] sm:$0xff]
  %v2617 = vld [vmem:[%s5 + $0xc8] sm:$0xff]
  %v2618 = vld [vmem:[%s5 + $0xd0] sm:$0xff]
  %v2619 = vld [vmem:[%s5 + $0xd8] sm:$0xff]
  %v2620 = vld [vmem:[%s5 + $0xe0] sm:$0xff]
  %v2621 = vld [vmem:[%s5 + $0xe8] sm:$0xff]
  %v2622 = vld [vmem:[%s5 + $0xf0] sm:$0xff]
  %v2623 = vld [vmem:[%s5 + $0xf8] sm:$0xff]
  %v2624 = vld [vmem:[%s5 + $0x100] sm:$0xff]
  %v2625 = vld [vmem:[%s5 + $0x108] sm:$0xff]
  %v2626 = vld [vmem:[%s5 + $0x110] sm:$0xff]
  %v2627 = vld [vmem:[%s5 + $0x118] sm:$0xff]
  %v2628 = vld [vmem:[%s5 + $0x120] sm:$0xff]
  %v2629 = vld [vmem:[%s5 + $0x128] sm:$0xff]
  %v2630 = vld [vmem:[%s5 + $0x130] sm:$0xff]
  %v2631 = vld [vmem:[%s5 + $0x138] sm:$0xff]
  %v2632 = vld [vmem:[%s5 + $0x140] sm:$0xff]
  %v2633 = vld [vmem:[%s5 + $0x148] sm:$0xff]
  %v2634 = vld [vmem:[%s5 + $0x150] sm:$0xff]
  %v2635 = vld [vmem:[%s5 + $0x158] sm:$0xff]
  %v2636 = vld [vmem:[%s5 + $0x160] sm:$0xff]
  %v2637 = vld [vmem:[%s5 + $0x168] sm:$0xff]
  %v2638 = vld [vmem:[%s5 + $0x170] sm:$0xff]
  %v2639 = vld [vmem:[%s5 + $0x178] sm:$0xff]
  %v2640 = vld [vmem:[%s5 + $0x180] sm:$0xff]
  %v2641 = vld [vmem:[%s5 + $0x188] sm:$0xff]
  %v2642 = vld [vmem:[%s5 + $0x190] sm:$0xff]
  %v2643 = vld [vmem:[%s5 + $0x198] sm:$0xff]
  %v2644 = vld [vmem:[%s5 + $0x1a0] sm:$0xff]
  %v2645 = vld [vmem:[%s5 + $0x1a8] sm:$0xff]
  %v2646 = vld [vmem:[%s5 + $0x1b0] sm:$0xff]
  %v2647 = vld [vmem:[%s5 + $0x1b8] sm:$0xff]
  %v2648 = vld [vmem:[%s5 + $0x1c0] sm:$0xff]
  %v2649 = vld [vmem:[%s5 + $0x1c8] sm:$0xff]
  %v2650 = vld [vmem:[%s5 + $0x1d0] sm:$0xff]
  %v2651 = vld [vmem:[%s5 + $0x1d8] sm:$0xff]
  %v2652 = vld [vmem:[%s5 + $0x1e0] sm:$0xff]
  %v2653 = vld [vmem:[%s5 + $0x1e8] sm:$0xff]
  %v2654 = vld [vmem:[%s5 + $0x1f0] sm:$0xff]
  %v2655 = vld [vmem:[%s5 + $0x1f8] sm:$0xff]
  %v2656 = vld [vmem:[%s5 + $0x200] sm:$0xff]
  %v2657 = vld [vmem:[%s5 + $0x208] sm:$0xff]
  %v2658 = vld [vmem:[%s5 + $0x210] sm:$0xff]
  %v2659 = vld [vmem:[%s5 + $0x218] sm:$0xff]
  %v2660 = vld [vmem:[%s5 + $0x220] sm:$0xff]
  %v2661 = vld [vmem:[%s5 + $0x228] sm:$0xff]
  %v2662 = vld [vmem:[%s5 + $0x230] sm:$0xff]
  %v2663 = vld [vmem:[%s5 + $0x238] sm:$0xff]
  %v2664 = vld [vmem:[%s5 + $0x240] sm:$0xff]
  %v2665 = vld [vmem:[%s5 + $0x248] sm:$0xff]
  %v2666 = vld [vmem:[%s5 + $0x250] sm:$0xff]
  %v2667 = vld [vmem:[%s5 + $0x258] sm:$0xff]
  %v2668 = vld [vmem:[%s5 + $0x260] sm:$0xff]
  %v2669 = vld [vmem:[%s5 + $0x268] sm:$0xff]
  %v2670 = vld [vmem:[%s5 + $0x270] sm:$0xff]
  %v2671 = vld [vmem:[%s5 + $0x278] sm:$0xff]
  %v2672 = vld [vmem:[%s5 + $0x280] sm:$0xff]
  %v2673 = vld [vmem:[%s5 + $0x288] sm:$0xff]
  %v2674 = vld [vmem:[%s5 + $0x290] sm:$0xff]
  %v2675 = vld [vmem:[%s5 + $0x298] sm:$0xff]
  %v2676 = vld [vmem:[%s5 + $0x2a0] sm:$0xff]
  %v2677 = vld [vmem:[%s5 + $0x2a8] sm:$0xff]
  %v2678 = vld [vmem:[%s5 + $0x2b0] sm:$0xff]
  %v2679 = vld [vmem:[%s5 + $0x2b8] sm:$0xff]
  %v2680 = vld [vmem:[%s5 + $0x2c0] sm:$0xff]
  %v2681 = vld [vmem:[%s5 + $0x2c8] sm:$0xff]
  %v2682 = vld [vmem:[%s5 + $0x2d0] sm:$0xff]
  %v2683 = vld [vmem:[%s5 + $0x2d8] sm:$0xff]
  %v2684 = vld [vmem:[%s5 + $0x2e0] sm:$0xff]
  %v2685 = vld [vmem:[%s5 + $0x2e8] sm:$0xff]
  %v2686 = vld [vmem:[%s5 + $0x2f0] sm:$0xff]
  %v2687 = vld [vmem:[%s5 + $0x2f8] sm:$0xff]
  %v2688 = vld [vmem:[%s5 + $0x300] sm:$0xff]
  %v2689 = vld [vmem:[%s5 + $0x308] sm:$0xff]
  %v2690 = vld [vmem:[%s5 + $0x310] sm:$0xff]
  %v2691 = vld [vmem:[%s5 + $0x318] sm:$0xff]
  %v2692 = vld [vmem:[%s5 + $0x320] sm:$0xff]
  %v2693 = vld [vmem:[%s5 + $0x328] sm:$0xff]
  %v2694 = vld [vmem:[%s5 + $0x330] sm:$0xff]
  %v2695 = vld [vmem:[%s5 + $0x338] sm:$0xff]
  %v2696 = vld [vmem:[%s5 + $0x340] sm:$0xff]
  %v2697 = vld [vmem:[%s5 + $0x348] sm:$0xff]
  %v2698 = vld [vmem:[%s5 + $0x350] sm:$0xff]
  %v2699 = vld [vmem:[%s5 + $0x358] sm:$0xff]
  %v2700 = vld [vmem:[%s5 + $0x360] sm:$0xff]
  %v2701 = vld [vmem:[%s5 + $0x368] sm:$0xff]
  %v2702 = vld [vmem:[%s5 + $0x370] sm:$0xff]
  %v2703 = vld [vmem:[%s5 + $0x378] sm:$0xff]
  %v2704 = vld [vmem:[%s5 + $0x380] sm:$0xff]
  %v2705 = vld [vmem:[%s5 + $0x388] sm:$0xff]
  %v2706 = vld [vmem:[%s5 + $0x390] sm:$0xff]
  %v2707 = vld [vmem:[%s5 + $0x398] sm:$0xff]
  %v2708 = vld [vmem:[%s5 + $0x3a0] sm:$0xff]
  %v2709 = vld [vmem:[%s5 + $0x3a8] sm:$0xff]
  %v2710 = vld [vmem:[%s5 + $0x3b0] sm:$0xff]
  %v2711 = vld [vmem:[%s5 + $0x3b8] sm:$0xff]
  %v2712 = vld [vmem:[%s5 + $0x3c0] sm:$0xff]
  %v2713 = vld [vmem:[%s5 + $0x3c8] sm:$0xff]
  %v2714 = vld [vmem:[%s5 + $0x3d0] sm:$0xff]
  %v2715 = vld [vmem:[%s5 + $0x3d8] sm:$0xff]
  %v2716 = vld [vmem:[%s5 + $0x3e0] sm:$0xff]
  %v2717 = vld [vmem:[%s5 + $0x3e8] sm:$0xff]
  %v2718 = vld [vmem:[%s5 + $0x3f0] sm:$0xff]
  %v2719 = vld [vmem:[%s5 + $0x3f8] sm:$0xff]
  %v2720 = vld [vmem:[%s6] sm:$0xf]
  %v2722 = vlaneseq
  %v2723 = vshrl.u32 %v2722, 7
  %v2724 = vsub.s32 0, %v2723
  %v2725 = vrot.slane %v2720, %v2724
  %v2726 = vlaneseq
  %v2727 = vshrl.u32 %v2726, 7
  %v2728 = vsub.s32 1, %v2727
  %v2729 = vrot.slane %v2720, %v2728
  %v2730 = vlaneseq
  %v2731 = vshrl.u32 %v2730, 7
  %v2732 = vsub.s32 2, %v2731
  %v2733 = vrot.slane %v2720, %v2732
  %v2734 = vlaneseq
  %v2735 = vshrl.u32 %v2734, 7
  %v2736 = vsub.s32 3, %v2735
  %v2737 = vrot.slane %v2720, %v2736
  %v2870 = vunpack.c.l.b16 %v2592
  %v2871 = vunpack.c.h.b16 %v2592
  %v2872 = vunpack.c.l.b16 %v2593
  %v2873 = vunpack.c.h.b16 %v2593
  %v2874 = vunpack.c.l.b16 %v2594
  %v2875 = vunpack.c.h.b16 %v2594
  %v2876 = vunpack.c.l.b16 %v2595
  %v2877 = vunpack.c.h.b16 %v2595
  %v2878 = vunpack.c.l.b16 %v2596
  %v2879 = vunpack.c.h.b16 %v2596
  %v2880 = vunpack.c.l.b16 %v2597
  %v2881 = vunpack.c.h.b16 %v2597
  %v2882 = vunpack.c.l.b16 %v2598
  %v2883 = vunpack.c.h.b16 %v2598
  %v2884 = vunpack.c.l.b16 %v2599
  %v2885 = vunpack.c.h.b16 %v2599
  %v2886 = vunpack.c.l.b16 %v2600
  %v2887 = vunpack.c.h.b16 %v2600
  %v2888 = vunpack.c.l.b16 %v2601
  %v2889 = vunpack.c.h.b16 %v2601
  %v2890 = vunpack.c.l.b16 %v2602
  %v2891 = vunpack.c.h.b16 %v2602
  %v2892 = vunpack.c.l.b16 %v2603
  %v2893 = vunpack.c.h.b16 %v2603
  %v2894 = vunpack.c.l.b16 %v2604
  %v2895 = vunpack.c.h.b16 %v2604
  %v2896 = vunpack.c.l.b16 %v2605
  %v2897 = vunpack.c.h.b16 %v2605
  %v2898 = vunpack.c.l.b16 %v2606
  %v2899 = vunpack.c.h.b16 %v2606
  %v2900 = vunpack.c.l.b16 %v2607
  %v2901 = vunpack.c.h.b16 %v2607
  %v2902 = vunpack.c.l.b16 %v2608
  %v2903 = vunpack.c.h.b16 %v2608
  %v2904 = vunpack.c.l.b16 %v2609
  %v2905 = vunpack.c.h.b16 %v2609
  %v2906 = vunpack.c.l.b16 %v2610
  %v2907 = vunpack.c.h.b16 %v2610
  %v2908 = vunpack.c.l.b16 %v2611
  %v2909 = vunpack.c.h.b16 %v2611
  %v2910 = vunpack.c.l.b16 %v2612
  %v2911 = vunpack.c.h.b16 %v2612
  %v2912 = vunpack.c.l.b16 %v2613
  %v2913 = vunpack.c.h.b16 %v2613
  %v2914 = vunpack.c.l.b16 %v2614
  %v2915 = vunpack.c.h.b16 %v2614
  %v2916 = vunpack.c.l.b16 %v2615
  %v2917 = vunpack.c.h.b16 %v2615
  %v2918 = vunpack.c.l.b16 %v2616
  %v2919 = vunpack.c.h.b16 %v2616
  %v2920 = vunpack.c.l.b16 %v2617
  %v2921 = vunpack.c.h.b16 %v2617
  %v2922 = vunpack.c.l.b16 %v2618
  %v2923 = vunpack.c.h.b16 %v2618
  %v2924 = vunpack.c.l.b16 %v2619
  %v2925 = vunpack.c.h.b16 %v2619
  %v2926 = vunpack.c.l.b16 %v2620
  %v2927 = vunpack.c.h.b16 %v2620
  %v2928 = vunpack.c.l.b16 %v2621
  %v2929 = vunpack.c.h.b16 %v2621
  %v2930 = vunpack.c.l.b16 %v2622
  %v2931 = vunpack.c.h.b16 %v2622
  %v2932 = vunpack.c.l.b16 %v2623
  %v2933 = vunpack.c.h.b16 %v2623
  %v2934 = vunpack.c.l.b16 %v2624
  %v2935 = vunpack.c.h.b16 %v2624
  %v2936 = vunpack.c.l.b16 %v2625
  %v2937 = vunpack.c.h.b16 %v2625
  %v2938 = vunpack.c.l.b16 %v2626
  %v2939 = vunpack.c.h.b16 %v2626
  %v2940 = vunpack.c.l.b16 %v2627
  %v2941 = vunpack.c.h.b16 %v2627
  %v2942 = vunpack.c.l.b16 %v2628
  %v2943 = vunpack.c.h.b16 %v2628
  %v2944 = vunpack.c.l.b16 %v2629
  %v2945 = vunpack.c.h.b16 %v2629
  %v2946 = vunpack.c.l.b16 %v2630
  %v2947 = vunpack.c.h.b16 %v2630
  %v2948 = vunpack.c.l.b16 %v2631
  %v2949 = vunpack.c.h.b16 %v2631
  %v2950 = vunpack.c.l.b16 %v2632
  %v2951 = vunpack.c.h.b16 %v2632
  %v2952 = vunpack.c.l.b16 %v2633
  %v2953 = vunpack.c.h.b16 %v2633
  %v2954 = vunpack.c.l.b16 %v2634
  %v2955 = vunpack.c.h.b16 %v2634
  %v2956 = vunpack.c.l.b16 %v2635
  %v2957 = vunpack.c.h.b16 %v2635
  %v2958 = vunpack.c.l.b16 %v2636
  %v2959 = vunpack.c.h.b16 %v2636
  %v2960 = vunpack.c.l.b16 %v2637
  %v2961 = vunpack.c.h.b16 %v2637
  %v2962 = vunpack.c.l.b16 %v2638
  %v2963 = vunpack.c.h.b16 %v2638
  %v2964 = vunpack.c.l.b16 %v2639
  %v2965 = vunpack.c.h.b16 %v2639
  %v2966 = vunpack.c.l.b16 %v2640
  %v2967 = vunpack.c.h.b16 %v2640
  %v2968 = vunpack.c.l.b16 %v2641
  %v2969 = vunpack.c.h.b16 %v2641
  %v2970 = vunpack.c.l.b16 %v2642
  %v2971 = vunpack.c.h.b16 %v2642
  %v2972 = vunpack.c.l.b16 %v2643
  %v2973 = vunpack.c.h.b16 %v2643
  %v2974 = vunpack.c.l.b16 %v2644
  %v2975 = vunpack.c.h.b16 %v2644
  %v2976 = vunpack.c.l.b16 %v2645
  %v2977 = vunpack.c.h.b16 %v2645
  %v2978 = vunpack.c.l.b16 %v2646
  %v2979 = vunpack.c.h.b16 %v2646
  %v2980 = vunpack.c.l.b16 %v2647
  %v2981 = vunpack.c.h.b16 %v2647
  %v2982 = vunpack.c.l.b16 %v2648
  %v2983 = vunpack.c.h.b16 %v2648
  %v2984 = vunpack.c.l.b16 %v2649
  %v2985 = vunpack.c.h.b16 %v2649
  %v2986 = vunpack.c.l.b16 %v2650
  %v2987 = vunpack.c.h.b16 %v2650
  %v2988 = vunpack.c.l.b16 %v2651
  %v2989 = vunpack.c.h.b16 %v2651
  %v2990 = vunpack.c.l.b16 %v2652
  %v2991 = vunpack.c.h.b16 %v2652
  %v2992 = vunpack.c.l.b16 %v2653
  %v2993 = vunpack.c.h.b16 %v2653
  %v2994 = vunpack.c.l.b16 %v2654
  %v2995 = vunpack.c.h.b16 %v2654
  %v2996 = vunpack.c.l.b16 %v2655
  %v2997 = vunpack.c.h.b16 %v2655
  %v2998 = vunpack.c.l.b16 %v2656
  %v2999 = vunpack.c.h.b16 %v2656
  %v3000 = vunpack.c.l.b16 %v2657
  %v3001 = vunpack.c.h.b16 %v2657
  %v3002 = vunpack.c.l.b16 %v2658
  %v3003 = vunpack.c.h.b16 %v2658
  %v3004 = vunpack.c.l.b16 %v2659
  %v3005 = vunpack.c.h.b16 %v2659
  %v3006 = vunpack.c.l.b16 %v2660
  %v3007 = vunpack.c.h.b16 %v2660
  %v3008 = vunpack.c.l.b16 %v2661
  %v3009 = vunpack.c.h.b16 %v2661
  %v3010 = vunpack.c.l.b16 %v2662
  %v3011 = vunpack.c.h.b16 %v2662
  %v3012 = vunpack.c.l.b16 %v2663
  %v3013 = vunpack.c.h.b16 %v2663
  %v3014 = vunpack.c.l.b16 %v2664
  %v3015 = vunpack.c.h.b16 %v2664
  %v3016 = vunpack.c.l.b16 %v2665
  %v3017 = vunpack.c.h.b16 %v2665
  %v3018 = vunpack.c.l.b16 %v2666
  %v3019 = vunpack.c.h.b16 %v2666
  %v3020 = vunpack.c.l.b16 %v2667
  %v3021 = vunpack.c.h.b16 %v2667
  %v3022 = vunpack.c.l.b16 %v2668
  %v3023 = vunpack.c.h.b16 %v2668
  %v3024 = vunpack.c.l.b16 %v2669
  %v3025 = vunpack.c.h.b16 %v2669
  %v3026 = vunpack.c.l.b16 %v2670
  %v3027 = vunpack.c.h.b16 %v2670
  %v3028 = vunpack.c.l.b16 %v2671
  %v3029 = vunpack.c.h.b16 %v2671
  %v3030 = vunpack.c.l.b16 %v2672
  %v3031 = vunpack.c.h.b16 %v2672
  %v3032 = vunpack.c.l.b16 %v2673
  %v3033 = vunpack.c.h.b16 %v2673
  %v3034 = vunpack.c.l.b16 %v2674
  %v3035 = vunpack.c.h.b16 %v2674
  %v3036 = vunpack.c.l.b16 %v2675
  %v3037 = vunpack.c.h.b16 %v2675
  %v3038 = vunpack.c.l.b16 %v2676
  %v3039 = vunpack.c.h.b16 %v2676
  %v3040 = vunpack.c.l.b16 %v2677
  %v3041 = vunpack.c.h.b16 %v2677
  %v3042 = vunpack.c.l.b16 %v2678
  %v3043 = vunpack.c.h.b16 %v2678
  %v3044 = vunpack.c.l.b16 %v2679
  %v3045 = vunpack.c.h.b16 %v2679
  %v3046 = vunpack.c.l.b16 %v2680
  %v3047 = vunpack.c.h.b16 %v2680
  %v3048 = vunpack.c.l.b16 %v2681
  %v3049 = vunpack.c.h.b16 %v2681
  %v3050 = vunpack.c.l.b16 %v2682
  %v3051 = vunpack.c.h.b16 %v2682
  %v3052 = vunpack.c.l.b16 %v2683
  %v3053 = vunpack.c.h.b16 %v2683
  %v3054 = vunpack.c.l.b16 %v2684
  %v3055 = vunpack.c.h.b16 %v2684
  %v3056 = vunpack.c.l.b16 %v2685
  %v3057 = vunpack.c.h.b16 %v2685
  %v3058 = vunpack.c.l.b16 %v2686
  %v3059 = vunpack.c.h.b16 %v2686
  %v3060 = vunpack.c.l.b16 %v2687
  %v3061 = vunpack.c.h.b16 %v2687
  %v3062 = vunpack.c.l.b16 %v2688
  %v3063 = vunpack.c.h.b16 %v2688
  %v3064 = vunpack.c.l.b16 %v2689
  %v3065 = vunpack.c.h.b16 %v2689
  %v3066 = vunpack.c.l.b16 %v2690
  %v3067 = vunpack.c.h.b16 %v2690
  %v3068 = vunpack.c.l.b16 %v2691
  %v3069 = vunpack.c.h.b16 %v2691
  %v3070 = vunpack.c.l.b16 %v2692
  %v3071 = vunpack.c.h.b16 %v2692
  %v3072 = vunpack.c.l.b16 %v2693
  %v3073 = vunpack.c.h.b16 %v2693
  %v3074 = vunpack.c.l.b16 %v2694
  %v3075 = vunpack.c.h.b16 %v2694
  %v3076 = vunpack.c.l.b16 %v2695
  %v3077 = vunpack.c.h.b16 %v2695
  %v3078 = vunpack.c.l.b16 %v2696
  %v3079 = vunpack.c.h.b16 %v2696
  %v3080 = vunpack.c.l.b16 %v2697
  %v3081 = vunpack.c.h.b16 %v2697
  %v3082 = vunpack.c.l.b16 %v2698
  %v3083 = vunpack.c.h.b16 %v2698
  %v3084 = vunpack.c.l.b16 %v2699
  %v3085 = vunpack.c.h.b16 %v2699
  %v3086 = vunpack.c.l.b16 %v2700
  %v3087 = vunpack.c.h.b16 %v2700
  %v3088 = vunpack.c.l.b16 %v2701
  %v3089 = vunpack.c.h.b16 %v2701
  %v3090 = vunpack.c.l.b16 %v2702
  %v3091 = vunpack.c.h.b16 %v2702
  %v3092 = vunpack.c.l.b16 %v2703
  %v3093 = vunpack.c.h.b16 %v2703
  %v3094 = vunpack.c.l.b16 %v2704
  %v3095 = vunpack.c.h.b16 %v2704
  %v3096 = vunpack.c.l.b16 %v2705
  %v3097 = vunpack.c.h.b16 %v2705
  %v3098 = vunpack.c.l.b16 %v2706
  %v3099 = vunpack.c.h.b16 %v2706
  %v3100 = vunpack.c.l.b16 %v2707
  %v3101 = vunpack.c.h.b16 %v2707
  %v3102 = vunpack.c.l.b16 %v2708
  %v3103 = vunpack.c.h.b16 %v2708
  %v3104 = vunpack.c.l.b16 %v2709
  %v3105 = vunpack.c.h.b16 %v2709
  %v3106 = vunpack.c.l.b16 %v2710
  %v3107 = vunpack.c.h.b16 %v2710
  %v3108 = vunpack.c.l.b16 %v2711
  %v3109 = vunpack.c.h.b16 %v2711
  %v3110 = vunpack.c.l.b16 %v2712
  %v3111 = vunpack.c.h.b16 %v2712
  %v3112 = vunpack.c.l.b16 %v2713
  %v3113 = vunpack.c.h.b16 %v2713
  %v3114 = vunpack.c.l.b16 %v2714
  %v3115 = vunpack.c.h.b16 %v2714
  %v3116 = vunpack.c.l.b16 %v2715
  %v3117 = vunpack.c.h.b16 %v2715
  %v3118 = vunpack.c.l.b16 %v2716
  %v3119 = vunpack.c.h.b16 %v2716
  %v3120 = vunpack.c.l.b16 %v2717
  %v3121 = vunpack.c.h.b16 %v2717
  %v3122 = vunpack.c.l.b16 %v2718
  %v3123 = vunpack.c.h.b16 %v2718
  %v3124 = vunpack.c.l.b16 %v2719
  %v3125 = vunpack.c.h.b16 %v2719
  %v3126 = vpack.c.b16 %v2874, %v2870
  %v3127 = vpack.c.b16 %v2875, %v2871
  %v3128 = vpack.c.b16 %v2876, %v2872
  %v3129 = vpack.c.b16 %v2877, %v2873
  %v3130 = vpack.c.b16 %v2882, %v2878
  %v3131 = vpack.c.b16 %v2883, %v2879
  %v3132 = vpack.c.b16 %v2884, %v2880
  %v3133 = vpack.c.b16 %v2885, %v2881
  %v3134 = vpack.c.b16 %v2890, %v2886
  %v3135 = vpack.c.b16 %v2891, %v2887
  %v3136 = vpack.c.b16 %v2892, %v2888
  %v3137 = vpack.c.b16 %v2893, %v2889
  %v3138 = vpack.c.b16 %v2898, %v2894
  %v3139 = vpack.c.b16 %v2899, %v2895
  %v3140 = vpack.c.b16 %v2900, %v2896
  %v3141 = vpack.c.b16 %v2901, %v2897
  %v3142 = vpack.c.b16 %v2906, %v2902
  %v3143 = vpack.c.b16 %v2907, %v2903
  %v3144 = vpack.c.b16 %v2908, %v2904
  %v3145 = vpack.c.b16 %v2909, %v2905
  %v3146 = vpack.c.b16 %v2914, %v2910
  %v3147 = vpack.c.b16 %v2915, %v2911
  %v3148 = vpack.c.b16 %v2916, %v2912
  %v3149 = vpack.c.b16 %v2917, %v2913
  %v3150 = vpack.c.b16 %v2922, %v2918
  %v3151 = vpack.c.b16 %v2923, %v2919
  %v3152 = vpack.c.b16 %v2924, %v2920
  %v3153 = vpack.c.b16 %v2925, %v2921
  %v3154 = vpack.c.b16 %v2930, %v2926
  %v3155 = vpack.c.b16 %v2931, %v2927
  %v3156 = vpack.c.b16 %v2932, %v2928
  %v3157 = vpack.c.b16 %v2933, %v2929
  %v3158 = vpack.c.b16 %v2938, %v2934
  %v3159 = vpack.c.b16 %v2939, %v2935
  %v3160 = vpack.c.b16 %v2940, %v2936
  %v3161 = vpack.c.b16 %v2941, %v2937
  %v3162 = vpack.c.b16 %v2946, %v2942
  %v3163 = vpack.c.b16 %v2947, %v2943
  %v3164 = vpack.c.b16 %v2948, %v2944
  %v3165 = vpack.c.b16 %v2949, %v2945
  %v3166 = vpack.c.b16 %v2954, %v2950
  %v3167 = vpack.c.b16 %v2955, %v2951
  %v3168 = vpack.c.b16 %v2956, %v2952
  %v3169 = vpack.c.b16 %v2957, %v2953
  %v3170 = vpack.c.b16 %v2962, %v2958
  %v3171 = vpack.c.b16 %v2963, %v2959
  %v3172 = vpack.c.b16 %v2964, %v2960
  %v3173 = vpack.c.b16 %v2965, %v2961
  %v3174 = vpack.c.b16 %v2970, %v2966
  %v3175 = vpack.c.b16 %v2971, %v2967
  %v3176 = vpack.c.b16 %v2972, %v2968
  %v3177 = vpack.c.b16 %v2973, %v2969
  %v3178 = vpack.c.b16 %v2978, %v2974
  %v3179 = vpack.c.b16 %v2979, %v2975
  %v3180 = vpack.c.b16 %v2980, %v2976
  %v3181 = vpack.c.b16 %v2981, %v2977
  %v3182 = vpack.c.b16 %v2986, %v2982
  %v3183 = vpack.c.b16 %v2987, %v2983
  %v3184 = vpack.c.b16 %v2988, %v2984
  %v3185 = vpack.c.b16 %v2989, %v2985
  %v3186 = vpack.c.b16 %v2994, %v2990
  %v3187 = vpack.c.b16 %v2995, %v2991
  %v3188 = vpack.c.b16 %v2996, %v2992
  %v3189 = vpack.c.b16 %v2997, %v2993
  %v3190 = vpack.c.b16 %v3002, %v2998
  %v3191 = vpack.c.b16 %v3003, %v2999
  %v3192 = vpack.c.b16 %v3004, %v3000
  %v3193 = vpack.c.b16 %v3005, %v3001
  %v3194 = vpack.c.b16 %v3010, %v3006
  %v3195 = vpack.c.b16 %v3011, %v3007
  %v3196 = vpack.c.b16 %v3012, %v3008
  %v3197 = vpack.c.b16 %v3013, %v3009
  %v3198 = vpack.c.b16 %v3018, %v3014
  %v3199 = vpack.c.b16 %v3019, %v3015
  %v3200 = vpack.c.b16 %v3020, %v3016
  %v3201 = vpack.c.b16 %v3021, %v3017
  %v3202 = vpack.c.b16 %v3026, %v3022
  %v3203 = vpack.c.b16 %v3027, %v3023
  %v3204 = vpack.c.b16 %v3028, %v3024
  %v3205 = vpack.c.b16 %v3029, %v3025
  %v3206 = vpack.c.b16 %v3034, %v3030
  %v3207 = vpack.c.b16 %v3035, %v3031
  %v3208 = vpack.c.b16 %v3036, %v3032
  %v3209 = vpack.c.b16 %v3037, %v3033
  %v3210 = vpack.c.b16 %v3042, %v3038
  %v3211 = vpack.c.b16 %v3043, %v3039
  %v3212 = vpack.c.b16 %v3044, %v3040
  %v3213 = vpack.c.b16 %v3045, %v3041
  %v3214 = vpack.c.b16 %v3050, %v3046
  %v3215 = vpack.c.b16 %v3051, %v3047
  %v3216 = vpack.c.b16 %v3052, %v3048
  %v3217 = vpack.c.b16 %v3053, %v3049
  %v3218 = vpack.c.b16 %v3058, %v3054
  %v3219 = vpack.c.b16 %v3059, %v3055
  %v3220 = vpack.c.b16 %v3060, %v3056
  %v3221 = vpack.c.b16 %v3061, %v3057
  %v3222 = vpack.c.b16 %v3066, %v3062
  %v3223 = vpack.c.b16 %v3067, %v3063
  %v3224 = vpack.c.b16 %v3068, %v3064
  %v3225 = vpack.c.b16 %v3069, %v3065
  %v3226 = vpack.c.b16 %v3074, %v3070
  %v3227 = vpack.c.b16 %v3075, %v3071
  %v3228 = vpack.c.b16 %v3076, %v3072
  %v3229 = vpack.c.b16 %v3077, %v3073
  %v3230 = vpack.c.b16 %v3082, %v3078
  %v3231 = vpack.c.b16 %v3083, %v3079
  %v3232 = vpack.c.b16 %v3084, %v3080
  %v3233 = vpack.c.b16 %v3085, %v3081
  %v3234 = vpack.c.b16 %v3090, %v3086
  %v3235 = vpack.c.b16 %v3091, %v3087
  %v3236 = vpack.c.b16 %v3092, %v3088
  %v3237 = vpack.c.b16 %v3093, %v3089
  %v3238 = vpack.c.b16 %v3098, %v3094
  %v3239 = vpack.c.b16 %v3099, %v3095
  %v3240 = vpack.c.b16 %v3100, %v3096
  %v3241 = vpack.c.b16 %v3101, %v3097
  %v3242 = vpack.c.b16 %v3106, %v3102
  %v3243 = vpack.c.b16 %v3107, %v3103
  %v3244 = vpack.c.b16 %v3108, %v3104
  %v3245 = vpack.c.b16 %v3109, %v3105
  %v3246 = vpack.c.b16 %v3114, %v3110
  %v3247 = vpack.c.b16 %v3115, %v3111
  %v3248 = vpack.c.b16 %v3116, %v3112
  %v3249 = vpack.c.b16 %v3117, %v3113
  %v3250 = vpack.c.b16 %v3122, %v3118
  %v3251 = vpack.c.b16 %v3123, %v3119
  %v3252 = vpack.c.b16 %v3124, %v3120
  %v3253 = vpack.c.b16 %v3125, %v3121
  %3382 = vmatprep.subr.bf16.mxu0 %v3127
  %3383 = vmatpush1.bf16.msra.mxu0 %v3126
  %3384 = vmatprep.subr.bf16.mxu0 %v3131
  %3385 = vmatpush1.bf16.msra.mxu0 %v3130
  %3386 = vmatprep.subr.bf16.mxu0 %v3135
  %3387 = vmatpush1.bf16.msra.mxu0 %v3134
  %3388 = vmatprep.subr.bf16.mxu0 %v3139
  %3389 = vmatpush1.bf16.msra.mxu0 %v3138
  %3390 = vmatprep.subr.bf16.mxu0 %v3143
  %3391 = vmatpush1.bf16.msra.mxu0 %v3142
  %3392 = vmatprep.subr.bf16.mxu0 %v3147
  %3393 = vmatpush1.bf16.msra.mxu0 %v3146
  %3394 = vmatprep.subr.bf16.mxu0 %v3151
  %3395 = vmatpush1.bf16.msra.mxu0 %v3150
  %3396 = vmatprep.subr.bf16.mxu0 %v3155
  %3397 = vmatpush1.bf16.msra.mxu0 %v3154
  %3398 = vmatprep.subr.bf16.mxu0 %v3159
  %3399 = vmatpush1.bf16.msra.mxu0 %v3158
  %3400 = vmatprep.subr.bf16.mxu0 %v3163
  %3401 = vmatpush1.bf16.msra.mxu0 %v3162
  %3402 = vmatprep.subr.bf16.mxu0 %v3167
  %3403 = vmatpush1.bf16.msra.mxu0 %v3166
  %3404 = vmatprep.subr.bf16.mxu0 %v3171
  %3405 = vmatpush1.bf16.msra.mxu0 %v3170
  %3406 = vmatprep.subr.bf16.mxu0 %v3175
  %3407 = vmatpush1.bf16.msra.mxu0 %v3174
  %3408 = vmatprep.subr.bf16.mxu0 %v3179
  %3409 = vmatpush1.bf16.msra.mxu0 %v3178
  %3410 = vmatprep.subr.bf16.mxu0 %v3183
  %3411 = vmatpush1.bf16.msra.mxu0 %v3182
  %3412 = vmatprep.subr.bf16.mxu0 %v3187
  %3413 = vmatpush1.bf16.msra.mxu0 %v3186
  %3414 = vmatprep.mubr.bf16.mxu0 %v2589
  %3415 = vmatmul.mubr.bf16.gmra.mrb[0].mxu0 %v2588
  %v3416 = vpop.f32.mrb[0].mxu0
  %v3417 = vadd.f32 %v2725, %v3416
  %v3418 = vpop.f32.mrb[0].mxu0
  %v3419 = vadd.f32 %v2729, %v3418
  %v3420 = vpop.f32.mrb[0].mxu0
  %v3421 = vadd.f32 %v2725, %v3420
  %v3422 = vpop.f32.mrb[0].mxu0
  %v3423 = vadd.f32 %v2729, %v3422
  %3424 = vdwg.mxu0
  %3425 = vmatprep.subr.bf16.mxu0 %v3191
  %3426 = vmatpush1.bf16.msra.mxu0 %v3190
  %3427 = vmatprep.subr.bf16.mxu0 %v3195
  %3428 = vmatpush1.bf16.msra.mxu0 %v3194
  %3429 = vmatprep.subr.bf16.mxu0 %v3199
  %3430 = vmatpush1.bf16.msra.mxu0 %v3198
  %3431 = vmatprep.subr.bf16.mxu0 %v3203
  %3432 = vmatpush1.bf16.msra.mxu0 %v3202
  %3433 = vmatprep.subr.bf16.mxu0 %v3207
  %3434 = vmatpush1.bf16.msra.mxu0 %v3206
  %3435 = vmatprep.subr.bf16.mxu0 %v3211
  %3436 = vmatpush1.bf16.msra.mxu0 %v3210
  %3437 = vmatprep.subr.bf16.mxu0 %v3215
  %3438 = vmatpush1.bf16.msra.mxu0 %v3214
  %3439 = vmatprep.subr.bf16.mxu0 %v3219
  %3440 = vmatpush1.bf16.msra.mxu0 %v3218
  %3441 = vmatprep.subr.bf16.mxu0 %v3223
  %3442 = vmatpush1.bf16.msra.mxu0 %v3222
  %3443 = vmatprep.subr.bf16.mxu0 %v3227
  %3444 = vmatpush1.bf16.msra.mxu0 %v3226
  %3445 = vmatprep.subr.bf16.mxu0 %v3231
  %3446 = vmatpush1.bf16.msra.mxu0 %v3230
  %3447 = vmatprep.subr.bf16.mxu0 %v3235
  %3448 = vmatpush1.bf16.msra.mxu0 %v3234
  %3449 = vmatprep.subr.bf16.mxu0 %v3239
  %3450 = vmatpush1.bf16.msra.mxu0 %v3238
  %3451 = vmatprep.subr.bf16.mxu0 %v3243
  %3452 = vmatpush1.bf16.msra.mxu0 %v3242
  %3453 = vmatprep.subr.bf16.mxu0 %v3247
  %3454 = vmatpush1.bf16.msra.mxu0 %v3246
  %3455 = vmatprep.subr.bf16.mxu0 %v3251
  %3456 = vmatpush1.bf16.msra.mxu0 %v3250
  %3457 = vmatprep.mubr.bf16.mxu0 %v2591
  %3458 = vmatmul.mubr.bf16.gmra.mrb[0].mxu0 %v2590
  %v3459 = vpop.f32.mrb[0].mxu0
  %v3460 = vadd.f32 %v3417, %v3459
  %v3461 = vpop.f32.mrb[0].mxu0
  %v3462 = vadd.f32 %v3419, %v3461
  %v3463 = vpop.f32.mrb[0].mxu0
  %v3464 = vadd.f32 %v3421, %v3463
  %v3465 = vpop.f32.mrb[0].mxu0
  %v3466 = vadd.f32 %v3423, %v3465
  %3467 = vdwg.mxu0
  %3468 = vmatprep.subr.bf16.mxu0 %v3129
  %3469 = vmatpush1.bf16.msra.mxu0 %v3128
  %3470 = vmatprep.subr.bf16.mxu0 %v3133
  %3471 = vmatpush1.bf16.msra.mxu0 %v3132
  %3472 = vmatprep.subr.bf16.mxu0 %v3137
  %3473 = vmatpush1.bf16.msra.mxu0 %v3136
  %3474 = vmatprep.subr.bf16.mxu0 %v3141
  %3475 = vmatpush1.bf16.msra.mxu0 %v3140
  %3476 = vmatprep.subr.bf16.mxu0 %v3145
  %3477 = vmatpush1.bf16.msra.mxu0 %v3144
  %3478 = vmatprep.subr.bf16.mxu0 %v3149
  %3479 = vmatpush1.bf16.msra.mxu0 %v3148
  %3480 = vmatprep.subr.bf16.mxu0 %v3153
  %3481 = vmatpush1.bf16.msra.mxu0 %v3152
  %3482 = vmatprep.subr.bf16.mxu0 %v3157
  %3483 = vmatpush1.bf16.msra.mxu0 %v3156
  %3484 = vmatprep.subr.bf16.mxu0 %v3161
  %3485 = vmatpush1.bf16.msra.mxu0 %v3160
  %3486 = vmatprep.subr.bf16.mxu0 %v3165
  %3487 = vmatpush1.bf16.msra.mxu0 %v3164
  %3488 = vmatprep.subr.bf16.mxu0 %v3169
  %3489 = vmatpush1.bf16.msra.mxu0 %v3168
  %3490 = vmatprep.subr.bf16.mxu0 %v3173
  %3491 = vmatpush1.bf16.msra.mxu0 %v3172
  %3492 = vmatprep.subr.bf16.mxu0 %v3177
  %3493 = vmatpush1.bf16.msra.mxu0 %v3176
  %3494 = vmatprep.subr.bf16.mxu0 %v3181
  %3495 = vmatpush1.bf16.msra.mxu0 %v3180
  %3496 = vmatprep.subr.bf16.mxu0 %v3185
  %3497 = vmatpush1.bf16.msra.mxu0 %v3184
  %3498 = vmatprep.subr.bf16.mxu0 %v3189
  %3499 = vmatpush1.bf16.msra.mxu0 %v3188
  %3500 = vmatprep.mubr.bf16.mxu0 %v2589
  %3501 = vmatmul.mubr.bf16.gmra.mrb[0].mxu0 %v2588
  %v3502 = vpop.f32.mrb[0].mxu0
  %v3503 = vadd.f32 %v2733, %v3502
  %v3504 = vpop.f32.mrb[0].mxu0
  %v3505 = vadd.f32 %v2737, %v3504
  %v3506 = vpop.f32.mrb[0].mxu0
  %v3507 = vadd.f32 %v2733, %v3506
  %v3508 = vpop.f32.mrb[0].mxu0
  %v3509 = vadd.f32 %v2737, %v3508
  %3510 = vdwg.mxu0
  %3511 = vmatprep.subr.bf16.mxu0 %v3193
  %3512 = vmatpush1.bf16.msra.mxu0 %v3192
  %3513 = vmatprep.subr.bf16.mxu0 %v3197
  %3514 = vmatpush1.bf16.msra.mxu0 %v3196
  %3515 = vmatprep.subr.bf16.mxu0 %v3201
  %3516 = vmatpush1.bf16.msra.mxu0 %v3200
  %3517 = vmatprep.subr.bf16.mxu0 %v3205
  %3518 = vmatpush1.bf16.msra.mxu0 %v3204
  %3519 = vmatprep.subr.bf16.mxu0 %v3209
  %3520 = vmatpush1.bf16.msra.mxu0 %v3208
  %3521 = vmatprep.subr.bf16.mxu0 %v3213
  %3522 = vmatpush1.bf16.msra.mxu0 %v3212
  %3523 = vmatprep.subr.bf16.mxu0 %v3217
  %3524 = vmatpush1.bf16.msra.mxu0 %v3216
  %3525 = vmatprep.subr.bf16.mxu0 %v3221
  %3526 = vmatpush1.bf16.msra.mxu0 %v3220
  %3527 = vmatprep.subr.bf16.mxu0 %v3225
  %3528 = vmatpush1.bf16.msra.mxu0 %v3224
  %3529 = vmatprep.subr.bf16.mxu0 %v3229
  %3530 = vmatpush1.bf16.msra.mxu0 %v3228
  %3531 = vmatprep.subr.bf16.mxu0 %v3233
  %3532 = vmatpush1.bf16.msra.mxu0 %v3232
  %3533 = vmatprep.subr.bf16.mxu0 %v3237
  %3534 = vmatpush1.bf16.msra.mxu0 %v3236
  %3535 = vmatprep.subr.bf16.mxu0 %v3241
  %3536 = vmatpush1.bf16.msra.mxu0 %v3240
  %3537 = vmatprep.subr.bf16.mxu0 %v3245
  %3538 = vmatpush1.bf16.msra.mxu0 %v3244
  %3539 = vmatprep.subr.bf16.mxu0 %v3249
  %3540 = vmatpush1.bf16.msra.mxu0 %v3248
  %3541 = vmatprep.subr.bf16.mxu0 %v3253
  %3542 = vmatpush1.bf16.msra.mxu0 %v3252
  %3543 = vmatprep.mubr.bf16.mxu0 %v2591
  %3544 = vmatmul.mubr.bf16.gmra.mrb[0].mxu0 %v2590
  %v3545 = vpop.f32.mrb[0].mxu0
  %v3546 = vadd.f32 %v3503, %v3545
  %v3547 = vpop.f32.mrb[0].mxu0
  %v3548 = vadd.f32 %v3505, %v3547
  %v3549 = vpop.f32.mrb[0].mxu0
  %v3550 = vadd.f32 %v3507, %v3549
  %v3551 = vpop.f32.mrb[0].mxu0
  %v3552 = vadd.f32 %v3509, %v3551
  %3553 = vdwg.mxu0
  %v3554 = vmax.f32 %v3460, 0.0
  %v3555 = vmax.f32 %v3462, 0.0
  %v3556 = vmax.f32 %v3546, 0.0
  %v3557 = vmax.f32 %v3548, 0.0
  %v3558 = vmax.f32 %v3464, 0.0
  %v3559 = vmax.f32 %v3466, 0.0
  %v3560 = vmax.f32 %v3550, 0.0
  %v3561 = vmax.f32 %v3552, 0.0
  %v3562 = vpack.c.bf16 %v3558, %v3554
  %v3563 = vpack.c.bf16 %v3559, %v3555
  %v3564 = vpack.c.bf16 %v3560, %v3556
  %v3565 = vpack.c.bf16 %v3561, %v3557
  %v3566 = vld [vmem:[%s7] sm:$0xff]
  %v3567 = vld [vmem:[%s7 + $0x8] sm:$0xff]
  %v3568 = vld [vmem:[%s7 + $0x10] sm:$0xff]
  %v3569 = vld [vmem:[%s7 + $0x18] sm:$0xff]
  %v3570 = vld [vmem:[%s7 + $0x20] sm:$0xff]
  %v3571 = vld [vmem:[%s7 + $0x28] sm:$0xff]
  %v3572 = vld [vmem:[%s7 + $0x30] sm:$0xff]
  %v3573 = vld [vmem:[%s7 + $0x38] sm:$0xff]
  %v3574 = vld [vmem:[%s7 + $0x40] sm:$0xff]
  %v3575 = vld [vmem:[%s7 + $0x48] sm:$0xff]
  %v3576 = vld [vmem:[%s7 + $0x50] sm:$0xff]
  %v3577 = vld [vmem:[%s7 + $0x58] sm:$0xff]
  %v3578 = vld [vmem:[%s7 + $0x60] sm:$0xff]
  %v3579 = vld [vmem:[%s7 + $0x68] sm:$0xff]
  %v3580 = vld [vmem:[%s7 + $0x70] sm:$0xff]
  %v3581 = vld [vmem:[%s7 + $0x78] sm:$0xff]
  %v3582 = vld [vmem:[%s7 + $0x80] sm:$0xff]
  %v3583 = vld [vmem:[%s7 + $0x88] sm:$0xff]
  %v3584 = vld [vmem:[%s7 + $0x90] sm:$0xff]
  %v3585 = vld [vmem:[%s7 + $0x98] sm:$0xff]
  %v3586 = vld [vmem:[%s7 + $0xa0] sm:$0xff]
  %v3587 = vld [vmem:[%s7 + $0xa8] sm:$0xff]
  %v3588 = vld [vmem:[%s7 + $0xb0] sm:$0xff]
  %v3589 = vld [vmem:[%s7 + $0xb8] sm:$0xff]
  %v3590 = vld [vmem:[%s7 + $0xc0] sm:$0xff]
  %v3591 = vld [vmem:[%s7 + $0xc8] sm:$0xff]
  %v3592 = vld [vmem:[%s7 + $0xd0] sm:$0xff]
  %v3593 = vld [vmem:[%s7 + $0xd8] sm:$0xff]
  %v3594 = vld [vmem:[%s7 + $0xe0] sm:$0xff]
  %v3595 = vld [vmem:[%s7 + $0xe8] sm:$0xff]
  %v3596 = vld [vmem:[%s7 + $0xf0] sm:$0xff]
  %v3597 = vld [vmem:[%s7 + $0xf8] sm:$0xff]
  %v3598 = vld [vmem:[%s7 + $0x100] sm:$0xff]
  %v3599 = vld [vmem:[%s7 + $0x108] sm:$0xff]
  %v3600 = vld [vmem:[%s7 + $0x110] sm:$0xff]
  %v3601 = vld [vmem:[%s7 + $0x118] sm:$0xff]
  %v3602 = vld [vmem:[%s7 + $0x120] sm:$0xff]
  %v3603 = vld [vmem:[%s7 + $0x128] sm:$0xff]
  %v3604 = vld [vmem:[%s7 + $0x130] sm:$0xff]
  %v3605 = vld [vmem:[%s7 + $0x138] sm:$0xff]
  %v3606 = vld [vmem:[%s7 + $0x140] sm:$0xff]
  %v3607 = vld [vmem:[%s7 + $0x148] sm:$0xff]
  %v3608 = vld [vmem:[%s7 + $0x150] sm:$0xff]
  %v3609 = vld [vmem:[%s7 + $0x158] sm:$0xff]
  %v3610 = vld [vmem:[%s7 + $0x160] sm:$0xff]
  %v3611 = vld [vmem:[%s7 + $0x168] sm:$0xff]
  %v3612 = vld [vmem:[%s7 + $0x170] sm:$0xff]
  %v3613 = vld [vmem:[%s7 + $0x178] sm:$0xff]
  %v3614 = vld [vmem:[%s7 + $0x180] sm:$0xff]
  %v3615 = vld [vmem:[%s7 + $0x188] sm:$0xff]
  %v3616 = vld [vmem:[%s7 + $0x190] sm:$0xff]
  %v3617 = vld [vmem:[%s7 + $0x198] sm:$0xff]
  %v3618 = vld [vmem:[%s7 + $0x1a0] sm:$0xff]
  %v3619 = vld [vmem:[%s7 + $0x1a8] sm:$0xff]
  %v3620 = vld [vmem:[%s7 + $0x1b0] sm:$0xff]
  %v3621 = vld [vmem:[%s7 + $0x1b8] sm:$0xff]
  %v3622 = vld [vmem:[%s7 + $0x1c0] sm:$0xff]
  %v3623 = vld [vmem:[%s7 + $0x1c8] sm:$0xff]
  %v3624 = vld [vmem:[%s7 + $0x1d0] sm:$0xff]
  %v3625 = vld [vmem:[%s7 + $0x1d8] sm:$0xff]
  %v3626 = vld [vmem:[%s7 + $0x1e0] sm:$0xff]
  %v3627 = vld [vmem:[%s7 + $0x1e8] sm:$0xff]
  %v3628 = vld [vmem:[%s7 + $0x1f0] sm:$0xff]
  %v3629 = vld [vmem:[%s7 + $0x1f8] sm:$0xff]
  %v3630 = vld [vmem:[%s7 + $0x200] sm:$0xff]
  %v3631 = vld [vmem:[%s7 + $0x208] sm:$0xff]
  %v3632 = vld [vmem:[%s7 + $0x210] sm:$0xff]
  %v3633 = vld [vmem:[%s7 + $0x218] sm:$0xff]
  %v3634 = vld [vmem:[%s7 + $0x220] sm:$0xff]
  %v3635 = vld [vmem:[%s7 + $0x228] sm:$0xff]
  %v3636 = vld [vmem:[%s7 + $0x230] sm:$0xff]
  %v3637 = vld [vmem:[%s7 + $0x238] sm:$0xff]
  %v3638 = vld [vmem:[%s7 + $0x240] sm:$0xff]
  %v3639 = vld [vmem:[%s7 + $0x248] sm:$0xff]
  %v3640 = vld [vmem:[%s7 + $0x250] sm:$0xff]
  %v3641 = vld [vmem:[%s7 + $0x258] sm:$0xff]
  %v3642 = vld [vmem:[%s7 + $0x260] sm:$0xff]
  %v3643 = vld [vmem:[%s7 + $0x268] sm:$0xff]
  %v3644 = vld [vmem:[%s7 + $0x270] sm:$0xff]
  %v3645 = vld [vmem:[%s7 + $0x278] sm:$0xff]
  %v3646 = vld [vmem:[%s7 + $0x280] sm:$0xff]
  %v3647 = vld [vmem:[%s7 + $0x288] sm:$0xff]
  %v3648 = vld [vmem:[%s7 + $0x290] sm:$0xff]
  %v3649 = vld [vmem:[%s7 + $0x298] sm:$0xff]
  %v3650 = vld [vmem:[%s7 + $0x2a0] sm:$0xff]
  %v3651 = vld [vmem:[%s7 + $0x2a8] sm:$0xff]
  %v3652 = vld [vmem:[%s7 + $0x2b0] sm:$0xff]
  %v3653 = vld [vmem:[%s7 + $0x2b8] sm:$0xff]
  %v3654 = vld [vmem:[%s7 + $0x2c0] sm:$0xff]
  %v3655 = vld [vmem:[%s7 + $0x2c8] sm:$0xff]
  %v3656 = vld [vmem:[%s7 + $0x2d0] sm:$0xff]
  %v3657 = vld [vmem:[%s7 + $0x2d8] sm:$0xff]
  %v3658 = vld [vmem:[%s7 + $0x2e0] sm:$0xff]
  %v3659 = vld [vmem:[%s7 + $0x2e8] sm:$0xff]
  %v3660 = vld [vmem:[%s7 + $0x2f0] sm:$0xff]
  %v3661 = vld [vmem:[%s7 + $0x2f8] sm:$0xff]
  %v3662 = vld [vmem:[%s7 + $0x300] sm:$0xff]
  %v3663 = vld [vmem:[%s7 + $0x308] sm:$0xff]
  %v3664 = vld [vmem:[%s7 + $0x310] sm:$0xff]
  %v3665 = vld [vmem:[%s7 + $0x318] sm:$0xff]
  %v3666 = vld [vmem:[%s7 + $0x320] sm:$0xff]
  %v3667 = vld [vmem:[%s7 + $0x328] sm:$0xff]
  %v3668 = vld [vmem:[%s7 + $0x330] sm:$0xff]
  %v3669 = vld [vmem:[%s7 + $0x338] sm:$0xff]
  %v3670 = vld [vmem:[%s7 + $0x340] sm:$0xff]
  %v3671 = vld [vmem:[%s7 + $0x348] sm:$0xff]
  %v3672 = vld [vmem:[%s7 + $0x350] sm:$0xff]
  %v3673 = vld [vmem:[%s7 + $0x358] sm:$0xff]
  %v3674 = vld [vmem:[%s7 + $0x360] sm:$0xff]
  %v3675 = vld [vmem:[%s7 + $0x368] sm:$0xff]
  %v3676 = vld [vmem:[%s7 + $0x370] sm:$0xff]
  %v3677 = vld [vmem:[%s7 + $0x378] sm:$0xff]
  %v3678 = vld [vmem:[%s7 + $0x380] sm:$0xff]
  %v3679 = vld [vmem:[%s7 + $0x388] sm:$0xff]
  %v3680 = vld [vmem:[%s7 + $0x390] sm:$0xff]
  %v3681 = vld [vmem:[%s7 + $0x398] sm:$0xff]
  %v3682 = vld [vmem:[%s7 + $0x3a0] sm:$0xff]
  %v3683 = vld [vmem:[%s7 + $0x3a8] sm:$0xff]
  %v3684 = vld [vmem:[%s7 + $0x3b0] sm:$0xff]
  %v3685 = vld [vmem:[%s7 + $0x3b8] sm:$0xff]
  %v3686 = vld [vmem:[%s7 + $0x3c0] sm:$0xff]
  %v3687 = vld [vmem:[%s7 + $0x3c8] sm:$0xff]
  %v3688 = vld [vmem:[%s7 + $0x3d0] sm:$0xff]
  %v3689 = vld [vmem:[%s7 + $0x3d8] sm:$0xff]
  %v3690 = vld [vmem:[%s7 + $0x3e0] sm:$0xff]
  %v3691 = vld [vmem:[%s7 + $0x3e8] sm:$0xff]
  %v3692 = vld [vmem:[%s7 + $0x3f0] sm:$0xff]
  %v3693 = vld [vmem:[%s7 + $0x3f8] sm:$0xff]
  %v3694 = vld [vmem:[%s8] sm:$0xf]
  %v3696 = vlaneseq
  %v3697 = vshrl.u32 %v3696, 7
  %v3698 = vsub.s32 0, %v3697
  %v3699 = vrot.slane %v3694, %v3698
  %v3700 = vlaneseq
  %v3701 = vshrl.u32 %v3700, 7
  %v3702 = vsub.s32 1, %v3701
  %v3703 = vrot.slane %v3694, %v3702
  %v3704 = vlaneseq
  %v3705 = vshrl.u32 %v3704, 7
  %v3706 = vsub.s32 2, %v3705
  %v3707 = vrot.slane %v3694, %v3706
  %v3708 = vlaneseq
  %v3709 = vshrl.u32 %v3708, 7
  %v3710 = vsub.s32 3, %v3709
  %v3711 = vrot.slane %v3694, %v3710
  %v3844 = vunpack.c.l.b16 %v3566
  %v3845 = vunpack.c.h.b16 %v3566
  %v3846 = vunpack.c.l.b16 %v3567
  %v3847 = vunpack.c.h.b16 %v3567
  %v3848 = vunpack.c.l.b16 %v3568
  %v3849 = vunpack.c.h.b16 %v3568
  %v3850 = vunpack.c.l.b16 %v3569
  %v3851 = vunpack.c.h.b16 %v3569
  %v3852 = vunpack.c.l.b16 %v3570
  %v3853 = vunpack.c.h.b16 %v3570
  %v3854 = vunpack.c.l.b16 %v3571
  %v3855 = vunpack.c.h.b16 %v3571
  %v3856 = vunpack.c.l.b16 %v3572
  %v3857 = vunpack.c.h.b16 %v3572
  %v3858 = vunpack.c.l.b16 %v3573
  %v3859 = vunpack.c.h.b16 %v3573
  %v3860 = vunpack.c.l.b16 %v3574
  %v3861 = vunpack.c.h.b16 %v3574
  %v3862 = vunpack.c.l.b16 %v3575
  %v3863 = vunpack.c.h.b16 %v3575
  %v3864 = vunpack.c.l.b16 %v3576
  %v3865 = vunpack.c.h.b16 %v3576
  %v3866 = vunpack.c.l.b16 %v3577
  %v3867 = vunpack.c.h.b16 %v3577
  %v3868 = vunpack.c.l.b16 %v3578
  %v3869 = vunpack.c.h.b16 %v3578
  %v3870 = vunpack.c.l.b16 %v3579
  %v3871 = vunpack.c.h.b16 %v3579
  %v3872 = vunpack.c.l.b16 %v3580
  %v3873 = vunpack.c.h.b16 %v3580
  %v3874 = vunpack.c.l.b16 %v3581
  %v3875 = vunpack.c.h.b16 %v3581
  %v3876 = vunpack.c.l.b16 %v3582
  %v3877 = vunpack.c.h.b16 %v3582
  %v3878 = vunpack.c.l.b16 %v3583
  %v3879 = vunpack.c.h.b16 %v3583
  %v3880 = vunpack.c.l.b16 %v3584
  %v3881 = vunpack.c.h.b16 %v3584
  %v3882 = vunpack.c.l.b16 %v3585
  %v3883 = vunpack.c.h.b16 %v3585
  %v3884 = vunpack.c.l.b16 %v3586
  %v3885 = vunpack.c.h.b16 %v3586
  %v3886 = vunpack.c.l.b16 %v3587
  %v3887 = vunpack.c.h.b16 %v3587
  %v3888 = vunpack.c.l.b16 %v3588
  %v3889 = vunpack.c.h.b16 %v3588
  %v3890 = vunpack.c.l.b16 %v3589
  %v3891 = vunpack.c.h.b16 %v3589
  %v3892 = vunpack.c.l.b16 %v3590
  %v3893 = vunpack.c.h.b16 %v3590
  %v3894 = vunpack.c.l.b16 %v3591
  %v3895 = vunpack.c.h.b16 %v3591
  %v3896 = vunpack.c.l.b16 %v3592
  %v3897 = vunpack.c.h.b16 %v3592
  %v3898 = vunpack.c.l.b16 %v3593
  %v3899 = vunpack.c.h.b16 %v3593
  %v3900 = vunpack.c.l.b16 %v3594
  %v3901 = vunpack.c.h.b16 %v3594
  %v3902 = vunpack.c.l.b16 %v3595
  %v3903 = vunpack.c.h.b16 %v3595
  %v3904 = vunpack.c.l.b16 %v3596
  %v3905 = vunpack.c.h.b16 %v3596
  %v3906 = vunpack.c.l.b16 %v3597
  %v3907 = vunpack.c.h.b16 %v3597
  %v3908 = vunpack.c.l.b16 %v3598
  %v3909 = vunpack.c.h.b16 %v3598
  %v3910 = vunpack.c.l.b16 %v3599
  %v3911 = vunpack.c.h.b16 %v3599
  %v3912 = vunpack.c.l.b16 %v3600
  %v3913 = vunpack.c.h.b16 %v3600
  %v3914 = vunpack.c.l.b16 %v3601
  %v3915 = vunpack.c.h.b16 %v3601
  %v3916 = vunpack.c.l.b16 %v3602
  %v3917 = vunpack.c.h.b16 %v3602
  %v3918 = vunpack.c.l.b16 %v3603
  %v3919 = vunpack.c.h.b16 %v3603
  %v3920 = vunpack.c.l.b16 %v3604
  %v3921 = vunpack.c.h.b16 %v3604
  %v3922 = vunpack.c.l.b16 %v3605
  %v3923 = vunpack.c.h.b16 %v3605
  %v3924 = vunpack.c.l.b16 %v3606
  %v3925 = vunpack.c.h.b16 %v3606
  %v3926 = vunpack.c.l.b16 %v3607
  %v3927 = vunpack.c.h.b16 %v3607
  %v3928 = vunpack.c.l.b16 %v3608
  %v3929 = vunpack.c.h.b16 %v3608
  %v3930 = vunpack.c.l.b16 %v3609
  %v3931 = vunpack.c.h.b16 %v3609
  %v3932 = vunpack.c.l.b16 %v3610
  %v3933 = vunpack.c.h.b16 %v3610
  %v3934 = vunpack.c.l.b16 %v3611
  %v3935 = vunpack.c.h.b16 %v3611
  %v3936 = vunpack.c.l.b16 %v3612
  %v3937 = vunpack.c.h.b16 %v3612
  %v3938 = vunpack.c.l.b16 %v3613
  %v3939 = vunpack.c.h.b16 %v3613
  %v3940 = vunpack.c.l.b16 %v3614
  %v3941 = vunpack.c.h.b16 %v3614
  %v3942 = vunpack.c.l.b16 %v3615
  %v3943 = vunpack.c.h.b16 %v3615
  %v3944 = vunpack.c.l.b16 %v3616
  %v3945 = vunpack.c.h.b16 %v3616
  %v3946 = vunpack.c.l.b16 %v3617
  %v3947 = vunpack.c.h.b16 %v3617
  %v3948 = vunpack.c.l.b16 %v3618
  %v3949 = vunpack.c.h.b16 %v3618
  %v3950 = vunpack.c.l.b16 %v3619
  %v3951 = vunpack.c.h.b16 %v3619
  %v3952 = vunpack.c.l.b16 %v3620
  %v3953 = vunpack.c.h.b16 %v3620
  %v3954 = vunpack.c.l.b16 %v3621
  %v3955 = vunpack.c.h.b16 %v3621
  %v3956 = vunpack.c.l.b16 %v3622
  %v3957 = vunpack.c.h.b16 %v3622
  %v3958 = vunpack.c.l.b16 %v3623
  %v3959 = vunpack.c.h.b16 %v3623
  %v3960 = vunpack.c.l.b16 %v3624
  %v3961 = vunpack.c.h.b16 %v3624
  %v3962 = vunpack.c.l.b16 %v3625
  %v3963 = vunpack.c.h.b16 %v3625
  %v3964 = vunpack.c.l.b16 %v3626
  %v3965 = vunpack.c.h.b16 %v3626
  %v3966 = vunpack.c.l.b16 %v3627
  %v3967 = vunpack.c.h.b16 %v3627
  %v3968 = vunpack.c.l.b16 %v3628
  %v3969 = vunpack.c.h.b16 %v3628
  %v3970 = vunpack.c.l.b16 %v3629
  %v3971 = vunpack.c.h.b16 %v3629
  %v3972 = vunpack.c.l.b16 %v3630
  %v3973 = vunpack.c.h.b16 %v3630
  %v3974 = vunpack.c.l.b16 %v3631
  %v3975 = vunpack.c.h.b16 %v3631
  %v3976 = vunpack.c.l.b16 %v3632
  %v3977 = vunpack.c.h.b16 %v3632
  %v3978 = vunpack.c.l.b16 %v3633
  %v3979 = vunpack.c.h.b16 %v3633
  %v3980 = vunpack.c.l.b16 %v3634
  %v3981 = vunpack.c.h.b16 %v3634
  %v3982 = vunpack.c.l.b16 %v3635
  %v3983 = vunpack.c.h.b16 %v3635
  %v3984 = vunpack.c.l.b16 %v3636
  %v3985 = vunpack.c.h.b16 %v3636
  %v3986 = vunpack.c.l.b16 %v3637
  %v3987 = vunpack.c.h.b16 %v3637
  %v3988 = vunpack.c.l.b16 %v3638
  %v3989 = vunpack.c.h.b16 %v3638
  %v3990 = vunpack.c.l.b16 %v3639
  %v3991 = vunpack.c.h.b16 %v3639
  %v3992 = vunpack.c.l.b16 %v3640
  %v3993 = vunpack.c.h.b16 %v3640
  %v3994 = vunpack.c.l.b16 %v3641
  %v3995 = vunpack.c.h.b16 %v3641
  %v3996 = vunpack.c.l.b16 %v3642
  %v3997 = vunpack.c.h.b16 %v3642
  %v3998 = vunpack.c.l.b16 %v3643
  %v3999 = vunpack.c.h.b16 %v3643
  %v4000 = vunpack.c.l.b16 %v3644
  %v4001 = vunpack.c.h.b16 %v3644
  %v4002 = vunpack.c.l.b16 %v3645
  %v4003 = vunpack.c.h.b16 %v3645
  %v4004 = vunpack.c.l.b16 %v3646
  %v4005 = vunpack.c.h.b16 %v3646
  %v4006 = vunpack.c.l.b16 %v3647
  %v4007 = vunpack.c.h.b16 %v3647
  %v4008 = vunpack.c.l.b16 %v3648
  %v4009 = vunpack.c.h.b16 %v3648
  %v4010 = vunpack.c.l.b16 %v3649
  %v4011 = vunpack.c.h.b16 %v3649
  %v4012 = vunpack.c.l.b16 %v3650
  %v4013 = vunpack.c.h.b16 %v3650
  %v4014 = vunpack.c.l.b16 %v3651
  %v4015 = vunpack.c.h.b16 %v3651
  %v4016 = vunpack.c.l.b16 %v3652
  %v4017 = vunpack.c.h.b16 %v3652
  %v4018 = vunpack.c.l.b16 %v3653
  %v4019 = vunpack.c.h.b16 %v3653
  %v4020 = vunpack.c.l.b16 %v3654
  %v4021 = vunpack.c.h.b16 %v3654
  %v4022 = vunpack.c.l.b16 %v3655
  %v4023 = vunpack.c.h.b16 %v3655
  %v4024 = vunpack.c.l.b16 %v3656
  %v4025 = vunpack.c.h.b16 %v3656
  %v4026 = vunpack.c.l.b16 %v3657
  %v4027 = vunpack.c.h.b16 %v3657
  %v4028 = vunpack.c.l.b16 %v3658
  %v4029 = vunpack.c.h.b16 %v3658
  %v4030 = vunpack.c.l.b16 %v3659
  %v4031 = vunpack.c.h.b16 %v3659
  %v4032 = vunpack.c.l.b16 %v3660
  %v4033 = vunpack.c.h.b16 %v3660
  %v4034 = vunpack.c.l.b16 %v3661
  %v4035 = vunpack.c.h.b16 %v3661
  %v4036 = vunpack.c.l.b16 %v3662
  %v4037 = vunpack.c.h.b16 %v3662
  %v4038 = vunpack.c.l.b16 %v3663
  %v4039 = vunpack.c.h.b16 %v3663
  %v4040 = vunpack.c.l.b16 %v3664
  %v4041 = vunpack.c.h.b16 %v3664
  %v4042 = vunpack.c.l.b16 %v3665
  %v4043 = vunpack.c.h.b16 %v3665
  %v4044 = vunpack.c.l.b16 %v3666
  %v4045 = vunpack.c.h.b16 %v3666
  %v4046 = vunpack.c.l.b16 %v3667
  %v4047 = vunpack.c.h.b16 %v3667
  %v4048 = vunpack.c.l.b16 %v3668
  %v4049 = vunpack.c.h.b16 %v3668
  %v4050 = vunpack.c.l.b16 %v3669
  %v4051 = vunpack.c.h.b16 %v3669
  %v4052 = vunpack.c.l.b16 %v3670
  %v4053 = vunpack.c.h.b16 %v3670
  %v4054 = vunpack.c.l.b16 %v3671
  %v4055 = vunpack.c.h.b16 %v3671
  %v4056 = vunpack.c.l.b16 %v3672
  %v4057 = vunpack.c.h.b16 %v3672
  %v4058 = vunpack.c.l.b16 %v3673
  %v4059 = vunpack.c.h.b16 %v3673
  %v4060 = vunpack.c.l.b16 %v3674
  %v4061 = vunpack.c.h.b16 %v3674
  %v4062 = vunpack.c.l.b16 %v3675
  %v4063 = vunpack.c.h.b16 %v3675
  %v4064 = vunpack.c.l.b16 %v3676
  %v4065 = vunpack.c.h.b16 %v3676
  %v4066 = vunpack.c.l.b16 %v3677
  %v4067 = vunpack.c.h.b16 %v3677
  %v4068 = vunpack.c.l.b16 %v3678
  %v4069 = vunpack.c.h.b16 %v3678
  %v4070 = vunpack.c.l.b16 %v3679
  %v4071 = vunpack.c.h.b16 %v3679
  %v4072 = vunpack.c.l.b16 %v3680
  %v4073 = vunpack.c.h.b16 %v3680
  %v4074 = vunpack.c.l.b16 %v3681
  %v4075 = vunpack.c.h.b16 %v3681
  %v4076 = vunpack.c.l.b16 %v3682
  %v4077 = vunpack.c.h.b16 %v3682
  %v4078 = vunpack.c.l.b16 %v3683
  %v4079 = vunpack.c.h.b16 %v3683
  %v4080 = vunpack.c.l.b16 %v3684
  %v4081 = vunpack.c.h.b16 %v3684
  %v4082 = vunpack.c.l.b16 %v3685
  %v4083 = vunpack.c.h.b16 %v3685
  %v4084 = vunpack.c.l.b16 %v3686
  %v4085 = vunpack.c.h.b16 %v3686
  %v4086 = vunpack.c.l.b16 %v3687
  %v4087 = vunpack.c.h.b16 %v3687
  %v4088 = vunpack.c.l.b16 %v3688
  %v4089 = vunpack.c.h.b16 %v3688
  %v4090 = vunpack.c.l.b16 %v3689
  %v4091 = vunpack.c.h.b16 %v3689
  %v4092 = vunpack.c.l.b16 %v3690
  %v4093 = vunpack.c.h.b16 %v3690
  %v4094 = vunpack.c.l.b16 %v3691
  %v4095 = vunpack.c.h.b16 %v3691
  %v4096 = vunpack.c.l.b16 %v3692
  %v4097 = vunpack.c.h.b16 %v3692
  %v4098 = vunpack.c.l.b16 %v3693
  %v4099 = vunpack.c.h.b16 %v3693
  %v4100 = vpack.c.b16 %v3848, %v3844
  %v4101 = vpack.c.b16 %v3849, %v3845
  %v4102 = vpack.c.b16 %v3850, %v3846
  %v4103 = vpack.c.b16 %v3851, %v3847
  %v4104 = vpack.c.b16 %v3856, %v3852
  %v4105 = vpack.c.b16 %v3857, %v3853
  %v4106 = vpack.c.b16 %v3858, %v3854
  %v4107 = vpack.c.b16 %v3859, %v3855
  %v4108 = vpack.c.b16 %v3864, %v3860
  %v4109 = vpack.c.b16 %v3865, %v3861
  %v4110 = vpack.c.b16 %v3866, %v3862
  %v4111 = vpack.c.b16 %v3867, %v3863
  %v4112 = vpack.c.b16 %v3872, %v3868
  %v4113 = vpack.c.b16 %v3873, %v3869
  %v4114 = vpack.c.b16 %v3874, %v3870
  %v4115 = vpack.c.b16 %v3875, %v3871
  %v4116 = vpack.c.b16 %v3880, %v3876
  %v4117 = vpack.c.b16 %v3881, %v3877
  %v4118 = vpack.c.b16 %v3882, %v3878
  %v4119 = vpack.c.b16 %v3883, %v3879
  %v4120 = vpack.c.b16 %v3888, %v3884
  %v4121 = vpack.c.b16 %v3889, %v3885
  %v4122 = vpack.c.b16 %v3890, %v3886
  %v4123 = vpack.c.b16 %v3891, %v3887
  %v4124 = vpack.c.b16 %v3896, %v3892
  %v4125 = vpack.c.b16 %v3897, %v3893
  %v4126 = vpack.c.b16 %v3898, %v3894
  %v4127 = vpack.c.b16 %v3899, %v3895
  %v4128 = vpack.c.b16 %v3904, %v3900
  %v4129 = vpack.c.b16 %v3905, %v3901
  %v4130 = vpack.c.b16 %v3906, %v3902
  %v4131 = vpack.c.b16 %v3907, %v3903
  %v4132 = vpack.c.b16 %v3912, %v3908
  %v4133 = vpack.c.b16 %v3913, %v3909
  %v4134 = vpack.c.b16 %v3914, %v3910
  %v4135 = vpack.c.b16 %v3915, %v3911
  %v4136 = vpack.c.b16 %v3920, %v3916
  %v4137 = vpack.c.b16 %v3921, %v3917
  %v4138 = vpack.c.b16 %v3922, %v3918
  %v4139 = vpack.c.b16 %v3923, %v3919
  %v4140 = vpack.c.b16 %v3928, %v3924
  %v4141 = vpack.c.b16 %v3929, %v3925
  %v4142 = vpack.c.b16 %v3930, %v3926
  %v4143 = vpack.c.b16 %v3931, %v3927
  %v4144 = vpack.c.b16 %v3936, %v3932
  %v4145 = vpack.c.b16 %v3937, %v3933
  %v4146 = vpack.c.b16 %v3938, %v3934
  %v4147 = vpack.c.b16 %v3939, %v3935
  %v4148 = vpack.c.b16 %v3944, %v3940
  %v4149 = vpack.c.b16 %v3945, %v3941
  %v4150 = vpack.c.b16 %v3946, %v3942
  %v4151 = vpack.c.b16 %v3947, %v3943
  %v4152 = vpack.c.b16 %v3952, %v3948
  %v4153 = vpack.c.b16 %v3953, %v3949
  %v4154 = vpack.c.b16 %v3954, %v3950
  %v4155 = vpack.c.b16 %v3955, %v3951
  %v4156 = vpack.c.b16 %v3960, %v3956
  %v4157 = vpack.c.b16 %v3961, %v3957
  %v4158 = vpack.c.b16 %v3962, %v3958
  %v4159 = vpack.c.b16 %v3963, %v3959
  %v4160 = vpack.c.b16 %v3968, %v3964
  %v4161 = vpack.c.b16 %v3969, %v3965
  %v4162 = vpack.c.b16 %v3970, %v3966
  %v4163 = vpack.c.b16 %v3971, %v3967
  %v4164 = vpack.c.b16 %v3976, %v3972
  %v4165 = vpack.c.b16 %v3977, %v3973
  %v4166 = vpack.c.b16 %v3978, %v3974
  %v4167 = vpack.c.b16 %v3979, %v3975
  %v4168 = vpack.c.b16 %v3984, %v3980
  %v4169 = vpack.c.b16 %v3985, %v3981
  %v4170 = vpack.c.b16 %v3986, %v3982
  %v4171 = vpack.c.b16 %v3987, %v3983
  %v4172 = vpack.c.b16 %v3992, %v3988
  %v4173 = vpack.c.b16 %v3993, %v3989
  %v4174 = vpack.c.b16 %v3994, %v3990
  %v4175 = vpack.c.b16 %v3995, %v3991
  %v4176 = vpack.c.b16 %v4000, %v3996
  %v4177 = vpack.c.b16 %v4001, %v3997
  %v4178 = vpack.c.b16 %v4002, %v3998
  %v4179 = vpack.c.b16 %v4003, %v3999
  %v4180 = vpack.c.b16 %v4008, %v4004
  %v4181 = vpack.c.b16 %v4009, %v4005
  %v4182 = vpack.c.b16 %v4010, %v4006
  %v4183 = vpack.c.b16 %v4011, %v4007
  %v4184 = vpack.c.b16 %v4016, %v4012
  %v4185 = vpack.c.b16 %v4017, %v4013
  %v4186 = vpack.c.b16 %v4018, %v4014
  %v4187 = vpack.c.b16 %v4019, %v4015
  %v4188 = vpack.c.b16 %v4024, %v4020
  %v4189 = vpack.c.b16 %v4025, %v4021
  %v4190 = vpack.c.b16 %v4026, %v4022
  %v4191 = vpack.c.b16 %v4027, %v4023
  %v4192 = vpack.c.b16 %v4032, %v4028
  %v4193 = vpack.c.b16 %v4033, %v4029
  %v4194 = vpack.c.b16 %v4034, %v4030
  %v4195 = vpack.c.b16 %v4035, %v4031
  %v4196 = vpack.c.b16 %v4040, %v4036
  %v4197 = vpack.c.b16 %v4041, %v4037
  %v4198 = vpack.c.b16 %v4042, %v4038
  %v4199 = vpack.c.b16 %v4043, %v4039
  %v4200 = vpack.c.b16 %v4048, %v4044
  %v4201 = vpack.c.b16 %v4049, %v4045
  %v4202 = vpack.c.b16 %v4050, %v4046
  %v4203 = vpack.c.b16 %v4051, %v4047
  %v4204 = vpack.c.b16 %v4056, %v4052
  %v4205 = vpack.c.b16 %v4057, %v4053
  %v4206 = vpack.c.b16 %v4058, %v4054
  %v4207 = vpack.c.b16 %v4059, %v4055
  %v4208 = vpack.c.b16 %v4064, %v4060
  %v4209 = vpack.c.b16 %v4065, %v4061
  %v4210 = vpack.c.b16 %v4066, %v4062
  %v4211 = vpack.c.b16 %v4067, %v4063
  %v4212 = vpack.c.b16 %v4072, %v4068
  %v4213 = vpack.c.b16 %v4073, %v4069
  %v4214 = vpack.c.b16 %v4074, %v4070
  %v4215 = vpack.c.b16 %v4075, %v4071
  %v4216 = vpack.c.b16 %v4080, %v4076
  %v4217 = vpack.c.b16 %v4081, %v4077
  %v4218 = vpack.c.b16 %v4082, %v4078
  %v4219 = vpack.c.b16 %v4083, %v4079
  %v4220 = vpack.c.b16 %v4088, %v4084
  %v4221 = vpack.c.b16 %v4089, %v4085
  %v4222 = vpack.c.b16 %v4090, %v4086
  %v4223 = vpack.c.b16 %v4091, %v4087
  %v4224 = vpack.c.b16 %v4096, %v4092
  %v4225 = vpack.c.b16 %v4097, %v4093
  %v4226 = vpack.c.b16 %v4098, %v4094
  %v4227 = vpack.c.b16 %v4099, %v4095
  %4356 = vmatprep.subr.bf16.mxu0 %v4101
  %4357 = vmatpush1.bf16.msra.mxu0 %v4100
  %4358 = vmatprep.subr.bf16.mxu0 %v4105
  %4359 = vmatpush1.bf16.msra.mxu0 %v4104
  %4360 = vmatprep.subr.bf16.mxu0 %v4109
  %4361 = vmatpush1.bf16.msra.mxu0 %v4108
  %4362 = vmatprep.subr.bf16.mxu0 %v4113
  %4363 = vmatpush1.bf16.msra.mxu0 %v4112
  %4364 = vmatprep.subr.bf16.mxu0 %v4117
  %4365 = vmatpush1.bf16.msra.mxu0 %v4116
  %4366 = vmatprep.subr.bf16.mxu0 %v4121
  %4367 = vmatpush1.bf16.msra.mxu0 %v4120
  %4368 = vmatprep.subr.bf16.mxu0 %v4125
  %4369 = vmatpush1.bf16.msra.mxu0 %v4124
  %4370 = vmatprep.subr.bf16.mxu0 %v4129
  %4371 = vmatpush1.bf16.msra.mxu0 %v4128
  %4372 = vmatprep.subr.bf16.mxu0 %v4133
  %4373 = vmatpush1.bf16.msra.mxu0 %v4132
  %4374 = vmatprep.subr.bf16.mxu0 %v4137
  %4375 = vmatpush1.bf16.msra.mxu0 %v4136
  %4376 = vmatprep.subr.bf16.mxu0 %v4141
  %4377 = vmatpush1.bf16.msra.mxu0 %v4140
  %4378 = vmatprep.subr.bf16.mxu0 %v4145
  %4379 = vmatpush1.bf16.msra.mxu0 %v4144
  %4380 = vmatprep.subr.bf16.mxu0 %v4149
  %4381 = vmatpush1.bf16.msra.mxu0 %v4148
  %4382 = vmatprep.subr.bf16.mxu0 %v4153
  %4383 = vmatpush1.bf16.msra.mxu0 %v4152
  %4384 = vmatprep.subr.bf16.mxu0 %v4157
  %4385 = vmatpush1.bf16.msra.mxu0 %v4156
  %4386 = vmatprep.subr.bf16.mxu0 %v4161
  %4387 = vmatpush1.bf16.msra.mxu0 %v4160
  %4388 = vmatprep.mubr.bf16.mxu0 %v3563
  %4389 = vmatmul.mubr.bf16.gmra.mrb[0].mxu0 %v3562
  %v4390 = vpop.f32.mrb[0].mxu0
  %v4391 = vadd.f32 %v3699, %v4390
  %v4392 = vpop.f32.mrb[0].mxu0
  %v4393 = vadd.f32 %v3703, %v4392
  %v4394 = vpop.f32.mrb[0].mxu0
  %v4395 = vadd.f32 %v3699, %v4394
  %v4396 = vpop.f32.mrb[0].mxu0
  %v4397 = vadd.f32 %v3703, %v4396
  %4398 = vdwg.mxu0
  %4399 = vmatprep.subr.bf16.mxu0 %v4165
  %4400 = vmatpush1.bf16.msra.mxu0 %v4164
  %4401 = vmatprep.subr.bf16.mxu0 %v4169
  %4402 = vmatpush1.bf16.msra.mxu0 %v4168
  %4403 = vmatprep.subr.bf16.mxu0 %v4173
  %4404 = vmatpush1.bf16.msra.mxu0 %v4172
  %4405 = vmatprep.subr.bf16.mxu0 %v4177
  %4406 = vmatpush1.bf16.msra.mxu0 %v4176
  %4407 = vmatprep.subr.bf16.mxu0 %v4181
  %4408 = vmatpush1.bf16.msra.mxu0 %v4180
  %4409 = vmatprep.subr.bf16.mxu0 %v4185
  %4410 = vmatpush1.bf16.msra.mxu0 %v4184
  %4411 = vmatprep.subr.bf16.mxu0 %v4189
  %4412 = vmatpush1.bf16.msra.mxu0 %v4188
  %4413 = vmatprep.subr.bf16.mxu0 %v4193
  %4414 = vmatpush1.bf16.msra.mxu0 %v4192
  %4415 = vmatprep.subr.bf16.mxu0 %v4197
  %4416 = vmatpush1.bf16.msra.mxu0 %v4196
  %4417 = vmatprep.subr.bf16.mxu0 %v4201
  %4418 = vmatpush1.bf16.msra.mxu0 %v4200
  %4419 = vmatprep.subr.bf16.mxu0 %v4205
  %4420 = vmatpush1.bf16.msra.mxu0 %v4204
  %4421 = vmatprep.subr.bf16.mxu0 %v4209
  %4422 = vmatpush1.bf16.msra.mxu0 %v4208
  %4423 = vmatprep.subr.bf16.mxu0 %v4213
  %4424 = vmatpush1.bf16.msra.mxu0 %v4212
  %4425 = vmatprep.subr.bf16.mxu0 %v4217
  %4426 = vmatpush1.bf16.msra.mxu0 %v4216
  %4427 = vmatprep.subr.bf16.mxu0 %v4221
  %4428 = vmatpush1.bf16.msra.mxu0 %v4220
  %4429 = vmatprep.subr.bf16.mxu0 %v4225
  %4430 = vmatpush1.bf16.msra.mxu0 %v4224
  %4431 = vmatprep.mubr.bf16.mxu0 %v3565
  %4432 = vmatmul.mubr.bf16.gmra.mrb[0].mxu0 %v3564
  %v4433 = vpop.f32.mrb[0].mxu0
  %v4434 = vadd.f32 %v4391, %v4433
  %v4435 = vpop.f32.mrb[0].mxu0
  %v4436 = vadd.f32 %v4393, %v4435
  %v4437 = vpop.f32.mrb[0].mxu0
  %v4438 = vadd.f32 %v4395, %v4437
  %v4439 = vpop.f32.mrb[0].mxu0
  %v4440 = vadd.f32 %v4397, %v4439
  %4441 = vdwg.mxu0
  %4442 = vmatprep.subr.bf16.mxu0 %v4103
  %4443 = vmatpush1.bf16.msra.mxu0 %v4102
  %4444 = vmatprep.subr.bf16.mxu0 %v4107
  %4445 = vmatpush1.bf16.msra.mxu0 %v4106
  %4446 = vmatprep.subr.bf16.mxu0 %v4111
  %4447 = vmatpush1.bf16.msra.mxu0 %v4110
  %4448 = vmatprep.subr.bf16.mxu0 %v4115
  %4449 = vmatpush1.bf16.msra.mxu0 %v4114
  %4450 = vmatprep.subr.bf16.mxu0 %v4119
  %4451 = vmatpush1.bf16.msra.mxu0 %v4118
  %4452 = vmatprep.subr.bf16.mxu0 %v4123
  %4453 = vmatpush1.bf16.msra.mxu0 %v4122
  %4454 = vmatprep.subr.bf16.mxu0 %v4127
  %4455 = vmatpush1.bf16.msra.mxu0 %v4126
  %4456 = vmatprep.subr.bf16.mxu0 %v4131
  %4457 = vmatpush1.bf16.msra.mxu0 %v4130
  %4458 = vmatprep.subr.bf16.mxu0 %v4135
  %4459 = vmatpush1.bf16.msra.mxu0 %v4134
  %4460 = vmatprep.subr.bf16.mxu0 %v4139
  %4461 = vmatpush1.bf16.msra.mxu0 %v4138
  %4462 = vmatprep.subr.bf16.mxu0 %v4143
  %4463 = vmatpush1.bf16.msra.mxu0 %v4142
  %4464 = vmatprep.subr.bf16.mxu0 %v4147
  %4465 = vmatpush1.bf16.msra.mxu0 %v4146
  %4466 = vmatprep.subr.bf16.mxu0 %v4151
  %4467 = vmatpush1.bf16.msra.mxu0 %v4150
  %4468 = vmatprep.subr.bf16.mxu0 %v4155
  %4469 = vmatpush1.bf16.msra.mxu0 %v4154
  %4470 = vmatprep.subr.bf16.mxu0 %v4159
  %4471 = vmatpush1.bf16.msra.mxu0 %v4158
  %4472 = vmatprep.subr.bf16.mxu0 %v4163
  %4473 = vmatpush1.bf16.msra.mxu0 %v4162
  %4474 = vmatprep.mubr.bf16.mxu0 %v3563
  %4475 = vmatmul.mubr.bf16.gmra.mrb[0].mxu0 %v3562
  %v4476 = vpop.f32.mrb[0].mxu0
  %v4477 = vadd.f32 %v3707, %v4476
  %v4478 = vpop.f32.mrb[0].mxu0
  %v4479 = vadd.f32 %v3711, %v4478
  %v4480 = vpop.f32.mrb[0].mxu0
  %v4481 = vadd.f32 %v3707, %v4480
  %v4482 = vpop.f32.mrb[0].mxu0
  %v4483 = vadd.f32 %v3711, %v4482
  %4484 = vdwg.mxu0
  %4485 = vmatprep.subr.bf16.mxu0 %v4167
  %4486 = vmatpush1.bf16.msra.mxu0 %v4166
  %4487 = vmatprep.subr.bf16.mxu0 %v4171
  %4488 = vmatpush1.bf16.msra.mxu0 %v4170
  %4489 = vmatprep.subr.bf16.mxu0 %v4175
  %4490 = vmatpush1.bf16.msra.mxu0 %v4174
  %4491 = vmatprep.subr.bf16.mxu0 %v4179
  %4492 = vmatpush1.bf16.msra.mxu0 %v4178
  %4493 = vmatprep.subr.bf16.mxu0 %v4183
  %4494 = vmatpush1.bf16.msra.mxu0 %v4182
  %4495 = vmatprep.subr.bf16.mxu0 %v4187
  %4496 = vmatpush1.bf16.msra.mxu0 %v4186
  %4497 = vmatprep.subr.bf16.mxu0 %v4191
  %4498 = vmatpush1.bf16.msra.mxu0 %v4190
  %4499 = vmatprep.subr.bf16.mxu0 %v4195
  %4500 = vmatpush1.bf16.msra.mxu0 %v4194
  %4501 = vmatprep.subr.bf16.mxu0 %v4199
  %4502 = vmatpush1.bf16.msra.mxu0 %v4198
  %4503 = vmatprep.subr.bf16.mxu0 %v4203
  %4504 = vmatpush1.bf16.msra.mxu0 %v4202
  %4505 = vmatprep.subr.bf16.mxu0 %v4207
  %4506 = vmatpush1.bf16.msra.mxu0 %v4206
  %4507 = vmatprep.subr.bf16.mxu0 %v4211
  %4508 = vmatpush1.bf16.msra.mxu0 %v4210
  %4509 = vmatprep.subr.bf16.mxu0 %v4215
  %4510 = vmatpush1.bf16.msra.mxu0 %v4214
  %4511 = vmatprep.subr.bf16.mxu0 %v4219
  %4512 = vmatpush1.bf16.msra.mxu0 %v4218
  %4513 = vmatprep.subr.bf16.mxu0 %v4223
  %4514 = vmatpush1.bf16.msra.mxu0 %v4222
  %4515 = vmatprep.subr.bf16.mxu0 %v4227
  %4516 = vmatpush1.bf16.msra.mxu0 %v4226
  %4517 = vmatprep.mubr.bf16.mxu0 %v3565
  %4518 = vmatmul.mubr.bf16.gmra.mrb[0].mxu0 %v3564
  %v4519 = vpop.f32.mrb[0].mxu0
  %v4520 = vadd.f32 %v4477, %v4519
  %v4521 = vpop.f32.mrb[0].mxu0
  %v4522 = vadd.f32 %v4479, %v4521
  %v4523 = vpop.f32.mrb[0].mxu0
  %v4524 = vadd.f32 %v4481, %v4523
  %v4525 = vpop.f32.mrb[0].mxu0
  %v4526 = vadd.f32 %v4483, %v4525
  %4527 = vdwg.mxu0
  %v4528 = vmax.f32 %v4434, 0.0
  %v4529 = vmax.f32 %v4436, 0.0
  %v4530 = vmax.f32 %v4520, 0.0
  %v4531 = vmax.f32 %v4522, 0.0
  %v4532 = vmax.f32 %v4438, 0.0
  %v4533 = vmax.f32 %v4440, 0.0
  %v4534 = vmax.f32 %v4524, 0.0
  %v4535 = vmax.f32 %v4526, 0.0
  %v4536 = vpack.c.bf16 %v4532, %v4528
  %v4537 = vpack.c.bf16 %v4533, %v4529
  %v4538 = vpack.c.bf16 %v4534, %v4530
  %v4539 = vpack.c.bf16 %v4535, %v4531
  %v4540 = vld [vmem:[%s9] sm:$0xf]
  %v4541 = vld [vmem:[%s9 + $0x4] sm:$0xf]
  %v4542 = vld [vmem:[%s9 + $0x8] sm:$0xf]
  %v4543 = vld [vmem:[%s9 + $0xc] sm:$0xf]
  %v4544 = vld [vmem:[%s9 + $0x10] sm:$0xf]
  %v4545 = vld [vmem:[%s9 + $0x14] sm:$0xf]
  %v4546 = vld [vmem:[%s9 + $0x18] sm:$0xf]
  %v4547 = vld [vmem:[%s9 + $0x1c] sm:$0xf]
  %v4548 = vld [vmem:[%s9 + $0x20] sm:$0xf]
  %v4549 = vld [vmem:[%s9 + $0x24] sm:$0xf]
  %v4550 = vld [vmem:[%s9 + $0x28] sm:$0xf]
  %v4551 = vld [vmem:[%s9 + $0x2c] sm:$0xf]
  %v4552 = vld [vmem:[%s9 + $0x30] sm:$0xf]
  %v4553 = vld [vmem:[%s9 + $0x34] sm:$0xf]
  %v4554 = vld [vmem:[%s9 + $0x38] sm:$0xf]
  %v4555 = vld [vmem:[%s9 + $0x3c] sm:$0xf]
  %v4556 = vld [vmem:[%s9 + $0x40] sm:$0xf]
  %v4557 = vld [vmem:[%s9 + $0x44] sm:$0xf]
  %v4558 = vld [vmem:[%s9 + $0x48] sm:$0xf]
  %v4559 = vld [vmem:[%s9 + $0x4c] sm:$0xf]
  %v4560 = vld [vmem:[%s9 + $0x50] sm:$0xf]
  %v4561 = vld [vmem:[%s9 + $0x54] sm:$0xf]
  %v4562 = vld [vmem:[%s9 + $0x58] sm:$0xf]
  %v4563 = vld [vmem:[%s9 + $0x5c] sm:$0xf]
  %v4564 = vld [vmem:[%s9 + $0x60] sm:$0xf]
  %v4565 = vld [vmem:[%s9 + $0x64] sm:$0xf]
  %v4566 = vld [vmem:[%s9 + $0x68] sm:$0xf]
  %v4567 = vld [vmem:[%s9 + $0x6c] sm:$0xf]
  %v4568 = vld [vmem:[%s9 + $0x70] sm:$0xf]
  %v4569 = vld [vmem:[%s9 + $0x74] sm:$0xf]
  %v4570 = vld [vmem:[%s9 + $0x78] sm:$0xf]
  %v4571 = vld [vmem:[%s9 + $0x7c] sm:$0xf]
  %v4572 = vld [vmem:[%s9 + $0x80] sm:$0xf]
  %v4573 = vld [vmem:[%s9 + $0x84] sm:$0xf]
  %v4574 = vld [vmem:[%s9 + $0x88] sm:$0xf]
  %v4575 = vld [vmem:[%s9 + $0x8c] sm:$0xf]
  %v4576 = vld [vmem:[%s9 + $0x90] sm:$0xf]
  %v4577 = vld [vmem:[%s9 + $0x94] sm:$0xf]
  %v4578 = vld [vmem:[%s9 + $0x98] sm:$0xf]
  %v4579 = vld [vmem:[%s9 + $0x9c] sm:$0xf]
  %v4580 = vld [vmem:[%s9 + $0xa0] sm:$0xf]
  %v4581 = vld [vmem:[%s9 + $0xa4] sm:$0xf]
  %v4582 = vld [vmem:[%s9 + $0xa8] sm:$0xf]
  %v4583 = vld [vmem:[%s9 + $0xac] sm:$0xf]
  %v4584 = vld [vmem:[%s9 + $0xb0] sm:$0xf]
  %v4585 = vld [vmem:[%s9 + $0xb4] sm:$0xf]
  %v4586 = vld [vmem:[%s9 + $0xb8] sm:$0xf]
  %v4587 = vld [vmem:[%s9 + $0xbc] sm:$0xf]
  %v4588 = vld [vmem:[%s9 + $0xc0] sm:$0xf]
  %v4589 = vld [vmem:[%s9 + $0xc4] sm:$0xf]
  %v4590 = vld [vmem:[%s9 + $0xc8] sm:$0xf]
  %v4591 = vld [vmem:[%s9 + $0xcc] sm:$0xf]
  %v4592 = vld [vmem:[%s9 + $0xd0] sm:$0xf]
  %v4593 = vld [vmem:[%s9 + $0xd4] sm:$0xf]
  %v4594 = vld [vmem:[%s9 + $0xd8] sm:$0xf]
  %v4595 = vld [vmem:[%s9 + $0xdc] sm:$0xf]
  %v4596 = vld [vmem:[%s9 + $0xe0] sm:$0xf]
  %v4597 = vld [vmem:[%s9 + $0xe4] sm:$0xf]
  %v4598 = vld [vmem:[%s9 + $0xe8] sm:$0xf]
  %v4599 = vld [vmem:[%s9 + $0xec] sm:$0xf]
  %v4600 = vld [vmem:[%s9 + $0xf0] sm:$0xf]
  %v4601 = vld [vmem:[%s9 + $0xf4] sm:$0xf]
  %v4602 = vld [vmem:[%s9 + $0xf8] sm:$0xf]
  %v4603 = vld [vmem:[%s9 + $0xfc] sm:$0xf]
  %v4604 = vld [vmem:[%s10] sm:$0x1]
  %v4606 = vlaneseq
  %v4607 = vshrl.u32 %v4606, 7
  %v4608 = vsub.s32 0, %v4607
  %v4609 = vrot.slane %v4604, %v4608
  %v4675 = vunpack.c.l.b16 %v4540
  %v4676 = vunpack.c.l.b16 %v4541
  %v4677 = vunpack.c.l.b16 %v4542
  %v4678 = vunpack.c.l.b16 %v4543
  %v4679 = vunpack.c.l.b16 %v4544
  %v4680 = vunpack.c.l.b16 %v4545
  %v4681 = vunpack.c.l.b16 %v4546
  %v4682 = vunpack.c.l.b16 %v4547
  %v4683 = vunpack.c.l.b16 %v4548
  %v4684 = vunpack.c.l.b16 %v4549
  %v4685 = vunpack.c.l.b16 %v4550
  %v4686 = vunpack.c.l.b16 %v4551
  %v4687 = vunpack.c.l.b16 %v4552
  %v4688 = vunpack.c.l.b16 %v4553
  %v4689 = vunpack.c.l.b16 %v4554
  %v4690 = vunpack.c.l.b16 %v4555
  %v4691 = vunpack.c.l.b16 %v4556
  %v4692 = vunpack.c.l.b16 %v4557
  %v4693 = vunpack.c.l.b16 %v4558
  %v4694 = vunpack.c.l.b16 %v4559
  %v4695 = vunpack.c.l.b16 %v4560
  %v4696 = vunpack.c.l.b16 %v4561
  %v4697 = vunpack.c.l.b16 %v4562
  %v4698 = vunpack.c.l.b16 %v4563
  %v4699 = vunpack.c.l.b16 %v4564
  %v4700 = vunpack.c.l.b16 %v4565
  %v4701 = vunpack.c.l.b16 %v4566
  %v4702 = vunpack.c.l.b16 %v4567
  %v4703 = vunpack.c.l.b16 %v4568
  %v4704 = vunpack.c.l.b16 %v4569
  %v4705 = vunpack.c.l.b16 %v4570
  %v4706 = vunpack.c.l.b16 %v4571
  %v4707 = vunpack.c.l.b16 %v4572
  %v4708 = vunpack.c.l.b16 %v4573
  %v4709 = vunpack.c.l.b16 %v4574
  %v4710 = vunpack.c.l.b16 %v4575
  %v4711 = vunpack.c.l.b16 %v4576
  %v4712 = vunpack.c.l.b16 %v4577
  %v4713 = vunpack.c.l.b16 %v4578
  %v4714 = vunpack.c.l.b16 %v4579
  %v4715 = vunpack.c.l.b16 %v4580
  %v4716 = vunpack.c.l.b16 %v4581
  %v4717 = vunpack.c.l.b16 %v4582
  %v4718 = vunpack.c.l.b16 %v4583
  %v4719 = vunpack.c.l.b16 %v4584
  %v4720 = vunpack.c.l.b16 %v4585
  %v4721 = vunpack.c.l.b16 %v4586
  %v4722 = vunpack.c.l.b16 %v4587
  %v4723 = vunpack.c.l.b16 %v4588
  %v4724 = vunpack.c.l.b16 %v4589
  %v4725 = vunpack.c.l.b16 %v4590
  %v4726 = vunpack.c.l.b16 %v4591
  %v4727 = vunpack.c.l.b16 %v4592
  %v4728 = vunpack.c.l.b16 %v4593
  %v4729 = vunpack.c.l.b16 %v4594
  %v4730 = vunpack.c.l.b16 %v4595
  %v4731 = vunpack.c.l.b16 %v4596
  %v4732 = vunpack.c.l.b16 %v4597
  %v4733 = vunpack.c.l.b16 %v4598
  %v4734 = vunpack.c.l.b16 %v4599
  %v4735 = vunpack.c.l.b16 %v4600
  %v4736 = vunpack.c.l.b16 %v4601
  %v4737 = vunpack.c.l.b16 %v4602
  %v4738 = vunpack.c.l.b16 %v4603
  %v4739 = vpack.c.b16 %v4676, %v4675
  %v4740 = vpack.c.b16 %v4678, %v4677
  %v4741 = vpack.c.b16 %v4680, %v4679
  %v4742 = vpack.c.b16 %v4682, %v4681
  %v4743 = vpack.c.b16 %v4684, %v4683
  %v4744 = vpack.c.b16 %v4686, %v4685
  %v4745 = vpack.c.b16 %v4688, %v4687
  %v4746 = vpack.c.b16 %v4690, %v4689
  %v4747 = vpack.c.b16 %v4692, %v4691
  %v4748 = vpack.c.b16 %v4694, %v4693
  %v4749 = vpack.c.b16 %v4696, %v4695
  %v4750 = vpack.c.b16 %v4698, %v4697
  %v4751 = vpack.c.b16 %v4700, %v4699
  %v4752 = vpack.c.b16 %v4702, %v4701
  %v4753 = vpack.c.b16 %v4704, %v4703
  %v4754 = vpack.c.b16 %v4706, %v4705
  %v4755 = vpack.c.b16 %v4708, %v4707
  %v4756 = vpack.c.b16 %v4710, %v4709
  %v4757 = vpack.c.b16 %v4712, %v4711
  %v4758 = vpack.c.b16 %v4714, %v4713
  %v4759 = vpack.c.b16 %v4716, %v4715
  %v4760 = vpack.c.b16 %v4718, %v4717
  %v4761 = vpack.c.b16 %v4720, %v4719
  %v4762 = vpack.c.b16 %v4722, %v4721
  %v4763 = vpack.c.b16 %v4724, %v4723
  %v4764 = vpack.c.b16 %v4726, %v4725
  %v4765 = vpack.c.b16 %v4728, %v4727
  %v4766 = vpack.c.b16 %v4730, %v4729
  %v4767 = vpack.c.b16 %v4732, %v4731
  %v4768 = vpack.c.b16 %v4734, %v4733
  %v4769 = vpack.c.b16 %v4736, %v4735
  %v4770 = vpack.c.b16 %v4738, %v4737
  %4803 = vmatprep.subr.bf16.mxu0 0
  %4804 = vmatpush1.bf16.msra.mxu0 %v4739
  %4805 = vmatprep.subr.bf16.mxu0 0
  %4806 = vmatpush1.bf16.msra.mxu0 %v4740
  %4807 = vmatprep.subr.bf16.mxu0 0
  %4808 = vmatpush1.bf16.msra.mxu0 %v4741
  %4809 = vmatprep.subr.bf16.mxu0 0
  %4810 = vmatpush1.bf16.msra.mxu0 %v4742
  %4811 = vmatprep.subr.bf16.mxu0 0
  %4812 = vmatpush1.bf16.msra.mxu0 %v4743
  %4813 = vmatprep.subr.bf16.mxu0 0
  %4814 = vmatpush1.bf16.msra.mxu0 %v4744
  %4815 = vmatprep.subr.bf16.mxu0 0
  %4816 = vmatpush1.bf16.msra.mxu0 %v4745
  %4817 = vmatprep.subr.bf16.mxu0 0
  %4818 = vmatpush1.bf16.msra.mxu0 %v4746
  %4819 = vmatprep.subr.bf16.mxu0 0
  %4820 = vmatpush1.bf16.msra.mxu0 %v4747
  %4821 = vmatprep.subr.bf16.mxu0 0
  %4822 = vmatpush1.bf16.msra.mxu0 %v4748
  %4823 = vmatprep.subr.bf16.mxu0 0
  %4824 = vmatpush1.bf16.msra.mxu0 %v4749
  %4825 = vmatprep.subr.bf16.mxu0 0
  %4826 = vmatpush1.bf16.msra.mxu0 %v4750
  %4827 = vmatprep.subr.bf16.mxu0 0
  %4828 = vmatpush1.bf16.msra.mxu0 %v4751
  %4829 = vmatprep.subr.bf16.mxu0 0
  %4830 = vmatpush1.bf16.msra.mxu0 %v4752
  %4831 = vmatprep.subr.bf16.mxu0 0
  %4832 = vmatpush1.bf16.msra.mxu0 %v4753
  %4833 = vmatprep.subr.bf16.mxu0 0
  %4834 = vmatpush1.bf16.msra.mxu0 %v4754
  %4835 = vmatprep.mubr.bf16.mxu0 %v4537
  %4836 = vmatmul.mubr.bf16.gmra.mrb[0].mxu0 %v4536
  %v4837 = vpop.f32.mrb[0].mxu0
  %v4838 = vadd.f32 %v4609, %v4837
  %v4839 = vpop.f32.mrb[0].mxu0
  %v4840 = vpop.f32.mrb[0].mxu0
  %v4841 = vadd.f32 %v4609, %v4840
  %v4842 = vpop.f32.mrb[0].mxu0
  %4843 = vdwg.mxu0
  %4844 = vmatprep.subr.bf16.mxu0 0
  %4845 = vmatpush1.bf16.msra.mxu0 %v4755
  %4846 = vmatprep.subr.bf16.mxu0 0
  %4847 = vmatpush1.bf16.msra.mxu0 %v4756
  %4848 = vmatprep.subr.bf16.mxu0 0
  %4849 = vmatpush1.bf16.msra.mxu0 %v4757
  %4850 = vmatprep.subr.bf16.mxu0 0
  %4851 = vmatpush1.bf16.msra.mxu0 %v4758
  %4852 = vmatprep.subr.bf16.mxu0 0
  %4853 = vmatpush1.bf16.msra.mxu0 %v4759
  %4854 = vmatprep.subr.bf16.mxu0 0
  %4855 = vmatpush1.bf16.msra.mxu0 %v4760
  %4856 = vmatprep.subr.bf16.mxu0 0
  %4857 = vmatpush1.bf16.msra.mxu0 %v4761
  %4858 = vmatprep.subr.bf16.mxu0 0
  %4859 = vmatpush1.bf16.msra.mxu0 %v4762
  %4860 = vmatprep.subr.bf16.mxu0 0
  %4861 = vmatpush1.bf16.msra.mxu0 %v4763
  %4862 = vmatprep.subr.bf16.mxu0 0
  %4863 = vmatpush1.bf16.msra.mxu0 %v4764
  %4864 = vmatprep.subr.bf16.mxu0 0
  %4865 = vmatpush1.bf16.msra.mxu0 %v4765
  %4866 = vmatprep.subr.bf16.mxu0 0
  %4867 = vmatpush1.bf16.msra.mxu0 %v4766
  %4868 = vmatprep.subr.bf16.mxu0 0
  %4869 = vmatpush1.bf16.msra.mxu0 %v4767
  %4870 = vmatprep.subr.bf16.mxu0 0
  %4871 = vmatpush1.bf16.msra.mxu0 %v4768
  %4872 = vmatprep.subr.bf16.mxu0 0
  %4873 = vmatpush1.bf16.msra.mxu0 %v4769
  %4874 = vmatprep.subr.bf16.mxu0 0
  %4875 = vmatpush1.bf16.msra.mxu0 %v4770
  %4876 = vmatprep.mubr.bf16.mxu0 %v4539
  %4877 = vmatmul.mubr.bf16.gmra.mrb[0].mxu0 %v4538
  %v4878 = vpop.f32.mrb[0].mxu0
  %v4879 = vadd.f32 %v4838, %v4878
  %v4880 = vpop.f32.mrb[0].mxu0
  %v4881 = vpop.f32.mrb[0].mxu0
  %v4882 = vadd.f32 %v4841, %v4881
  %v4883 = vpop.f32.mrb[0].mxu0
  %4884 = vdwg.mxu0
  %4885 = vst [vmem:[%s11] sm:$0xff] %v4879
  %4886 = vst [vmem:[%s11 + $0x8] sm:$0xff] %v4882
  // Predicated region
  $region46: #{mnist_mlp_forward.1} parent=0 // pred_check
    _
  $region47: #{mnist_mlp_forward.1} parent=0 // pred_check_branch
    %4888 = sbr.rel (0) target = $region49
  $region48: #{mnist_mlp_forward.1} parent=0 // pred_region
    _
  $region49: #{mnist_mlp_forward.1} parent=0 // pred_fallthru
    _
  // Predicated region
  $region50: #{mnist_mlp_forward.1} parent=0 // pred_check
    _
  $region51: #{mnist_mlp_forward.1} parent=0 // pred_check_branch
    %4890 = sbr.rel (0) target = $region53
  $region52: #{mnist_mlp_forward.1} parent=0 // pred_region
    _
  $region53: #{mnist_mlp_forward.1} parent=0 // pred_fallthru
    _

</llo_original>
